<compile_context>
chip_gen: v7x
topology: tpu7x:2x2x1
jax: 0.10.0
libtpu: 0.0.40
codegen_flags: <defaults>
</compile_context>

<pallas_src>
import jax
import jax.numpy as jnp
from jax.experimental import pallas as pl
from jax.experimental.pallas import tpu as pltpu


def _updating_z_kernel(inv_mu_ref, g_ref, y_ref, z_ref):
    """Hot path on one VMEM tile: Z = relu(G + Y * (1/mu[i]))."""
    inv_mu = inv_mu_ref[0]                       # f32 scalar from SMEM
    z = g_ref[...] + y_ref[...] * inv_mu         # VPU elementwise
    z_ref[...] = jnp.maximum(z, 0.0).astype(z_ref.dtype)


def _round_up(x, m):
    return ((x + m - 1) // m) * m


def _device_tile_defaults():
    """(target bytes per input tile, min grid steps) for the local TPU gen."""
    kind = ""
    try:
        kind = jax.devices()[0].device_kind.lower()
    except Exception:
        pass
    if "v7" in kind:
        # ~3.2 TB/s HBM: 4 MiB tiles amortize the ~0.35us/step overhead;
        # 2 TensorCores -> want >= 2 grid steps so both cores get work.
        return 4 << 20, 2
    if "v6" in kind:
        return 4 << 20, 1
    # v5e (16 MiB scoped-VMEM default) and unknown chips: stay conservative.
    return 2 << 20, 1


def updating_z_layer(G_m_i, Y_m_i, mu, i, *,
                     target_block_bytes=None,
                     min_grid_steps=None,
                     small_input_bytes=256 << 10):
    """JAX wrapper reproducing Updating_Z_Layer.forward semantics.

    G_m_i, Y_m_i : arrays of identical shape/dtype (e.g. NCHW)
    mu           : 1-D array of penalty parameters
    i            : index into mu
    """
    assert G_m_i.shape == Y_m_i.shape
    assert G_m_i.dtype == Y_m_i.dtype
    orig_shape = G_m_i.shape
    dtype = G_m_i.dtype
    itemsize = jnp.dtype(dtype).itemsize
    total = int(G_m_i.size)

    # One scalar reciprocal, hoisted out of the hot loop.
    inv_mu = 1.0 / jnp.asarray(mu, jnp.float32)[i]

    # Lane-dense last dim that exactly divides the element count -> the 2D
    # view is a free (metadata-only) reshape, no padding copy needed.
    lane = next((l for l in (512, 256, 128) if total % l == 0), None)

    # Fast path: tiny inputs, or element counts not viewable as (rows, 128k)
    # without a padding copy.  One fused XLA elementwise op is already at the
    # HBM roofline and beats kernel-launch + plumbing overhead here.
    if lane is None or total * itemsize < small_input_bytes:
        z = G_m_i + Y_m_i * inv_mu
        return jnp.maximum(z, 0.0).astype(dtype)

    rows = total // lane
    # Sublane granularity for this dtype: f32 -> 8, bf16 -> 16, int8/fp8 -> 32.
    sub = max(8, 32 // itemsize)

    tgt_bytes, min_steps = _device_tile_defaults()
    if target_block_bytes is not None:
        tgt_bytes = target_block_bytes
    if min_grid_steps is not None:
        min_steps = min_grid_steps

    max_block_rows = max(sub, (tgt_bytes // (lane * itemsize)) // sub * sub)

    if rows <= max_block_rows and min_steps <= 1:
        # Single full-extent block (legal for any `rows`, even non-multiples
        # of the sublane granularity).
        block_rows = rows
    else:
        block_rows = min(max_block_rows,
                         _round_up(pl.cdiv(rows, max(min_steps, 1)), sub))
        block_rows = max(sub, block_rows)
        if block_rows >= rows:           # could not usefully split
            block_rows = rows

    grid = (pl.cdiv(rows, block_rows),)  # ragged final block handled by Pallas

    g2d = G_m_i.reshape(rows, lane)      # metadata-only (contiguous input)
    y2d = Y_m_i.reshape(rows, lane)
    inv_mu_arr = inv_mu.reshape(1)

    z2d = pl.pallas_call(
        _updating_z_kernel,
        out_shape=jax.ShapeDtypeStruct((rows, lane), dtype),
        grid_spec=pltpu.PrefetchScalarGridSpec(
            num_scalar_prefetch=0,
            grid=grid,
            in_specs=[
                pl.BlockSpec(memory_space=pltpu.SMEM),                # 1/mu[i]
                pl.BlockSpec((block_rows, lane), lambda r: (r, 0)),   # G tile
                pl.BlockSpec((block_rows, lane), lambda r: (r, 0)),   # Y tile
            ],
            out_specs=pl.BlockSpec((block_rows, lane), lambda r: (r, 0)),
        ),
        compiler_params=pltpu.CompilerParams(
            dimension_semantics=("parallel",),
        ),
    )(inv_mu_arr, g2d, y2d)

    return z2d.reshape(orig_shape)


if __name__ == "__main__":
    # Deterministic synthetic setup (module __init__ only stores mu).
    key = jax.random.PRNGKey(0)
    k_g, k_y, k_mu = jax.random.split(key, 3)

    n_iters = 5
    # mu must be positive (penalty parameter); deterministic init.
    mu = 0.5 + jax.random.uniform(k_mu, (n_iters,), dtype=jnp.float32)

    def ref(G, Y, idx):
        return jnp.maximum(G + Y / mu[idx], 0.0)

    # --- Case 1: the canonical small NCHW shape (fused fast path) -----------
    N, C, H, W = 2, 4, 16, 16
    G1 = jax.random.normal(k_g, (N, C, H, W), dtype=jnp.float32)
    Y1 = jax.random.normal(k_y, (N, C, H, W), dtype=jnp.float32)
    Z1 = jax.block_until_ready(updating_z_layer(G1, Y1, mu, 2))
    assert Z1.shape == (N, C, H, W)
    assert jnp.allclose(Z1, ref(G1, Y1, 2), atol=1e-5, rtol=1e-5)

    # --- Case 2: non-128-divisible count -> fused fallback (no pad copies) --
    k_g2, k_y2 = jax.random.split(k_g)
    G2 = jax.random.normal(k_g2, (3, 5, 17, 29), dtype=jnp.float32)
    Y2 = jax.random.normal(k_y2, (3, 5, 17, 29), dtype=jnp.float32)
    Z2 = jax.block_until_ready(updating_z_layer(G2, Y2, mu, 4))
    assert jnp.allclose(Z2, ref(G2, Y2, 4), atol=1e-5, rtol=1e-5)

    # --- Case 3: 2 MiB input -> Pallas path, auto per-chip tile sizing ------
    k_g3, k_y3 = jax.random.split(k_y)
    G3 = jax.random.normal(k_g3, (4, 8, 128, 128), dtype=jnp.float32)
    Y3 = jax.random.normal(k_y3, (4, 8, 128, 128), dtype=jnp.float32)
    Z3 = jax.block_until_ready(updating_z_layer(G3, Y3, mu, 0))
    assert jnp.allclose(Z3, ref(G3, Y3, 0), atol=1e-5, rtol=1e-5)

    # --- Case 4: multi-step grid with a ragged final block (no padding) -----
    k_g4, k_y4 = jax.random.split(k_g2)
    G4 = jax.random.normal(k_g4, (4, 8, 150, 128), dtype=jnp.float32)
    Y4 = jax.random.normal(k_y4, (4, 8, 150, 128), dtype=jnp.float32)
    Z4 = jax.block_until_ready(
        updating_z_layer(G4, Y4, mu, 1, target_block_bytes=1 << 20))
    assert jnp.allclose(Z4, ref(G4, Y4, 1), atol=1e-5, rtol=1e-5)

    print("KERNEL_OK")
</pallas_src>

<mosaic_0001>
module attributes {stable_mosaic.version = 11 : i64} {
  func.func @_updating_z_kernel(%arg0: i32, %arg1: memref<1xf32, #tpu.memory_space<smem>>, %arg2: memref<1024x512xf32, #tpu.memory_space<vmem>>, %arg3: memref<1024x512xf32, #tpu.memory_space<vmem>>, %arg4: memref<1024x512xf32, #tpu.memory_space<vmem>>) attributes {dimension_semantics = [#tpu.dimension_semantics<parallel>], iteration_bounds = array<i64: 1>, scalar_prefetch = 0 : i64, scratch_operands = 0 : i64, tpu.core_type = #tpu.core_type<tc>, window_params = [{transform_indices = @transform_0, window_bounds = array<i64: 1>}, {transform_indices = @transform_1, window_bounds = array<i64: 1024, 512>}, {transform_indices = @transform_2, window_bounds = array<i64: 1024, 512>}, {transform_indices = @transform_3, window_bounds = array<i64: 1024, 512>}]} {
    %c0 = arith.constant 0 : index
    %0 = memref.load %arg1[%c0] : memref<1xf32, #tpu.memory_space<smem>>
    %c0_0 = arith.constant 0 : index
    %c0_1 = arith.constant 0 : index
    %1 = vector.load %arg2[%c0_0, %c0_1] : memref<1024x512xf32, #tpu.memory_space<vmem>>, vector<1024x512xf32>
    %c0_2 = arith.constant 0 : index
    %c0_3 = arith.constant 0 : index
    %2 = vector.load %arg3[%c0_2, %c0_3] : memref<1024x512xf32, #tpu.memory_space<vmem>>, vector<1024x512xf32>
    %3 = vector.broadcast %0 : f32 to vector<1024x512xf32>
    %4 = arith.mulf %2, %3 : vector<1024x512xf32>
    %5 = arith.addf %1, %4 : vector<1024x512xf32>
    %cst = arith.constant 0.000000e+00 : f32
    %6 = vector.broadcast %cst : f32 to vector<1024x512xf32>
    %7 = arith.maximumf %5, %6 : vector<1024x512xf32>
    %c0_4 = arith.constant 0 : index
    %c0_5 = arith.constant 0 : index
    %8 = vector.load %arg4[%c0_4, %c0_5] : memref<1024x512xf32, #tpu.memory_space<vmem>>, vector<1024x512xf32>
    tpu.vector_store %arg4[%c0_4, %c0_5], %7 {strides = array<i32>} : memref<1024x512xf32, #tpu.memory_space<vmem>>, vector<1024x512xf32>,
    return
  }
  func.func @transform_0(%arg0: i32) -> i32 {
    %c0_i32 = arith.constant 0 : i32
    %c0_i32_0 = arith.constant 0 : i32
    return %c0_i32 : i32
  }
  func.func @transform_1(%arg0: i32) -> (i32, i32) {
    %c0_i32 = arith.constant 0 : i32
    %c0_i32_0 = arith.constant 0 : i32
    return %arg0, %c0_i32 : i32, i32
  }
  func.func @transform_2(%arg0: i32) -> (i32, i32) {
    %c0_i32 = arith.constant 0 : i32
    %c0_i32_0 = arith.constant 0 : i32
    return %arg0, %c0_i32 : i32, i32
  }
  func.func @transform_3(%arg0: i32) -> (i32, i32) {
    %c0_i32 = arith.constant 0 : i32
    %c0_i32_0 = arith.constant 0 : i32
    return %arg0, %c0_i32 : i32, i32
  }
}

</mosaic_0001>

<llo_original>
// kernel: tpu_custom_call.1
$region0: #{tpu_custom_call.1}
  #allocation0 [shape = 'u32[]', space=smem, size = 0x4, offset = 0x4, fixed_abs, tag = 'smem constant byte address 0x4 - core index']
  #allocation1 [shape = 'u32[144,128]{1,0:T(1,128)}', space=vmem, size = 0x12000, scoped, tag = 'internal scratch']
  #allocation2 [shape = 'f32[1]{0:T(128)S(6)}', space=smem, size = 0x200, scoped, tag = 'scoped memory for tpu_custom_call.1']
  %s0 = inlined_call_operand.<no memory space> [shape: f32[1], index: 0, kind: input, shape index: {}]
  %s1 = inlined_call_operand.hbm [shape: f32[1024,512], index: 1, kind: input, shape index: {}]
  %s2 = inlined_call_operand.hbm [shape: f32[1024,512], index: 2, kind: input, shape index: {}]
  %s3 = inlined_call_operand.hbm [shape: f32[1024,512], index: 3, kind: output, shape index: {}]
  %s4 = sld [smem:[#allocation0]]
  $region30: #{tpu_custom_call.1} parent=0
    _
  %s6 = ssub.s32 1, %s4
  %s7 = scalar_select 0, %s6, %s4
  %8 = sst [smem:[#allocation2]] %s0
  $region1: #{tpu_custom_call.1} parent=0
    #allocation3 [shape = 'u8[2097152]{0}', space=vmem, size = 0x200000, scoped, tag = 'input window, operand 1, single buffered']
    #allocation4 [shape = 's32[1]{0}', space=sflag, size = 0x4, scoped, tag = 'scoped memory for tpu_custom_call.1']
    #allocation5 [shape = 's32[1]{0}', space=sflag, size = 0x4, scoped, tag = 'scoped memory for tpu_custom_call.1']
    #allocation6 [shape = 'u8[2097152]{0}', space=vmem, size = 0x200000, scoped, tag = 'input window, operand 2, single buffered']
    #allocation7 [shape = 's32[1]{0}', space=sflag, size = 0x4, scoped, tag = 'scoped memory for tpu_custom_call.1']
    #allocation8 [shape = 'u8[2097152]{0}', space=vmem, size = 0x200000, scoped, tag = 'output window, operand 0, single buffered']
    %9 = vsyncpa [#allocation4], 0
    %10 = vsyncpa [#allocation7], 0
    %11 = vsyncpa [#allocation5], 0
    // Predicated region
    $region2: #{tpu_custom_call.1} parent=1 // pred_check
      _
    $region3: #{tpu_custom_call.1} parent=1 // pred_check_branch
      %13 = sbr.rel (0) target = $region5
    $region4: #{tpu_custom_call.1} parent=1 // pred_region
      _
    $region5: #{tpu_custom_call.1} parent=1 // pred_fallthru
      _
    // Predicated region
    $region6: #{tpu_custom_call.1} parent=1 // pred_check
      _
    $region7: #{tpu_custom_call.1} parent=1 // pred_check_branch
      %15 = sbr.rel (0) target = $region9
    $region8: #{tpu_custom_call.1} parent=1 // pred_region
      %s17 = ssub.s32 65536, 65536
      %18 = vsyncadd [#allocation4], %s17
      %s19 = sshll.u32 [#allocation3], 4
      %s20 = int_to_ptr.vmem [resolvable:$true] %s19
      %25 = dma.hbm_to_vmem [thread:$0]  %s1, 65536, %s20, [#allocation4], 512, 512, 32
    $region9: #{tpu_custom_call.1} parent=1 // pred_fallthru
      _
    // Predicated region
    $region10: #{tpu_custom_call.1} parent=1 // pred_check
      _
    $region11: #{tpu_custom_call.1} parent=1 // pred_check_branch
      %27 = sbr.rel (0) target = $region13
    $region12: #{tpu_custom_call.1} parent=1 // pred_region
      %s29 = ssub.s32 65536, 65536
      %30 = vsyncadd [#allocation7], %s29
      %s31 = sshll.u32 [#allocation6], 4
      %s32 = int_to_ptr.vmem [resolvable:$true] %s31
      %37 = dma.hbm_to_vmem [thread:$0]  %s2, 65536, %s32, [#allocation7], 512, 512, 32
    $region13: #{tpu_custom_call.1} parent=1 // pred_fallthru
      _
    // Predicated region
    $region14: #{tpu_custom_call.1} parent=1 // pred_check
      _
    $region15: #{tpu_custom_call.1} parent=1 // pred_check_branch
      %39 = sbr.rel (0) target = $region17
    $region16: #{tpu_custom_call.1} parent=1 // pred_region
      %40 = dma.done [#allocation4], 65536
    $region17: #{tpu_custom_call.1} parent=1 // pred_fallthru
      _
    // Predicated region
    $region18: #{tpu_custom_call.1} parent=1 // pred_check
      _
    $region19: #{tpu_custom_call.1} parent=1 // pred_check_branch
      %42 = sbr.rel (0) target = $region21
    $region20: #{tpu_custom_call.1} parent=1 // pred_region
      %43 = dma.done [#allocation7], 65536
    $region21: #{tpu_custom_call.1} parent=1 // pred_fallthru
      _
    %s44 = sld [smem:[#allocation2]]
    %v45 = vld [vmem:[#allocation3] sm:$0xff]
    %v46 = vld [vmem:[#allocation3 + $0x8] sm:$0xff]
    %v47 = vld [vmem:[#allocation3 + $0x10] sm:$0xff]
    %v48 = vld [vmem:[#allocation3 + $0x18] sm:$0xff]
    %v49 = vld [vmem:[#allocation3 + $0x20] sm:$0xff]
    %v50 = vld [vmem:[#allocation3 + $0x28] sm:$0xff]
    %v51 = vld [vmem:[#allocation3 + $0x30] sm:$0xff]
    %v52 = vld [vmem:[#allocation3 + $0x38] sm:$0xff]
    %v53 = vld [vmem:[#allocation3 + $0x40] sm:$0xff]
    %v54 = vld [vmem:[#allocation3 + $0x48] sm:$0xff]
    %v55 = vld [vmem:[#allocation3 + $0x50] sm:$0xff]
    %v56 = vld [vmem:[#allocation3 + $0x58] sm:$0xff]
    %v57 = vld [vmem:[#allocation3 + $0x60] sm:$0xff]
    %v58 = vld [vmem:[#allocation3 + $0x68] sm:$0xff]
    %v59 = vld [vmem:[#allocation3 + $0x70] sm:$0xff]
    %v60 = vld [vmem:[#allocation3 + $0x78] sm:$0xff]
    %v61 = vld [vmem:[#allocation3 + $0x80] sm:$0xff]
    %v62 = vld [vmem:[#allocation3 + $0x88] sm:$0xff]
    %v63 = vld [vmem:[#allocation3 + $0x90] sm:$0xff]
    %v64 = vld [vmem:[#allocation3 + $0x98] sm:$0xff]
    %v65 = vld [vmem:[#allocation3 + $0xa0] sm:$0xff]
    %v66 = vld [vmem:[#allocation3 + $0xa8] sm:$0xff]
    %v67 = vld [vmem:[#allocation3 + $0xb0] sm:$0xff]
    %v68 = vld [vmem:[#allocation3 + $0xb8] sm:$0xff]
    %v69 = vld [vmem:[#allocation3 + $0xc0] sm:$0xff]
    %v70 = vld [vmem:[#allocation3 + $0xc8] sm:$0xff]
    %v71 = vld [vmem:[#allocation3 + $0xd0] sm:$0xff]
    %v72 = vld [vmem:[#allocation3 + $0xd8] sm:$0xff]
    %v73 = vld [vmem:[#allocation3 + $0xe0] sm:$0xff]
    %v74 = vld [vmem:[#allocation3 + $0xe8] sm:$0xff]
    %v75 = vld [vmem:[#allocation3 + $0xf0] sm:$0xff]
    %v76 = vld [vmem:[#allocation3 + $0xf8] sm:$0xff]
    %v77 = vld [vmem:[#allocation3 + $0x100] sm:$0xff]
    %v78 = vld [vmem:[#allocation3 + $0x108] sm:$0xff]
    %v79 = vld [vmem:[#allocation3 + $0x110] sm:$0xff]
    %v80 = vld [vmem:[#allocation3 + $0x118] sm:$0xff]
    %v81 = vld [vmem:[#allocation3 + $0x120] sm:$0xff]
    %v82 = vld [vmem:[#allocation3 + $0x128] sm:$0xff]
    %v83 = vld [vmem:[#allocation3 + $0x130] sm:$0xff]
    %v84 = vld [vmem:[#allocation3 + $0x138] sm:$0xff]
    %v85 = vld [vmem:[#allocation3 + $0x140] sm:$0xff]
    %v86 = vld [vmem:[#allocation3 + $0x148] sm:$0xff]
    %v87 = vld [vmem:[#allocation3 + $0x150] sm:$0xff]
    %v88 = vld [vmem:[#allocation3 + $0x158] sm:$0xff]
    %v89 = vld [vmem:[#allocation3 + $0x160] sm:$0xff]
    %v90 = vld [vmem:[#allocation3 + $0x168] sm:$0xff]
    %v91 = vld [vmem:[#allocation3 + $0x170] sm:$0xff]
    %v92 = vld [vmem:[#allocation3 + $0x178] sm:$0xff]
    %v93 = vld [vmem:[#allocation3 + $0x180] sm:$0xff]
    %v94 = vld [vmem:[#allocation3 + $0x188] sm:$0xff]
    %v95 = vld [vmem:[#allocation3 + $0x190] sm:$0xff]
    %v96 = vld [vmem:[#allocation3 + $0x198] sm:$0xff]
    %v97 = vld [vmem:[#allocation3 + $0x1a0] sm:$0xff]
    %v98 = vld [vmem:[#allocation3 + $0x1a8] sm:$0xff]
    %v99 = vld [vmem:[#allocation3 + $0x1b0] sm:$0xff]
    %v100 = vld [vmem:[#allocation3 + $0x1b8] sm:$0xff]
    %v101 = vld [vmem:[#allocation3 + $0x1c0] sm:$0xff]
    %v102 = vld [vmem:[#allocation3 + $0x1c8] sm:$0xff]
    %v103 = vld [vmem:[#allocation3 + $0x1d0] sm:$0xff]
    %v104 = vld [vmem:[#allocation3 + $0x1d8] sm:$0xff]
    %v105 = vld [vmem:[#allocation3 + $0x1e0] sm:$0xff]
    %v106 = vld [vmem:[#allocation3 + $0x1e8] sm:$0xff]
    %v107 = vld [vmem:[#allocation3 + $0x1f0] sm:$0xff]
    %v108 = vld [vmem:[#allocation3 + $0x1f8] sm:$0xff]
    %v109 = vld [vmem:[#allocation3 + $0x200] sm:$0xff]
    %v110 = vld [vmem:[#allocation3 + $0x208] sm:$0xff]
    %v111 = vld [vmem:[#allocation3 + $0x210] sm:$0xff]
    %v112 = vld [vmem:[#allocation3 + $0x218] sm:$0xff]
    %v113 = vld [vmem:[#allocation3 + $0x220] sm:$0xff]
    %v114 = vld [vmem:[#allocation3 + $0x228] sm:$0xff]
    %v115 = vld [vmem:[#allocation3 + $0x230] sm:$0xff]
    %v116 = vld [vmem:[#allocation3 + $0x238] sm:$0xff]
    %v117 = vld [vmem:[#allocation3 + $0x240] sm:$0xff]
    %v118 = vld [vmem:[#allocation3 + $0x248] sm:$0xff]
    %v119 = vld [vmem:[#allocation3 + $0x250] sm:$0xff]
    %v120 = vld [vmem:[#allocation3 + $0x258] sm:$0xff]
    %v121 = vld [vmem:[#allocation3 + $0x260] sm:$0xff]
    %v122 = vld [vmem:[#allocation3 + $0x268] sm:$0xff]
    %v123 = vld [vmem:[#allocation3 + $0x270] sm:$0xff]
    %v124 = vld [vmem:[#allocation3 + $0x278] sm:$0xff]
    %v125 = vld [vmem:[#allocation3 + $0x280] sm:$0xff]
    %v126 = vld [vmem:[#allocation3 + $0x288] sm:$0xff]
    %v127 = vld [vmem:[#allocation3 + $0x290] sm:$0xff]
    %v128 = vld [vmem:[#allocation3 + $0x298] sm:$0xff]
    %v129 = vld [vmem:[#allocation3 + $0x2a0] sm:$0xff]
    %v130 = vld [vmem:[#allocation3 + $0x2a8] sm:$0xff]
    %v131 = vld [vmem:[#allocation3 + $0x2b0] sm:$0xff]
    %v132 = vld [vmem:[#allocation3 + $0x2b8] sm:$0xff]
    %v133 = vld [vmem:[#allocation3 + $0x2c0] sm:$0xff]
    %v134 = vld [vmem:[#allocation3 + $0x2c8] sm:$0xff]
    %v135 = vld [vmem:[#allocation3 + $0x2d0] sm:$0xff]
    %v136 = vld [vmem:[#allocation3 + $0x2d8] sm:$0xff]
    %v137 = vld [vmem:[#allocation3 + $0x2e0] sm:$0xff]
    %v138 = vld [vmem:[#allocation3 + $0x2e8] sm:$0xff]
    %v139 = vld [vmem:[#allocation3 + $0x2f0] sm:$0xff]
    %v140 = vld [vmem:[#allocation3 + $0x2f8] sm:$0xff]
    %v141 = vld [vmem:[#allocation3 + $0x300] sm:$0xff]
    %v142 = vld [vmem:[#allocation3 + $0x308] sm:$0xff]
    %v143 = vld [vmem:[#allocation3 + $0x310] sm:$0xff]
    %v144 = vld [vmem:[#allocation3 + $0x318] sm:$0xff]
    %v145 = vld [vmem:[#allocation3 + $0x320] sm:$0xff]
    %v146 = vld [vmem:[#allocation3 + $0x328] sm:$0xff]
    %v147 = vld [vmem:[#allocation3 + $0x330] sm:$0xff]
    %v148 = vld [vmem:[#allocation3 + $0x338] sm:$0xff]
    %v149 = vld [vmem:[#allocation3 + $0x340] sm:$0xff]
    %v150 = vld [vmem:[#allocation3 + $0x348] sm:$0xff]
    %v151 = vld [vmem:[#allocation3 + $0x350] sm:$0xff]
    %v152 = vld [vmem:[#allocation3 + $0x358] sm:$0xff]
    %v153 = vld [vmem:[#allocation3 + $0x360] sm:$0xff]
    %v154 = vld [vmem:[#allocation3 + $0x368] sm:$0xff]
    %v155 = vld [vmem:[#allocation3 + $0x370] sm:$0xff]
    %v156 = vld [vmem:[#allocation3 + $0x378] sm:$0xff]
    %v157 = vld [vmem:[#allocation3 + $0x380] sm:$0xff]
    %v158 = vld [vmem:[#allocation3 + $0x388] sm:$0xff]
    %v159 = vld [vmem:[#allocation3 + $0x390] sm:$0xff]
    %v160 = vld [vmem:[#allocation3 + $0x398] sm:$0xff]
    %v161 = vld [vmem:[#allocation3 + $0x3a0] sm:$0xff]
    %v162 = vld [vmem:[#allocation3 + $0x3a8] sm:$0xff]
    %v163 = vld [vmem:[#allocation3 + $0x3b0] sm:$0xff]
    %v164 = vld [vmem:[#allocation3 + $0x3b8] sm:$0xff]
    %v165 = vld [vmem:[#allocation3 + $0x3c0] sm:$0xff]
    %v166 = vld [vmem:[#allocation3 + $0x3c8] sm:$0xff]
    %v167 = vld [vmem:[#allocation3 + $0x3d0] sm:$0xff]
    %v168 = vld [vmem:[#allocation3 + $0x3d8] sm:$0xff]
    %v169 = vld [vmem:[#allocation3 + $0x3e0] sm:$0xff]
    %v170 = vld [vmem:[#allocation3 + $0x3e8] sm:$0xff]
    %v171 = vld [vmem:[#allocation3 + $0x3f0] sm:$0xff]
    %v172 = vld [vmem:[#allocation3 + $0x3f8] sm:$0xff]
    %v173 = vld [vmem:[#allocation3 + $0x400] sm:$0xff]
    %v174 = vld [vmem:[#allocation3 + $0x408] sm:$0xff]
    %v175 = vld [vmem:[#allocation3 + $0x410] sm:$0xff]
    %v176 = vld [vmem:[#allocation3 + $0x418] sm:$0xff]
    %v177 = vld [vmem:[#allocation3 + $0x420] sm:$0xff]
    %v178 = vld [vmem:[#allocation3 + $0x428] sm:$0xff]
    %v179 = vld [vmem:[#allocation3 + $0x430] sm:$0xff]
    %v180 = vld [vmem:[#allocation3 + $0x438] sm:$0xff]
    %v181 = vld [vmem:[#allocation3 + $0x440] sm:$0xff]
    %v182 = vld [vmem:[#allocation3 + $0x448] sm:$0xff]
    %v183 = vld [vmem:[#allocation3 + $0x450] sm:$0xff]
    %v184 = vld [vmem:[#allocation3 + $0x458] sm:$0xff]
    %v185 = vld [vmem:[#allocation3 + $0x460] sm:$0xff]
    %v186 = vld [vmem:[#allocation3 + $0x468] sm:$0xff]
    %v187 = vld [vmem:[#allocation3 + $0x470] sm:$0xff]
    %v188 = vld [vmem:[#allocation3 + $0x478] sm:$0xff]
    %v189 = vld [vmem:[#allocation3 + $0x480] sm:$0xff]
    %v190 = vld [vmem:[#allocation3 + $0x488] sm:$0xff]
    %v191 = vld [vmem:[#allocation3 + $0x490] sm:$0xff]
    %v192 = vld [vmem:[#allocation3 + $0x498] sm:$0xff]
    %v193 = vld [vmem:[#allocation3 + $0x4a0] sm:$0xff]
    %v194 = vld [vmem:[#allocation3 + $0x4a8] sm:$0xff]
    %v195 = vld [vmem:[#allocation3 + $0x4b0] sm:$0xff]
    %v196 = vld [vmem:[#allocation3 + $0x4b8] sm:$0xff]
    %v197 = vld [vmem:[#allocation3 + $0x4c0] sm:$0xff]
    %v198 = vld [vmem:[#allocation3 + $0x4c8] sm:$0xff]
    %v199 = vld [vmem:[#allocation3 + $0x4d0] sm:$0xff]
    %v200 = vld [vmem:[#allocation3 + $0x4d8] sm:$0xff]
    %v201 = vld [vmem:[#allocation3 + $0x4e0] sm:$0xff]
    %v202 = vld [vmem:[#allocation3 + $0x4e8] sm:$0xff]
    %v203 = vld [vmem:[#allocation3 + $0x4f0] sm:$0xff]
    %v204 = vld [vmem:[#allocation3 + $0x4f8] sm:$0xff]
    %v205 = vld [vmem:[#allocation3 + $0x500] sm:$0xff]
    %v206 = vld [vmem:[#allocation3 + $0x508] sm:$0xff]
    %v207 = vld [vmem:[#allocation3 + $0x510] sm:$0xff]
    %v208 = vld [vmem:[#allocation3 + $0x518] sm:$0xff]
    %v209 = vld [vmem:[#allocation3 + $0x520] sm:$0xff]
    %v210 = vld [vmem:[#allocation3 + $0x528] sm:$0xff]
    %v211 = vld [vmem:[#allocation3 + $0x530] sm:$0xff]
    %v212 = vld [vmem:[#allocation3 + $0x538] sm:$0xff]
    %v213 = vld [vmem:[#allocation3 + $0x540] sm:$0xff]
    %v214 = vld [vmem:[#allocation3 + $0x548] sm:$0xff]
    %v215 = vld [vmem:[#allocation3 + $0x550] sm:$0xff]
    %v216 = vld [vmem:[#allocation3 + $0x558] sm:$0xff]
    %v217 = vld [vmem:[#allocation3 + $0x560] sm:$0xff]
    %v218 = vld [vmem:[#allocation3 + $0x568] sm:$0xff]
    %v219 = vld [vmem:[#allocation3 + $0x570] sm:$0xff]
    %v220 = vld [vmem:[#allocation3 + $0x578] sm:$0xff]
    %v221 = vld [vmem:[#allocation3 + $0x580] sm:$0xff]
    %v222 = vld [vmem:[#allocation3 + $0x588] sm:$0xff]
    %v223 = vld [vmem:[#allocation3 + $0x590] sm:$0xff]
    %v224 = vld [vmem:[#allocation3 + $0x598] sm:$0xff]
    %v225 = vld [vmem:[#allocation3 + $0x5a0] sm:$0xff]
    %v226 = vld [vmem:[#allocation3 + $0x5a8] sm:$0xff]
    %v227 = vld [vmem:[#allocation3 + $0x5b0] sm:$0xff]
    %v228 = vld [vmem:[#allocation3 + $0x5b8] sm:$0xff]
    %v229 = vld [vmem:[#allocation3 + $0x5c0] sm:$0xff]
    %v230 = vld [vmem:[#allocation3 + $0x5c8] sm:$0xff]
    %v231 = vld [vmem:[#allocation3 + $0x5d0] sm:$0xff]
    %v232 = vld [vmem:[#allocation3 + $0x5d8] sm:$0xff]
    %v233 = vld [vmem:[#allocation3 + $0x5e0] sm:$0xff]
    %v234 = vld [vmem:[#allocation3 + $0x5e8] sm:$0xff]
    %v235 = vld [vmem:[#allocation3 + $0x5f0] sm:$0xff]
    %v236 = vld [vmem:[#allocation3 + $0x5f8] sm:$0xff]
    %v237 = vld [vmem:[#allocation3 + $0x600] sm:$0xff]
    %v238 = vld [vmem:[#allocation3 + $0x608] sm:$0xff]
    %v239 = vld [vmem:[#allocation3 + $0x610] sm:$0xff]
    %v240 = vld [vmem:[#allocation3 + $0x618] sm:$0xff]
    %v241 = vld [vmem:[#allocation3 + $0x620] sm:$0xff]
    %v242 = vld [vmem:[#allocation3 + $0x628] sm:$0xff]
    %v243 = vld [vmem:[#allocation3 + $0x630] sm:$0xff]
    %v244 = vld [vmem:[#allocation3 + $0x638] sm:$0xff]
    %v245 = vld [vmem:[#allocation3 + $0x640] sm:$0xff]
    %v246 = vld [vmem:[#allocation3 + $0x648] sm:$0xff]
    %v247 = vld [vmem:[#allocation3 + $0x650] sm:$0xff]
    %v248 = vld [vmem:[#allocation3 + $0x658] sm:$0xff]
    %v249 = vld [vmem:[#allocation3 + $0x660] sm:$0xff]
    %v250 = vld [vmem:[#allocation3 + $0x668] sm:$0xff]
    %v251 = vld [vmem:[#allocation3 + $0x670] sm:$0xff]
    %v252 = vld [vmem:[#allocation3 + $0x678] sm:$0xff]
    %v253 = vld [vmem:[#allocation3 + $0x680] sm:$0xff]
    %v254 = vld [vmem:[#allocation3 + $0x688] sm:$0xff]
    %v255 = vld [vmem:[#allocation3 + $0x690] sm:$0xff]
    %v256 = vld [vmem:[#allocation3 + $0x698] sm:$0xff]
    %v257 = vld [vmem:[#allocation3 + $0x6a0] sm:$0xff]
    %v258 = vld [vmem:[#allocation3 + $0x6a8] sm:$0xff]
    %v259 = vld [vmem:[#allocation3 + $0x6b0] sm:$0xff]
    %v260 = vld [vmem:[#allocation3 + $0x6b8] sm:$0xff]
    %v261 = vld [vmem:[#allocation3 + $0x6c0] sm:$0xff]
    %v262 = vld [vmem:[#allocation3 + $0x6c8] sm:$0xff]
    %v263 = vld [vmem:[#allocation3 + $0x6d0] sm:$0xff]
    %v264 = vld [vmem:[#allocation3 + $0x6d8] sm:$0xff]
    %v265 = vld [vmem:[#allocation3 + $0x6e0] sm:$0xff]
    %v266 = vld [vmem:[#allocation3 + $0x6e8] sm:$0xff]
    %v267 = vld [vmem:[#allocation3 + $0x6f0] sm:$0xff]
    %v268 = vld [vmem:[#allocation3 + $0x6f8] sm:$0xff]
    %v269 = vld [vmem:[#allocation3 + $0x700] sm:$0xff]
    %v270 = vld [vmem:[#allocation3 + $0x708] sm:$0xff]
    %v271 = vld [vmem:[#allocation3 + $0x710] sm:$0xff]
    %v272 = vld [vmem:[#allocation3 + $0x718] sm:$0xff]
    %v273 = vld [vmem:[#allocation3 + $0x720] sm:$0xff]
    %v274 = vld [vmem:[#allocation3 + $0x728] sm:$0xff]
    %v275 = vld [vmem:[#allocation3 + $0x730] sm:$0xff]
    %v276 = vld [vmem:[#allocation3 + $0x738] sm:$0xff]
    %v277 = vld [vmem:[#allocation3 + $0x740] sm:$0xff]
    %v278 = vld [vmem:[#allocation3 + $0x748] sm:$0xff]
    %v279 = vld [vmem:[#allocation3 + $0x750] sm:$0xff]
    %v280 = vld [vmem:[#allocation3 + $0x758] sm:$0xff]
    %v281 = vld [vmem:[#allocation3 + $0x760] sm:$0xff]
    %v282 = vld [vmem:[#allocation3 + $0x768] sm:$0xff]
    %v283 = vld [vmem:[#allocation3 + $0x770] sm:$0xff]
    %v284 = vld [vmem:[#allocation3 + $0x778] sm:$0xff]
    %v285 = vld [vmem:[#allocation3 + $0x780] sm:$0xff]
    %v286 = vld [vmem:[#allocation3 + $0x788] sm:$0xff]
    %v287 = vld [vmem:[#allocation3 + $0x790] sm:$0xff]
    %v288 = vld [vmem:[#allocation3 + $0x798] sm:$0xff]
    %v289 = vld [vmem:[#allocation3 + $0x7a0] sm:$0xff]
    %v290 = vld [vmem:[#allocation3 + $0x7a8] sm:$0xff]
    %v291 = vld [vmem:[#allocation3 + $0x7b0] sm:$0xff]
    %v292 = vld [vmem:[#allocation3 + $0x7b8] sm:$0xff]
    %v293 = vld [vmem:[#allocation3 + $0x7c0] sm:$0xff]
    %v294 = vld [vmem:[#allocation3 + $0x7c8] sm:$0xff]
    %v295 = vld [vmem:[#allocation3 + $0x7d0] sm:$0xff]
    %v296 = vld [vmem:[#allocation3 + $0x7d8] sm:$0xff]
    %v297 = vld [vmem:[#allocation3 + $0x7e0] sm:$0xff]
    %v298 = vld [vmem:[#allocation3 + $0x7e8] sm:$0xff]
    %v299 = vld [vmem:[#allocation3 + $0x7f0] sm:$0xff]
    %v300 = vld [vmem:[#allocation3 + $0x7f8] sm:$0xff]
    %v301 = vld [vmem:[#allocation3 + $0x800] sm:$0xff]
    %v302 = vld [vmem:[#allocation3 + $0x808] sm:$0xff]
    %v303 = vld [vmem:[#allocation3 + $0x810] sm:$0xff]
    %v304 = vld [vmem:[#allocation3 + $0x818] sm:$0xff]
    %v305 = vld [vmem:[#allocation3 + $0x820] sm:$0xff]
    %v306 = vld [vmem:[#allocation3 + $0x828] sm:$0xff]
    %v307 = vld [vmem:[#allocation3 + $0x830] sm:$0xff]
    %v308 = vld [vmem:[#allocation3 + $0x838] sm:$0xff]
    %v309 = vld [vmem:[#allocation3 + $0x840] sm:$0xff]
    %v310 = vld [vmem:[#allocation3 + $0x848] sm:$0xff]
    %v311 = vld [vmem:[#allocation3 + $0x850] sm:$0xff]
    %v312 = vld [vmem:[#allocation3 + $0x858] sm:$0xff]
    %v313 = vld [vmem:[#allocation3 + $0x860] sm:$0xff]
    %v314 = vld [vmem:[#allocation3 + $0x868] sm:$0xff]
    %v315 = vld [vmem:[#allocation3 + $0x870] sm:$0xff]
    %v316 = vld [vmem:[#allocation3 + $0x878] sm:$0xff]
    %v317 = vld [vmem:[#allocation3 + $0x880] sm:$0xff]
    %v318 = vld [vmem:[#allocation3 + $0x888] sm:$0xff]
    %v319 = vld [vmem:[#allocation3 + $0x890] sm:$0xff]
    %v320 = vld [vmem:[#allocation3 + $0x898] sm:$0xff]
    %v321 = vld [vmem:[#allocation3 + $0x8a0] sm:$0xff]
    %v322 = vld [vmem:[#allocation3 + $0x8a8] sm:$0xff]
    %v323 = vld [vmem:[#allocation3 + $0x8b0] sm:$0xff]
    %v324 = vld [vmem:[#allocation3 + $0x8b8] sm:$0xff]
    %v325 = vld [vmem:[#allocation3 + $0x8c0] sm:$0xff]
    %v326 = vld [vmem:[#allocation3 + $0x8c8] sm:$0xff]
    %v327 = vld [vmem:[#allocation3 + $0x8d0] sm:$0xff]
    %v328 = vld [vmem:[#allocation3 + $0x8d8] sm:$0xff]
    %v329 = vld [vmem:[#allocation3 + $0x8e0] sm:$0xff]
    %v330 = vld [vmem:[#allocation3 + $0x8e8] sm:$0xff]
    %v331 = vld [vmem:[#allocation3 + $0x8f0] sm:$0xff]
    %v332 = vld [vmem:[#allocation3 + $0x8f8] sm:$0xff]
    %v333 = vld [vmem:[#allocation3 + $0x900] sm:$0xff]
    %v334 = vld [vmem:[#allocation3 + $0x908] sm:$0xff]
    %v335 = vld [vmem:[#allocation3 + $0x910] sm:$0xff]
    %v336 = vld [vmem:[#allocation3 + $0x918] sm:$0xff]
    %v337 = vld [vmem:[#allocation3 + $0x920] sm:$0xff]
    %v338 = vld [vmem:[#allocation3 + $0x928] sm:$0xff]
    %v339 = vld [vmem:[#allocation3 + $0x930] sm:$0xff]
    %v340 = vld [vmem:[#allocation3 + $0x938] sm:$0xff]
    %v341 = vld [vmem:[#allocation3 + $0x940] sm:$0xff]
    %v342 = vld [vmem:[#allocation3 + $0x948] sm:$0xff]
    %v343 = vld [vmem:[#allocation3 + $0x950] sm:$0xff]
    %v344 = vld [vmem:[#allocation3 + $0x958] sm:$0xff]
    %v345 = vld [vmem:[#allocation3 + $0x960] sm:$0xff]
    %v346 = vld [vmem:[#allocation3 + $0x968] sm:$0xff]
    %v347 = vld [vmem:[#allocation3 + $0x970] sm:$0xff]
    %v348 = vld [vmem:[#allocation3 + $0x978] sm:$0xff]
    %v349 = vld [vmem:[#allocation3 + $0x980] sm:$0xff]
    %v350 = vld [vmem:[#allocation3 + $0x988] sm:$0xff]
    %v351 = vld [vmem:[#allocation3 + $0x990] sm:$0xff]
    %v352 = vld [vmem:[#allocation3 + $0x998] sm:$0xff]
    %v353 = vld [vmem:[#allocation3 + $0x9a0] sm:$0xff]
    %v354 = vld [vmem:[#allocation3 + $0x9a8] sm:$0xff]
    %v355 = vld [vmem:[#allocation3 + $0x9b0] sm:$0xff]
    %v356 = vld [vmem:[#allocation3 + $0x9b8] sm:$0xff]
    %v357 = vld [vmem:[#allocation3 + $0x9c0] sm:$0xff]
    %v358 = vld [vmem:[#allocation3 + $0x9c8] sm:$0xff]
    %v359 = vld [vmem:[#allocation3 + $0x9d0] sm:$0xff]
    %v360 = vld [vmem:[#allocation3 + $0x9d8] sm:$0xff]
    %v361 = vld [vmem:[#allocation3 + $0x9e0] sm:$0xff]
    %v362 = vld [vmem:[#allocation3 + $0x9e8] sm:$0xff]
    %v363 = vld [vmem:[#allocation3 + $0x9f0] sm:$0xff]
    %v364 = vld [vmem:[#allocation3 + $0x9f8] sm:$0xff]
    %v365 = vld [vmem:[#allocation3 + $0xa00] sm:$0xff]
    %v366 = vld [vmem:[#allocation3 + $0xa08] sm:$0xff]
    %v367 = vld [vmem:[#allocation3 + $0xa10] sm:$0xff]
    %v368 = vld [vmem:[#allocation3 + $0xa18] sm:$0xff]
    %v369 = vld [vmem:[#allocation3 + $0xa20] sm:$0xff]
    %v370 = vld [vmem:[#allocation3 + $0xa28] sm:$0xff]
    %v371 = vld [vmem:[#allocation3 + $0xa30] sm:$0xff]
    %v372 = vld [vmem:[#allocation3 + $0xa38] sm:$0xff]
    %v373 = vld [vmem:[#allocation3 + $0xa40] sm:$0xff]
    %v374 = vld [vmem:[#allocation3 + $0xa48] sm:$0xff]
    %v375 = vld [vmem:[#allocation3 + $0xa50] sm:$0xff]
    %v376 = vld [vmem:[#allocation3 + $0xa58] sm:$0xff]
    %v377 = vld [vmem:[#allocation3 + $0xa60] sm:$0xff]
    %v378 = vld [vmem:[#allocation3 + $0xa68] sm:$0xff]
    %v379 = vld [vmem:[#allocation3 + $0xa70] sm:$0xff]
    %v380 = vld [vmem:[#allocation3 + $0xa78] sm:$0xff]
    %v381 = vld [vmem:[#allocation3 + $0xa80] sm:$0xff]
    %v382 = vld [vmem:[#allocation3 + $0xa88] sm:$0xff]
    %v383 = vld [vmem:[#allocation3 + $0xa90] sm:$0xff]
    %v384 = vld [vmem:[#allocation3 + $0xa98] sm:$0xff]
    %v385 = vld [vmem:[#allocation3 + $0xaa0] sm:$0xff]
    %v386 = vld [vmem:[#allocation3 + $0xaa8] sm:$0xff]
    %v387 = vld [vmem:[#allocation3 + $0xab0] sm:$0xff]
    %v388 = vld [vmem:[#allocation3 + $0xab8] sm:$0xff]
    %v389 = vld [vmem:[#allocation3 + $0xac0] sm:$0xff]
    %v390 = vld [vmem:[#allocation3 + $0xac8] sm:$0xff]
    %v391 = vld [vmem:[#allocation3 + $0xad0] sm:$0xff]
    %v392 = vld [vmem:[#allocation3 + $0xad8] sm:$0xff]
    %v393 = vld [vmem:[#allocation3 + $0xae0] sm:$0xff]
    %v394 = vld [vmem:[#allocation3 + $0xae8] sm:$0xff]
    %v395 = vld [vmem:[#allocation3 + $0xaf0] sm:$0xff]
    %v396 = vld [vmem:[#allocation3 + $0xaf8] sm:$0xff]
    %v397 = vld [vmem:[#allocation3 + $0xb00] sm:$0xff]
    %v398 = vld [vmem:[#allocation3 + $0xb08] sm:$0xff]
    %v399 = vld [vmem:[#allocation3 + $0xb10] sm:$0xff]
    %v400 = vld [vmem:[#allocation3 + $0xb18] sm:$0xff]
    %v401 = vld [vmem:[#allocation3 + $0xb20] sm:$0xff]
    %v402 = vld [vmem:[#allocation3 + $0xb28] sm:$0xff]
    %v403 = vld [vmem:[#allocation3 + $0xb30] sm:$0xff]
    %v404 = vld [vmem:[#allocation3 + $0xb38] sm:$0xff]
    %v405 = vld [vmem:[#allocation3 + $0xb40] sm:$0xff]
    %v406 = vld [vmem:[#allocation3 + $0xb48] sm:$0xff]
    %v407 = vld [vmem:[#allocation3 + $0xb50] sm:$0xff]
    %v408 = vld [vmem:[#allocation3 + $0xb58] sm:$0xff]
    %v409 = vld [vmem:[#allocation3 + $0xb60] sm:$0xff]
    %v410 = vld [vmem:[#allocation3 + $0xb68] sm:$0xff]
    %v411 = vld [vmem:[#allocation3 + $0xb70] sm:$0xff]
    %v412 = vld [vmem:[#allocation3 + $0xb78] sm:$0xff]
    %v413 = vld [vmem:[#allocation3 + $0xb80] sm:$0xff]
    %v414 = vld [vmem:[#allocation3 + $0xb88] sm:$0xff]
    %v415 = vld [vmem:[#allocation3 + $0xb90] sm:$0xff]
    %v416 = vld [vmem:[#allocation3 + $0xb98] sm:$0xff]
    %v417 = vld [vmem:[#allocation3 + $0xba0] sm:$0xff]
    %v418 = vld [vmem:[#allocation3 + $0xba8] sm:$0xff]
    %v419 = vld [vmem:[#allocation3 + $0xbb0] sm:$0xff]
    %v420 = vld [vmem:[#allocation3 + $0xbb8] sm:$0xff]
    %v421 = vld [vmem:[#allocation3 + $0xbc0] sm:$0xff]
    %v422 = vld [vmem:[#allocation3 + $0xbc8] sm:$0xff]
    %v423 = vld [vmem:[#allocation3 + $0xbd0] sm:$0xff]
    %v424 = vld [vmem:[#allocation3 + $0xbd8] sm:$0xff]
    %v425 = vld [vmem:[#allocation3 + $0xbe0] sm:$0xff]
    %v426 = vld [vmem:[#allocation3 + $0xbe8] sm:$0xff]
    %v427 = vld [vmem:[#allocation3 + $0xbf0] sm:$0xff]
    %v428 = vld [vmem:[#allocation3 + $0xbf8] sm:$0xff]
    %v429 = vld [vmem:[#allocation3 + $0xc00] sm:$0xff]
    %v430 = vld [vmem:[#allocation3 + $0xc08] sm:$0xff]
    %v431 = vld [vmem:[#allocation3 + $0xc10] sm:$0xff]
    %v432 = vld [vmem:[#allocation3 + $0xc18] sm:$0xff]
    %v433 = vld [vmem:[#allocation3 + $0xc20] sm:$0xff]
    %v434 = vld [vmem:[#allocation3 + $0xc28] sm:$0xff]
    %v435 = vld [vmem:[#allocation3 + $0xc30] sm:$0xff]
    %v436 = vld [vmem:[#allocation3 + $0xc38] sm:$0xff]
    %v437 = vld [vmem:[#allocation3 + $0xc40] sm:$0xff]
    %v438 = vld [vmem:[#allocation3 + $0xc48] sm:$0xff]
    %v439 = vld [vmem:[#allocation3 + $0xc50] sm:$0xff]
    %v440 = vld [vmem:[#allocation3 + $0xc58] sm:$0xff]
    %v441 = vld [vmem:[#allocation3 + $0xc60] sm:$0xff]
    %v442 = vld [vmem:[#allocation3 + $0xc68] sm:$0xff]
    %v443 = vld [vmem:[#allocation3 + $0xc70] sm:$0xff]
    %v444 = vld [vmem:[#allocation3 + $0xc78] sm:$0xff]
    %v445 = vld [vmem:[#allocation3 + $0xc80] sm:$0xff]
    %v446 = vld [vmem:[#allocation3 + $0xc88] sm:$0xff]
    %v447 = vld [vmem:[#allocation3 + $0xc90] sm:$0xff]
    %v448 = vld [vmem:[#allocation3 + $0xc98] sm:$0xff]
    %v449 = vld [vmem:[#allocation3 + $0xca0] sm:$0xff]
    %v450 = vld [vmem:[#allocation3 + $0xca8] sm:$0xff]
    %v451 = vld [vmem:[#allocation3 + $0xcb0] sm:$0xff]
    %v452 = vld [vmem:[#allocation3 + $0xcb8] sm:$0xff]
    %v453 = vld [vmem:[#allocation3 + $0xcc0] sm:$0xff]
    %v454 = vld [vmem:[#allocation3 + $0xcc8] sm:$0xff]
    %v455 = vld [vmem:[#allocation3 + $0xcd0] sm:$0xff]
    %v456 = vld [vmem:[#allocation3 + $0xcd8] sm:$0xff]
    %v457 = vld [vmem:[#allocation3 + $0xce0] sm:$0xff]
    %v458 = vld [vmem:[#allocation3 + $0xce8] sm:$0xff]
    %v459 = vld [vmem:[#allocation3 + $0xcf0] sm:$0xff]
    %v460 = vld [vmem:[#allocation3 + $0xcf8] sm:$0xff]
    %v461 = vld [vmem:[#allocation3 + $0xd00] sm:$0xff]
    %v462 = vld [vmem:[#allocation3 + $0xd08] sm:$0xff]
    %v463 = vld [vmem:[#allocation3 + $0xd10] sm:$0xff]
    %v464 = vld [vmem:[#allocation3 + $0xd18] sm:$0xff]
    %v465 = vld [vmem:[#allocation3 + $0xd20] sm:$0xff]
    %v466 = vld [vmem:[#allocation3 + $0xd28] sm:$0xff]
    %v467 = vld [vmem:[#allocation3 + $0xd30] sm:$0xff]
    %v468 = vld [vmem:[#allocation3 + $0xd38] sm:$0xff]
    %v469 = vld [vmem:[#allocation3 + $0xd40] sm:$0xff]
    %v470 = vld [vmem:[#allocation3 + $0xd48] sm:$0xff]
    %v471 = vld [vmem:[#allocation3 + $0xd50] sm:$0xff]
    %v472 = vld [vmem:[#allocation3 + $0xd58] sm:$0xff]
    %v473 = vld [vmem:[#allocation3 + $0xd60] sm:$0xff]
    %v474 = vld [vmem:[#allocation3 + $0xd68] sm:$0xff]
    %v475 = vld [vmem:[#allocation3 + $0xd70] sm:$0xff]
    %v476 = vld [vmem:[#allocation3 + $0xd78] sm:$0xff]
    %v477 = vld [vmem:[#allocation3 + $0xd80] sm:$0xff]
    %v478 = vld [vmem:[#allocation3 + $0xd88] sm:$0xff]
    %v479 = vld [vmem:[#allocation3 + $0xd90] sm:$0xff]
    %v480 = vld [vmem:[#allocation3 + $0xd98] sm:$0xff]
    %v481 = vld [vmem:[#allocation3 + $0xda0] sm:$0xff]
    %v482 = vld [vmem:[#allocation3 + $0xda8] sm:$0xff]
    %v483 = vld [vmem:[#allocation3 + $0xdb0] sm:$0xff]
    %v484 = vld [vmem:[#allocation3 + $0xdb8] sm:$0xff]
    %v485 = vld [vmem:[#allocation3 + $0xdc0] sm:$0xff]
    %v486 = vld [vmem:[#allocation3 + $0xdc8] sm:$0xff]
    %v487 = vld [vmem:[#allocation3 + $0xdd0] sm:$0xff]
    %v488 = vld [vmem:[#allocation3 + $0xdd8] sm:$0xff]
    %v489 = vld [vmem:[#allocation3 + $0xde0] sm:$0xff]
    %v490 = vld [vmem:[#allocation3 + $0xde8] sm:$0xff]
    %v491 = vld [vmem:[#allocation3 + $0xdf0] sm:$0xff]
    %v492 = vld [vmem:[#allocation3 + $0xdf8] sm:$0xff]
    %v493 = vld [vmem:[#allocation3 + $0xe00] sm:$0xff]
    %v494 = vld [vmem:[#allocation3 + $0xe08] sm:$0xff]
    %v495 = vld [vmem:[#allocation3 + $0xe10] sm:$0xff]
    %v496 = vld [vmem:[#allocation3 + $0xe18] sm:$0xff]
    %v497 = vld [vmem:[#allocation3 + $0xe20] sm:$0xff]
    %v498 = vld [vmem:[#allocation3 + $0xe28] sm:$0xff]
    %v499 = vld [vmem:[#allocation3 + $0xe30] sm:$0xff]
    %v500 = vld [vmem:[#allocation3 + $0xe38] sm:$0xff]
    %v501 = vld [vmem:[#allocation3 + $0xe40] sm:$0xff]
    %v502 = vld [vmem:[#allocation3 + $0xe48] sm:$0xff]
    %v503 = vld [vmem:[#allocation3 + $0xe50] sm:$0xff]
    %v504 = vld [vmem:[#allocation3 + $0xe58] sm:$0xff]
    %v505 = vld [vmem:[#allocation3 + $0xe60] sm:$0xff]
    %v506 = vld [vmem:[#allocation3 + $0xe68] sm:$0xff]
    %v507 = vld [vmem:[#allocation3 + $0xe70] sm:$0xff]
    %v508 = vld [vmem:[#allocation3 + $0xe78] sm:$0xff]
    %v509 = vld [vmem:[#allocation3 + $0xe80] sm:$0xff]
    %v510 = vld [vmem:[#allocation3 + $0xe88] sm:$0xff]
    %v511 = vld [vmem:[#allocation3 + $0xe90] sm:$0xff]
    %v512 = vld [vmem:[#allocation3 + $0xe98] sm:$0xff]
    %v513 = vld [vmem:[#allocation3 + $0xea0] sm:$0xff]
    %v514 = vld [vmem:[#allocation3 + $0xea8] sm:$0xff]
    %v515 = vld [vmem:[#allocation3 + $0xeb0] sm:$0xff]
    %v516 = vld [vmem:[#allocation3 + $0xeb8] sm:$0xff]
    %v517 = vld [vmem:[#allocation3 + $0xec0] sm:$0xff]
    %v518 = vld [vmem:[#allocation3 + $0xec8] sm:$0xff]
    %v519 = vld [vmem:[#allocation3 + $0xed0] sm:$0xff]
    %v520 = vld [vmem:[#allocation3 + $0xed8] sm:$0xff]
    %v521 = vld [vmem:[#allocation3 + $0xee0] sm:$0xff]
    %v522 = vld [vmem:[#allocation3 + $0xee8] sm:$0xff]
    %v523 = vld [vmem:[#allocation3 + $0xef0] sm:$0xff]
    %v524 = vld [vmem:[#allocation3 + $0xef8] sm:$0xff]
    %v525 = vld [vmem:[#allocation3 + $0xf00] sm:$0xff]
    %v526 = vld [vmem:[#allocation3 + $0xf08] sm:$0xff]
    %v527 = vld [vmem:[#allocation3 + $0xf10] sm:$0xff]
    %v528 = vld [vmem:[#allocation3 + $0xf18] sm:$0xff]
    %v529 = vld [vmem:[#allocation3 + $0xf20] sm:$0xff]
    %v530 = vld [vmem:[#allocation3 + $0xf28] sm:$0xff]
    %v531 = vld [vmem:[#allocation3 + $0xf30] sm:$0xff]
    %v532 = vld [vmem:[#allocation3 + $0xf38] sm:$0xff]
    %v533 = vld [vmem:[#allocation3 + $0xf40] sm:$0xff]
    %v534 = vld [vmem:[#allocation3 + $0xf48] sm:$0xff]
    %v535 = vld [vmem:[#allocation3 + $0xf50] sm:$0xff]
    %v536 = vld [vmem:[#allocation3 + $0xf58] sm:$0xff]
    %v537 = vld [vmem:[#allocation3 + $0xf60] sm:$0xff]
    %v538 = vld [vmem:[#allocation3 + $0xf68] sm:$0xff]
    %v539 = vld [vmem:[#allocation3 + $0xf70] sm:$0xff]
    %v540 = vld [vmem:[#allocation3 + $0xf78] sm:$0xff]
    %v541 = vld [vmem:[#allocation3 + $0xf80] sm:$0xff]
    %v542 = vld [vmem:[#allocation3 + $0xf88] sm:$0xff]
    %v543 = vld [vmem:[#allocation3 + $0xf90] sm:$0xff]
    %v544 = vld [vmem:[#allocation3 + $0xf98] sm:$0xff]
    %v545 = vld [vmem:[#allocation3 + $0xfa0] sm:$0xff]
    %v546 = vld [vmem:[#allocation3 + $0xfa8] sm:$0xff]
    %v547 = vld [vmem:[#allocation3 + $0xfb0] sm:$0xff]
    %v548 = vld [vmem:[#allocation3 + $0xfb8] sm:$0xff]
    %v549 = vld [vmem:[#allocation3 + $0xfc0] sm:$0xff]
    %v550 = vld [vmem:[#allocation3 + $0xfc8] sm:$0xff]
    %v551 = vld [vmem:[#allocation3 + $0xfd0] sm:$0xff]
    %v552 = vld [vmem:[#allocation3 + $0xfd8] sm:$0xff]
    %v553 = vld [vmem:[#allocation3 + $0xfe0] sm:$0xff]
    %v554 = vld [vmem:[#allocation3 + $0xfe8] sm:$0xff]
    %v555 = vld [vmem:[#allocation3 + $0xff0] sm:$0xff]
    %v556 = vld [vmem:[#allocation3 + $0xff8] sm:$0xff]
    %v557 = vld [vmem:[#allocation6] sm:$0xff]
    %v558 = vld [vmem:[#allocation6 + $0x8] sm:$0xff]
    %v559 = vld [vmem:[#allocation6 + $0x10] sm:$0xff]
    %v560 = vld [vmem:[#allocation6 + $0x18] sm:$0xff]
    %v561 = vld [vmem:[#allocation6 + $0x20] sm:$0xff]
    %v562 = vld [vmem:[#allocation6 + $0x28] sm:$0xff]
    %v563 = vld [vmem:[#allocation6 + $0x30] sm:$0xff]
    %v564 = vld [vmem:[#allocation6 + $0x38] sm:$0xff]
    %v565 = vld [vmem:[#allocation6 + $0x40] sm:$0xff]
    %v566 = vld [vmem:[#allocation6 + $0x48] sm:$0xff]
    %v567 = vld [vmem:[#allocation6 + $0x50] sm:$0xff]
    %v568 = vld [vmem:[#allocation6 + $0x58] sm:$0xff]
    %v569 = vld [vmem:[#allocation6 + $0x60] sm:$0xff]
    %v570 = vld [vmem:[#allocation6 + $0x68] sm:$0xff]
    %v571 = vld [vmem:[#allocation6 + $0x70] sm:$0xff]
    %v572 = vld [vmem:[#allocation6 + $0x78] sm:$0xff]
    %v573 = vld [vmem:[#allocation6 + $0x80] sm:$0xff]
    %v574 = vld [vmem:[#allocation6 + $0x88] sm:$0xff]
    %v575 = vld [vmem:[#allocation6 + $0x90] sm:$0xff]
    %v576 = vld [vmem:[#allocation6 + $0x98] sm:$0xff]
    %v577 = vld [vmem:[#allocation6 + $0xa0] sm:$0xff]
    %v578 = vld [vmem:[#allocation6 + $0xa8] sm:$0xff]
    %v579 = vld [vmem:[#allocation6 + $0xb0] sm:$0xff]
    %v580 = vld [vmem:[#allocation6 + $0xb8] sm:$0xff]
    %v581 = vld [vmem:[#allocation6 + $0xc0] sm:$0xff]
    %v582 = vld [vmem:[#allocation6 + $0xc8] sm:$0xff]
    %v583 = vld [vmem:[#allocation6 + $0xd0] sm:$0xff]
    %v584 = vld [vmem:[#allocation6 + $0xd8] sm:$0xff]
    %v585 = vld [vmem:[#allocation6 + $0xe0] sm:$0xff]
    %v586 = vld [vmem:[#allocation6 + $0xe8] sm:$0xff]
    %v587 = vld [vmem:[#allocation6 + $0xf0] sm:$0xff]
    %v588 = vld [vmem:[#allocation6 + $0xf8] sm:$0xff]
    %v589 = vld [vmem:[#allocation6 + $0x100] sm:$0xff]
    %v590 = vld [vmem:[#allocation6 + $0x108] sm:$0xff]
    %v591 = vld [vmem:[#allocation6 + $0x110] sm:$0xff]
    %v592 = vld [vmem:[#allocation6 + $0x118] sm:$0xff]
    %v593 = vld [vmem:[#allocation6 + $0x120] sm:$0xff]
    %v594 = vld [vmem:[#allocation6 + $0x128] sm:$0xff]
    %v595 = vld [vmem:[#allocation6 + $0x130] sm:$0xff]
    %v596 = vld [vmem:[#allocation6 + $0x138] sm:$0xff]
    %v597 = vld [vmem:[#allocation6 + $0x140] sm:$0xff]
    %v598 = vld [vmem:[#allocation6 + $0x148] sm:$0xff]
    %v599 = vld [vmem:[#allocation6 + $0x150] sm:$0xff]
    %v600 = vld [vmem:[#allocation6 + $0x158] sm:$0xff]
    %v601 = vld [vmem:[#allocation6 + $0x160] sm:$0xff]
    %v602 = vld [vmem:[#allocation6 + $0x168] sm:$0xff]
    %v603 = vld [vmem:[#allocation6 + $0x170] sm:$0xff]
    %v604 = vld [vmem:[#allocation6 + $0x178] sm:$0xff]
    %v605 = vld [vmem:[#allocation6 + $0x180] sm:$0xff]
    %v606 = vld [vmem:[#allocation6 + $0x188] sm:$0xff]
    %v607 = vld [vmem:[#allocation6 + $0x190] sm:$0xff]
    %v608 = vld [vmem:[#allocation6 + $0x198] sm:$0xff]
    %v609 = vld [vmem:[#allocation6 + $0x1a0] sm:$0xff]
    %v610 = vld [vmem:[#allocation6 + $0x1a8] sm:$0xff]
    %v611 = vld [vmem:[#allocation6 + $0x1b0] sm:$0xff]
    %v612 = vld [vmem:[#allocation6 + $0x1b8] sm:$0xff]
    %v613 = vld [vmem:[#allocation6 + $0x1c0] sm:$0xff]
    %v614 = vld [vmem:[#allocation6 + $0x1c8] sm:$0xff]
    %v615 = vld [vmem:[#allocation6 + $0x1d0] sm:$0xff]
    %v616 = vld [vmem:[#allocation6 + $0x1d8] sm:$0xff]
    %v617 = vld [vmem:[#allocation6 + $0x1e0] sm:$0xff]
    %v618 = vld [vmem:[#allocation6 + $0x1e8] sm:$0xff]
    %v619 = vld [vmem:[#allocation6 + $0x1f0] sm:$0xff]
    %v620 = vld [vmem:[#allocation6 + $0x1f8] sm:$0xff]
    %v621 = vld [vmem:[#allocation6 + $0x200] sm:$0xff]
    %v622 = vld [vmem:[#allocation6 + $0x208] sm:$0xff]
    %v623 = vld [vmem:[#allocation6 + $0x210] sm:$0xff]
    %v624 = vld [vmem:[#allocation6 + $0x218] sm:$0xff]
    %v625 = vld [vmem:[#allocation6 + $0x220] sm:$0xff]
    %v626 = vld [vmem:[#allocation6 + $0x228] sm:$0xff]
    %v627 = vld [vmem:[#allocation6 + $0x230] sm:$0xff]
    %v628 = vld [vmem:[#allocation6 + $0x238] sm:$0xff]
    %v629 = vld [vmem:[#allocation6 + $0x240] sm:$0xff]
    %v630 = vld [vmem:[#allocation6 + $0x248] sm:$0xff]
    %v631 = vld [vmem:[#allocation6 + $0x250] sm:$0xff]
    %v632 = vld [vmem:[#allocation6 + $0x258] sm:$0xff]
    %v633 = vld [vmem:[#allocation6 + $0x260] sm:$0xff]
    %v634 = vld [vmem:[#allocation6 + $0x268] sm:$0xff]
    %v635 = vld [vmem:[#allocation6 + $0x270] sm:$0xff]
    %v636 = vld [vmem:[#allocation6 + $0x278] sm:$0xff]
    %v637 = vld [vmem:[#allocation6 + $0x280] sm:$0xff]
    %v638 = vld [vmem:[#allocation6 + $0x288] sm:$0xff]
    %v639 = vld [vmem:[#allocation6 + $0x290] sm:$0xff]
    %v640 = vld [vmem:[#allocation6 + $0x298] sm:$0xff]
    %v641 = vld [vmem:[#allocation6 + $0x2a0] sm:$0xff]
    %v642 = vld [vmem:[#allocation6 + $0x2a8] sm:$0xff]
    %v643 = vld [vmem:[#allocation6 + $0x2b0] sm:$0xff]
    %v644 = vld [vmem:[#allocation6 + $0x2b8] sm:$0xff]
    %v645 = vld [vmem:[#allocation6 + $0x2c0] sm:$0xff]
    %v646 = vld [vmem:[#allocation6 + $0x2c8] sm:$0xff]
    %v647 = vld [vmem:[#allocation6 + $0x2d0] sm:$0xff]
    %v648 = vld [vmem:[#allocation6 + $0x2d8] sm:$0xff]
    %v649 = vld [vmem:[#allocation6 + $0x2e0] sm:$0xff]
    %v650 = vld [vmem:[#allocation6 + $0x2e8] sm:$0xff]
    %v651 = vld [vmem:[#allocation6 + $0x2f0] sm:$0xff]
    %v652 = vld [vmem:[#allocation6 + $0x2f8] sm:$0xff]
    %v653 = vld [vmem:[#allocation6 + $0x300] sm:$0xff]
    %v654 = vld [vmem:[#allocation6 + $0x308] sm:$0xff]
    %v655 = vld [vmem:[#allocation6 + $0x310] sm:$0xff]
    %v656 = vld [vmem:[#allocation6 + $0x318] sm:$0xff]
    %v657 = vld [vmem:[#allocation6 + $0x320] sm:$0xff]
    %v658 = vld [vmem:[#allocation6 + $0x328] sm:$0xff]
    %v659 = vld [vmem:[#allocation6 + $0x330] sm:$0xff]
    %v660 = vld [vmem:[#allocation6 + $0x338] sm:$0xff]
    %v661 = vld [vmem:[#allocation6 + $0x340] sm:$0xff]
    %v662 = vld [vmem:[#allocation6 + $0x348] sm:$0xff]
    %v663 = vld [vmem:[#allocation6 + $0x350] sm:$0xff]
    %v664 = vld [vmem:[#allocation6 + $0x358] sm:$0xff]
    %v665 = vld [vmem:[#allocation6 + $0x360] sm:$0xff]
    %v666 = vld [vmem:[#allocation6 + $0x368] sm:$0xff]
    %v667 = vld [vmem:[#allocation6 + $0x370] sm:$0xff]
    %v668 = vld [vmem:[#allocation6 + $0x378] sm:$0xff]
    %v669 = vld [vmem:[#allocation6 + $0x380] sm:$0xff]
    %v670 = vld [vmem:[#allocation6 + $0x388] sm:$0xff]
    %v671 = vld [vmem:[#allocation6 + $0x390] sm:$0xff]
    %v672 = vld [vmem:[#allocation6 + $0x398] sm:$0xff]
    %v673 = vld [vmem:[#allocation6 + $0x3a0] sm:$0xff]
    %v674 = vld [vmem:[#allocation6 + $0x3a8] sm:$0xff]
    %v675 = vld [vmem:[#allocation6 + $0x3b0] sm:$0xff]
    %v676 = vld [vmem:[#allocation6 + $0x3b8] sm:$0xff]
    %v677 = vld [vmem:[#allocation6 + $0x3c0] sm:$0xff]
    %v678 = vld [vmem:[#allocation6 + $0x3c8] sm:$0xff]
    %v679 = vld [vmem:[#allocation6 + $0x3d0] sm:$0xff]
    %v680 = vld [vmem:[#allocation6 + $0x3d8] sm:$0xff]
    %v681 = vld [vmem:[#allocation6 + $0x3e0] sm:$0xff]
    %v682 = vld [vmem:[#allocation6 + $0x3e8] sm:$0xff]
    %v683 = vld [vmem:[#allocation6 + $0x3f0] sm:$0xff]
    %v684 = vld [vmem:[#allocation6 + $0x3f8] sm:$0xff]
    %v685 = vld [vmem:[#allocation6 + $0x400] sm:$0xff]
    %v686 = vld [vmem:[#allocation6 + $0x408] sm:$0xff]
    %v687 = vld [vmem:[#allocation6 + $0x410] sm:$0xff]
    %v688 = vld [vmem:[#allocation6 + $0x418] sm:$0xff]
    %v689 = vld [vmem:[#allocation6 + $0x420] sm:$0xff]
    %v690 = vld [vmem:[#allocation6 + $0x428] sm:$0xff]
    %v691 = vld [vmem:[#allocation6 + $0x430] sm:$0xff]
    %v692 = vld [vmem:[#allocation6 + $0x438] sm:$0xff]
    %v693 = vld [vmem:[#allocation6 + $0x440] sm:$0xff]
    %v694 = vld [vmem:[#allocation6 + $0x448] sm:$0xff]
    %v695 = vld [vmem:[#allocation6 + $0x450] sm:$0xff]
    %v696 = vld [vmem:[#allocation6 + $0x458] sm:$0xff]
    %v697 = vld [vmem:[#allocation6 + $0x460] sm:$0xff]
    %v698 = vld [vmem:[#allocation6 + $0x468] sm:$0xff]
    %v699 = vld [vmem:[#allocation6 + $0x470] sm:$0xff]
    %v700 = vld [vmem:[#allocation6 + $0x478] sm:$0xff]
    %v701 = vld [vmem:[#allocation6 + $0x480] sm:$0xff]
    %v702 = vld [vmem:[#allocation6 + $0x488] sm:$0xff]
    %v703 = vld [vmem:[#allocation6 + $0x490] sm:$0xff]
    %v704 = vld [vmem:[#allocation6 + $0x498] sm:$0xff]
    %v705 = vld [vmem:[#allocation6 + $0x4a0] sm:$0xff]
    %v706 = vld [vmem:[#allocation6 + $0x4a8] sm:$0xff]
    %v707 = vld [vmem:[#allocation6 + $0x4b0] sm:$0xff]
    %v708 = vld [vmem:[#allocation6 + $0x4b8] sm:$0xff]
    %v709 = vld [vmem:[#allocation6 + $0x4c0] sm:$0xff]
    %v710 = vld [vmem:[#allocation6 + $0x4c8] sm:$0xff]
    %v711 = vld [vmem:[#allocation6 + $0x4d0] sm:$0xff]
    %v712 = vld [vmem:[#allocation6 + $0x4d8] sm:$0xff]
    %v713 = vld [vmem:[#allocation6 + $0x4e0] sm:$0xff]
    %v714 = vld [vmem:[#allocation6 + $0x4e8] sm:$0xff]
    %v715 = vld [vmem:[#allocation6 + $0x4f0] sm:$0xff]
    %v716 = vld [vmem:[#allocation6 + $0x4f8] sm:$0xff]
    %v717 = vld [vmem:[#allocation6 + $0x500] sm:$0xff]
    %v718 = vld [vmem:[#allocation6 + $0x508] sm:$0xff]
    %v719 = vld [vmem:[#allocation6 + $0x510] sm:$0xff]
    %v720 = vld [vmem:[#allocation6 + $0x518] sm:$0xff]
    %v721 = vld [vmem:[#allocation6 + $0x520] sm:$0xff]
    %v722 = vld [vmem:[#allocation6 + $0x528] sm:$0xff]
    %v723 = vld [vmem:[#allocation6 + $0x530] sm:$0xff]
    %v724 = vld [vmem:[#allocation6 + $0x538] sm:$0xff]
    %v725 = vld [vmem:[#allocation6 + $0x540] sm:$0xff]
    %v726 = vld [vmem:[#allocation6 + $0x548] sm:$0xff]
    %v727 = vld [vmem:[#allocation6 + $0x550] sm:$0xff]
    %v728 = vld [vmem:[#allocation6 + $0x558] sm:$0xff]
    %v729 = vld [vmem:[#allocation6 + $0x560] sm:$0xff]
    %v730 = vld [vmem:[#allocation6 + $0x568] sm:$0xff]
    %v731 = vld [vmem:[#allocation6 + $0x570] sm:$0xff]
    %v732 = vld [vmem:[#allocation6 + $0x578] sm:$0xff]
    %v733 = vld [vmem:[#allocation6 + $0x580] sm:$0xff]
    %v734 = vld [vmem:[#allocation6 + $0x588] sm:$0xff]
    %v735 = vld [vmem:[#allocation6 + $0x590] sm:$0xff]
    %v736 = vld [vmem:[#allocation6 + $0x598] sm:$0xff]
    %v737 = vld [vmem:[#allocation6 + $0x5a0] sm:$0xff]
    %v738 = vld [vmem:[#allocation6 + $0x5a8] sm:$0xff]
    %v739 = vld [vmem:[#allocation6 + $0x5b0] sm:$0xff]
    %v740 = vld [vmem:[#allocation6 + $0x5b8] sm:$0xff]
    %v741 = vld [vmem:[#allocation6 + $0x5c0] sm:$0xff]
    %v742 = vld [vmem:[#allocation6 + $0x5c8] sm:$0xff]
    %v743 = vld [vmem:[#allocation6 + $0x5d0] sm:$0xff]
    %v744 = vld [vmem:[#allocation6 + $0x5d8] sm:$0xff]
    %v745 = vld [vmem:[#allocation6 + $0x5e0] sm:$0xff]
    %v746 = vld [vmem:[#allocation6 + $0x5e8] sm:$0xff]
    %v747 = vld [vmem:[#allocation6 + $0x5f0] sm:$0xff]
    %v748 = vld [vmem:[#allocation6 + $0x5f8] sm:$0xff]
    %v749 = vld [vmem:[#allocation6 + $0x600] sm:$0xff]
    %v750 = vld [vmem:[#allocation6 + $0x608] sm:$0xff]
    %v751 = vld [vmem:[#allocation6 + $0x610] sm:$0xff]
    %v752 = vld [vmem:[#allocation6 + $0x618] sm:$0xff]
    %v753 = vld [vmem:[#allocation6 + $0x620] sm:$0xff]
    %v754 = vld [vmem:[#allocation6 + $0x628] sm:$0xff]
    %v755 = vld [vmem:[#allocation6 + $0x630] sm:$0xff]
    %v756 = vld [vmem:[#allocation6 + $0x638] sm:$0xff]
    %v757 = vld [vmem:[#allocation6 + $0x640] sm:$0xff]
    %v758 = vld [vmem:[#allocation6 + $0x648] sm:$0xff]
    %v759 = vld [vmem:[#allocation6 + $0x650] sm:$0xff]
    %v760 = vld [vmem:[#allocation6 + $0x658] sm:$0xff]
    %v761 = vld [vmem:[#allocation6 + $0x660] sm:$0xff]
    %v762 = vld [vmem:[#allocation6 + $0x668] sm:$0xff]
    %v763 = vld [vmem:[#allocation6 + $0x670] sm:$0xff]
    %v764 = vld [vmem:[#allocation6 + $0x678] sm:$0xff]
    %v765 = vld [vmem:[#allocation6 + $0x680] sm:$0xff]
    %v766 = vld [vmem:[#allocation6 + $0x688] sm:$0xff]
    %v767 = vld [vmem:[#allocation6 + $0x690] sm:$0xff]
    %v768 = vld [vmem:[#allocation6 + $0x698] sm:$0xff]
    %v769 = vld [vmem:[#allocation6 + $0x6a0] sm:$0xff]
    %v770 = vld [vmem:[#allocation6 + $0x6a8] sm:$0xff]
    %v771 = vld [vmem:[#allocation6 + $0x6b0] sm:$0xff]
    %v772 = vld [vmem:[#allocation6 + $0x6b8] sm:$0xff]
    %v773 = vld [vmem:[#allocation6 + $0x6c0] sm:$0xff]
    %v774 = vld [vmem:[#allocation6 + $0x6c8] sm:$0xff]
    %v775 = vld [vmem:[#allocation6 + $0x6d0] sm:$0xff]
    %v776 = vld [vmem:[#allocation6 + $0x6d8] sm:$0xff]
    %v777 = vld [vmem:[#allocation6 + $0x6e0] sm:$0xff]
    %v778 = vld [vmem:[#allocation6 + $0x6e8] sm:$0xff]
    %v779 = vld [vmem:[#allocation6 + $0x6f0] sm:$0xff]
    %v780 = vld [vmem:[#allocation6 + $0x6f8] sm:$0xff]
    %v781 = vld [vmem:[#allocation6 + $0x700] sm:$0xff]
    %v782 = vld [vmem:[#allocation6 + $0x708] sm:$0xff]
    %v783 = vld [vmem:[#allocation6 + $0x710] sm:$0xff]
    %v784 = vld [vmem:[#allocation6 + $0x718] sm:$0xff]
    %v785 = vld [vmem:[#allocation6 + $0x720] sm:$0xff]
    %v786 = vld [vmem:[#allocation6 + $0x728] sm:$0xff]
    %v787 = vld [vmem:[#allocation6 + $0x730] sm:$0xff]
    %v788 = vld [vmem:[#allocation6 + $0x738] sm:$0xff]
    %v789 = vld [vmem:[#allocation6 + $0x740] sm:$0xff]
    %v790 = vld [vmem:[#allocation6 + $0x748] sm:$0xff]
    %v791 = vld [vmem:[#allocation6 + $0x750] sm:$0xff]
    %v792 = vld [vmem:[#allocation6 + $0x758] sm:$0xff]
    %v793 = vld [vmem:[#allocation6 + $0x760] sm:$0xff]
    %v794 = vld [vmem:[#allocation6 + $0x768] sm:$0xff]
    %v795 = vld [vmem:[#allocation6 + $0x770] sm:$0xff]
    %v796 = vld [vmem:[#allocation6 + $0x778] sm:$0xff]
    %v797 = vld [vmem:[#allocation6 + $0x780] sm:$0xff]
    %v798 = vld [vmem:[#allocation6 + $0x788] sm:$0xff]
    %v799 = vld [vmem:[#allocation6 + $0x790] sm:$0xff]
    %v800 = vld [vmem:[#allocation6 + $0x798] sm:$0xff]
    %v801 = vld [vmem:[#allocation6 + $0x7a0] sm:$0xff]
    %v802 = vld [vmem:[#allocation6 + $0x7a8] sm:$0xff]
    %v803 = vld [vmem:[#allocation6 + $0x7b0] sm:$0xff]
    %v804 = vld [vmem:[#allocation6 + $0x7b8] sm:$0xff]
    %v805 = vld [vmem:[#allocation6 + $0x7c0] sm:$0xff]
    %v806 = vld [vmem:[#allocation6 + $0x7c8] sm:$0xff]
    %v807 = vld [vmem:[#allocation6 + $0x7d0] sm:$0xff]
    %v808 = vld [vmem:[#allocation6 + $0x7d8] sm:$0xff]
    %v809 = vld [vmem:[#allocation6 + $0x7e0] sm:$0xff]
    %v810 = vld [vmem:[#allocation6 + $0x7e8] sm:$0xff]
    %v811 = vld [vmem:[#allocation6 + $0x7f0] sm:$0xff]
    %v812 = vld [vmem:[#allocation6 + $0x7f8] sm:$0xff]
    %v813 = vld [vmem:[#allocation6 + $0x800] sm:$0xff]
    %v814 = vld [vmem:[#allocation6 + $0x808] sm:$0xff]
    %v815 = vld [vmem:[#allocation6 + $0x810] sm:$0xff]
    %v816 = vld [vmem:[#allocation6 + $0x818] sm:$0xff]
    %v817 = vld [vmem:[#allocation6 + $0x820] sm:$0xff]
    %v818 = vld [vmem:[#allocation6 + $0x828] sm:$0xff]
    %v819 = vld [vmem:[#allocation6 + $0x830] sm:$0xff]
    %v820 = vld [vmem:[#allocation6 + $0x838] sm:$0xff]
    %v821 = vld [vmem:[#allocation6 + $0x840] sm:$0xff]
    %v822 = vld [vmem:[#allocation6 + $0x848] sm:$0xff]
    %v823 = vld [vmem:[#allocation6 + $0x850] sm:$0xff]
    %v824 = vld [vmem:[#allocation6 + $0x858] sm:$0xff]
    %v825 = vld [vmem:[#allocation6 + $0x860] sm:$0xff]
    %v826 = vld [vmem:[#allocation6 + $0x868] sm:$0xff]
    %v827 = vld [vmem:[#allocation6 + $0x870] sm:$0xff]
    %v828 = vld [vmem:[#allocation6 + $0x878] sm:$0xff]
    %v829 = vld [vmem:[#allocation6 + $0x880] sm:$0xff]
    %v830 = vld [vmem:[#allocation6 + $0x888] sm:$0xff]
    %v831 = vld [vmem:[#allocation6 + $0x890] sm:$0xff]
    %v832 = vld [vmem:[#allocation6 + $0x898] sm:$0xff]
    %v833 = vld [vmem:[#allocation6 + $0x8a0] sm:$0xff]
    %v834 = vld [vmem:[#allocation6 + $0x8a8] sm:$0xff]
    %v835 = vld [vmem:[#allocation6 + $0x8b0] sm:$0xff]
    %v836 = vld [vmem:[#allocation6 + $0x8b8] sm:$0xff]
    %v837 = vld [vmem:[#allocation6 + $0x8c0] sm:$0xff]
    %v838 = vld [vmem:[#allocation6 + $0x8c8] sm:$0xff]
    %v839 = vld [vmem:[#allocation6 + $0x8d0] sm:$0xff]
    %v840 = vld [vmem:[#allocation6 + $0x8d8] sm:$0xff]
    %v841 = vld [vmem:[#allocation6 + $0x8e0] sm:$0xff]
    %v842 = vld [vmem:[#allocation6 + $0x8e8] sm:$0xff]
    %v843 = vld [vmem:[#allocation6 + $0x8f0] sm:$0xff]
    %v844 = vld [vmem:[#allocation6 + $0x8f8] sm:$0xff]
    %v845 = vld [vmem:[#allocation6 + $0x900] sm:$0xff]
    %v846 = vld [vmem:[#allocation6 + $0x908] sm:$0xff]
    %v847 = vld [vmem:[#allocation6 + $0x910] sm:$0xff]
    %v848 = vld [vmem:[#allocation6 + $0x918] sm:$0xff]
    %v849 = vld [vmem:[#allocation6 + $0x920] sm:$0xff]
    %v850 = vld [vmem:[#allocation6 + $0x928] sm:$0xff]
    %v851 = vld [vmem:[#allocation6 + $0x930] sm:$0xff]
    %v852 = vld [vmem:[#allocation6 + $0x938] sm:$0xff]
    %v853 = vld [vmem:[#allocation6 + $0x940] sm:$0xff]
    %v854 = vld [vmem:[#allocation6 + $0x948] sm:$0xff]
    %v855 = vld [vmem:[#allocation6 + $0x950] sm:$0xff]
    %v856 = vld [vmem:[#allocation6 + $0x958] sm:$0xff]
    %v857 = vld [vmem:[#allocation6 + $0x960] sm:$0xff]
    %v858 = vld [vmem:[#allocation6 + $0x968] sm:$0xff]
    %v859 = vld [vmem:[#allocation6 + $0x970] sm:$0xff]
    %v860 = vld [vmem:[#allocation6 + $0x978] sm:$0xff]
    %v861 = vld [vmem:[#allocation6 + $0x980] sm:$0xff]
    %v862 = vld [vmem:[#allocation6 + $0x988] sm:$0xff]
    %v863 = vld [vmem:[#allocation6 + $0x990] sm:$0xff]
    %v864 = vld [vmem:[#allocation6 + $0x998] sm:$0xff]
    %v865 = vld [vmem:[#allocation6 + $0x9a0] sm:$0xff]
    %v866 = vld [vmem:[#allocation6 + $0x9a8] sm:$0xff]
    %v867 = vld [vmem:[#allocation6 + $0x9b0] sm:$0xff]
    %v868 = vld [vmem:[#allocation6 + $0x9b8] sm:$0xff]
    %v869 = vld [vmem:[#allocation6 + $0x9c0] sm:$0xff]
    %v870 = vld [vmem:[#allocation6 + $0x9c8] sm:$0xff]
    %v871 = vld [vmem:[#allocation6 + $0x9d0] sm:$0xff]
    %v872 = vld [vmem:[#allocation6 + $0x9d8] sm:$0xff]
    %v873 = vld [vmem:[#allocation6 + $0x9e0] sm:$0xff]
    %v874 = vld [vmem:[#allocation6 + $0x9e8] sm:$0xff]
    %v875 = vld [vmem:[#allocation6 + $0x9f0] sm:$0xff]
    %v876 = vld [vmem:[#allocation6 + $0x9f8] sm:$0xff]
    %v877 = vld [vmem:[#allocation6 + $0xa00] sm:$0xff]
    %v878 = vld [vmem:[#allocation6 + $0xa08] sm:$0xff]
    %v879 = vld [vmem:[#allocation6 + $0xa10] sm:$0xff]
    %v880 = vld [vmem:[#allocation6 + $0xa18] sm:$0xff]
    %v881 = vld [vmem:[#allocation6 + $0xa20] sm:$0xff]
    %v882 = vld [vmem:[#allocation6 + $0xa28] sm:$0xff]
    %v883 = vld [vmem:[#allocation6 + $0xa30] sm:$0xff]
    %v884 = vld [vmem:[#allocation6 + $0xa38] sm:$0xff]
    %v885 = vld [vmem:[#allocation6 + $0xa40] sm:$0xff]
    %v886 = vld [vmem:[#allocation6 + $0xa48] sm:$0xff]
    %v887 = vld [vmem:[#allocation6 + $0xa50] sm:$0xff]
    %v888 = vld [vmem:[#allocation6 + $0xa58] sm:$0xff]
    %v889 = vld [vmem:[#allocation6 + $0xa60] sm:$0xff]
    %v890 = vld [vmem:[#allocation6 + $0xa68] sm:$0xff]
    %v891 = vld [vmem:[#allocation6 + $0xa70] sm:$0xff]
    %v892 = vld [vmem:[#allocation6 + $0xa78] sm:$0xff]
    %v893 = vld [vmem:[#allocation6 + $0xa80] sm:$0xff]
    %v894 = vld [vmem:[#allocation6 + $0xa88] sm:$0xff]
    %v895 = vld [vmem:[#allocation6 + $0xa90] sm:$0xff]
    %v896 = vld [vmem:[#allocation6 + $0xa98] sm:$0xff]
    %v897 = vld [vmem:[#allocation6 + $0xaa0] sm:$0xff]
    %v898 = vld [vmem:[#allocation6 + $0xaa8] sm:$0xff]
    %v899 = vld [vmem:[#allocation6 + $0xab0] sm:$0xff]
    %v900 = vld [vmem:[#allocation6 + $0xab8] sm:$0xff]
    %v901 = vld [vmem:[#allocation6 + $0xac0] sm:$0xff]
    %v902 = vld [vmem:[#allocation6 + $0xac8] sm:$0xff]
    %v903 = vld [vmem:[#allocation6 + $0xad0] sm:$0xff]
    %v904 = vld [vmem:[#allocation6 + $0xad8] sm:$0xff]
    %v905 = vld [vmem:[#allocation6 + $0xae0] sm:$0xff]
    %v906 = vld [vmem:[#allocation6 + $0xae8] sm:$0xff]
    %v907 = vld [vmem:[#allocation6 + $0xaf0] sm:$0xff]
    %v908 = vld [vmem:[#allocation6 + $0xaf8] sm:$0xff]
    %v909 = vld [vmem:[#allocation6 + $0xb00] sm:$0xff]
    %v910 = vld [vmem:[#allocation6 + $0xb08] sm:$0xff]
    %v911 = vld [vmem:[#allocation6 + $0xb10] sm:$0xff]
    %v912 = vld [vmem:[#allocation6 + $0xb18] sm:$0xff]
    %v913 = vld [vmem:[#allocation6 + $0xb20] sm:$0xff]
    %v914 = vld [vmem:[#allocation6 + $0xb28] sm:$0xff]
    %v915 = vld [vmem:[#allocation6 + $0xb30] sm:$0xff]
    %v916 = vld [vmem:[#allocation6 + $0xb38] sm:$0xff]
    %v917 = vld [vmem:[#allocation6 + $0xb40] sm:$0xff]
    %v918 = vld [vmem:[#allocation6 + $0xb48] sm:$0xff]
    %v919 = vld [vmem:[#allocation6 + $0xb50] sm:$0xff]
    %v920 = vld [vmem:[#allocation6 + $0xb58] sm:$0xff]
    %v921 = vld [vmem:[#allocation6 + $0xb60] sm:$0xff]
    %v922 = vld [vmem:[#allocation6 + $0xb68] sm:$0xff]
    %v923 = vld [vmem:[#allocation6 + $0xb70] sm:$0xff]
    %v924 = vld [vmem:[#allocation6 + $0xb78] sm:$0xff]
    %v925 = vld [vmem:[#allocation6 + $0xb80] sm:$0xff]
    %v926 = vld [vmem:[#allocation6 + $0xb88] sm:$0xff]
    %v927 = vld [vmem:[#allocation6 + $0xb90] sm:$0xff]
    %v928 = vld [vmem:[#allocation6 + $0xb98] sm:$0xff]
    %v929 = vld [vmem:[#allocation6 + $0xba0] sm:$0xff]
    %v930 = vld [vmem:[#allocation6 + $0xba8] sm:$0xff]
    %v931 = vld [vmem:[#allocation6 + $0xbb0] sm:$0xff]
    %v932 = vld [vmem:[#allocation6 + $0xbb8] sm:$0xff]
    %v933 = vld [vmem:[#allocation6 + $0xbc0] sm:$0xff]
    %v934 = vld [vmem:[#allocation6 + $0xbc8] sm:$0xff]
    %v935 = vld [vmem:[#allocation6 + $0xbd0] sm:$0xff]
    %v936 = vld [vmem:[#allocation6 + $0xbd8] sm:$0xff]
    %v937 = vld [vmem:[#allocation6 + $0xbe0] sm:$0xff]
    %v938 = vld [vmem:[#allocation6 + $0xbe8] sm:$0xff]
    %v939 = vld [vmem:[#allocation6 + $0xbf0] sm:$0xff]
    %v940 = vld [vmem:[#allocation6 + $0xbf8] sm:$0xff]
    %v941 = vld [vmem:[#allocation6 + $0xc00] sm:$0xff]
    %v942 = vld [vmem:[#allocation6 + $0xc08] sm:$0xff]
    %v943 = vld [vmem:[#allocation6 + $0xc10] sm:$0xff]
    %v944 = vld [vmem:[#allocation6 + $0xc18] sm:$0xff]
    %v945 = vld [vmem:[#allocation6 + $0xc20] sm:$0xff]
    %v946 = vld [vmem:[#allocation6 + $0xc28] sm:$0xff]
    %v947 = vld [vmem:[#allocation6 + $0xc30] sm:$0xff]
    %v948 = vld [vmem:[#allocation6 + $0xc38] sm:$0xff]
    %v949 = vld [vmem:[#allocation6 + $0xc40] sm:$0xff]
    %v950 = vld [vmem:[#allocation6 + $0xc48] sm:$0xff]
    %v951 = vld [vmem:[#allocation6 + $0xc50] sm:$0xff]
    %v952 = vld [vmem:[#allocation6 + $0xc58] sm:$0xff]
    %v953 = vld [vmem:[#allocation6 + $0xc60] sm:$0xff]
    %v954 = vld [vmem:[#allocation6 + $0xc68] sm:$0xff]
    %v955 = vld [vmem:[#allocation6 + $0xc70] sm:$0xff]
    %v956 = vld [vmem:[#allocation6 + $0xc78] sm:$0xff]
    %v957 = vld [vmem:[#allocation6 + $0xc80] sm:$0xff]
    %v958 = vld [vmem:[#allocation6 + $0xc88] sm:$0xff]
    %v959 = vld [vmem:[#allocation6 + $0xc90] sm:$0xff]
    %v960 = vld [vmem:[#allocation6 + $0xc98] sm:$0xff]
    %v961 = vld [vmem:[#allocation6 + $0xca0] sm:$0xff]
    %v962 = vld [vmem:[#allocation6 + $0xca8] sm:$0xff]
    %v963 = vld [vmem:[#allocation6 + $0xcb0] sm:$0xff]
    %v964 = vld [vmem:[#allocation6 + $0xcb8] sm:$0xff]
    %v965 = vld [vmem:[#allocation6 + $0xcc0] sm:$0xff]
    %v966 = vld [vmem:[#allocation6 + $0xcc8] sm:$0xff]
    %v967 = vld [vmem:[#allocation6 + $0xcd0] sm:$0xff]
    %v968 = vld [vmem:[#allocation6 + $0xcd8] sm:$0xff]
    %v969 = vld [vmem:[#allocation6 + $0xce0] sm:$0xff]
    %v970 = vld [vmem:[#allocation6 + $0xce8] sm:$0xff]
    %v971 = vld [vmem:[#allocation6 + $0xcf0] sm:$0xff]
    %v972 = vld [vmem:[#allocation6 + $0xcf8] sm:$0xff]
    %v973 = vld [vmem:[#allocation6 + $0xd00] sm:$0xff]
    %v974 = vld [vmem:[#allocation6 + $0xd08] sm:$0xff]
    %v975 = vld [vmem:[#allocation6 + $0xd10] sm:$0xff]
    %v976 = vld [vmem:[#allocation6 + $0xd18] sm:$0xff]
    %v977 = vld [vmem:[#allocation6 + $0xd20] sm:$0xff]
    %v978 = vld [vmem:[#allocation6 + $0xd28] sm:$0xff]
    %v979 = vld [vmem:[#allocation6 + $0xd30] sm:$0xff]
    %v980 = vld [vmem:[#allocation6 + $0xd38] sm:$0xff]
    %v981 = vld [vmem:[#allocation6 + $0xd40] sm:$0xff]
    %v982 = vld [vmem:[#allocation6 + $0xd48] sm:$0xff]
    %v983 = vld [vmem:[#allocation6 + $0xd50] sm:$0xff]
    %v984 = vld [vmem:[#allocation6 + $0xd58] sm:$0xff]
    %v985 = vld [vmem:[#allocation6 + $0xd60] sm:$0xff]
    %v986 = vld [vmem:[#allocation6 + $0xd68] sm:$0xff]
    %v987 = vld [vmem:[#allocation6 + $0xd70] sm:$0xff]
    %v988 = vld [vmem:[#allocation6 + $0xd78] sm:$0xff]
    %v989 = vld [vmem:[#allocation6 + $0xd80] sm:$0xff]
    %v990 = vld [vmem:[#allocation6 + $0xd88] sm:$0xff]
    %v991 = vld [vmem:[#allocation6 + $0xd90] sm:$0xff]
    %v992 = vld [vmem:[#allocation6 + $0xd98] sm:$0xff]
    %v993 = vld [vmem:[#allocation6 + $0xda0] sm:$0xff]
    %v994 = vld [vmem:[#allocation6 + $0xda8] sm:$0xff]
    %v995 = vld [vmem:[#allocation6 + $0xdb0] sm:$0xff]
    %v996 = vld [vmem:[#allocation6 + $0xdb8] sm:$0xff]
    %v997 = vld [vmem:[#allocation6 + $0xdc0] sm:$0xff]
    %v998 = vld [vmem:[#allocation6 + $0xdc8] sm:$0xff]
    %v999 = vld [vmem:[#allocation6 + $0xdd0] sm:$0xff]
    %v1000 = vld [vmem:[#allocation6 + $0xdd8] sm:$0xff]
    %v1001 = vld [vmem:[#allocation6 + $0xde0] sm:$0xff]
    %v1002 = vld [vmem:[#allocation6 + $0xde8] sm:$0xff]
    %v1003 = vld [vmem:[#allocation6 + $0xdf0] sm:$0xff]
    %v1004 = vld [vmem:[#allocation6 + $0xdf8] sm:$0xff]
    %v1005 = vld [vmem:[#allocation6 + $0xe00] sm:$0xff]
    %v1006 = vld [vmem:[#allocation6 + $0xe08] sm:$0xff]
    %v1007 = vld [vmem:[#allocation6 + $0xe10] sm:$0xff]
    %v1008 = vld [vmem:[#allocation6 + $0xe18] sm:$0xff]
    %v1009 = vld [vmem:[#allocation6 + $0xe20] sm:$0xff]
    %v1010 = vld [vmem:[#allocation6 + $0xe28] sm:$0xff]
    %v1011 = vld [vmem:[#allocation6 + $0xe30] sm:$0xff]
    %v1012 = vld [vmem:[#allocation6 + $0xe38] sm:$0xff]
    %v1013 = vld [vmem:[#allocation6 + $0xe40] sm:$0xff]
    %v1014 = vld [vmem:[#allocation6 + $0xe48] sm:$0xff]
    %v1015 = vld [vmem:[#allocation6 + $0xe50] sm:$0xff]
    %v1016 = vld [vmem:[#allocation6 + $0xe58] sm:$0xff]
    %v1017 = vld [vmem:[#allocation6 + $0xe60] sm:$0xff]
    %v1018 = vld [vmem:[#allocation6 + $0xe68] sm:$0xff]
    %v1019 = vld [vmem:[#allocation6 + $0xe70] sm:$0xff]
    %v1020 = vld [vmem:[#allocation6 + $0xe78] sm:$0xff]
    %v1021 = vld [vmem:[#allocation6 + $0xe80] sm:$0xff]
    %v1022 = vld [vmem:[#allocation6 + $0xe88] sm:$0xff]
    %v1023 = vld [vmem:[#allocation6 + $0xe90] sm:$0xff]
    %v1024 = vld [vmem:[#allocation6 + $0xe98] sm:$0xff]
    %v1025 = vld [vmem:[#allocation6 + $0xea0] sm:$0xff]
    %v1026 = vld [vmem:[#allocation6 + $0xea8] sm:$0xff]
    %v1027 = vld [vmem:[#allocation6 + $0xeb0] sm:$0xff]
    %v1028 = vld [vmem:[#allocation6 + $0xeb8] sm:$0xff]
    %v1029 = vld [vmem:[#allocation6 + $0xec0] sm:$0xff]
    %v1030 = vld [vmem:[#allocation6 + $0xec8] sm:$0xff]
    %v1031 = vld [vmem:[#allocation6 + $0xed0] sm:$0xff]
    %v1032 = vld [vmem:[#allocation6 + $0xed8] sm:$0xff]
    %v1033 = vld [vmem:[#allocation6 + $0xee0] sm:$0xff]
    %v1034 = vld [vmem:[#allocation6 + $0xee8] sm:$0xff]
    %v1035 = vld [vmem:[#allocation6 + $0xef0] sm:$0xff]
    %v1036 = vld [vmem:[#allocation6 + $0xef8] sm:$0xff]
    %v1037 = vld [vmem:[#allocation6 + $0xf00] sm:$0xff]
    %v1038 = vld [vmem:[#allocation6 + $0xf08] sm:$0xff]
    %v1039 = vld [vmem:[#allocation6 + $0xf10] sm:$0xff]
    %v1040 = vld [vmem:[#allocation6 + $0xf18] sm:$0xff]
    %v1041 = vld [vmem:[#allocation6 + $0xf20] sm:$0xff]
    %v1042 = vld [vmem:[#allocation6 + $0xf28] sm:$0xff]
    %v1043 = vld [vmem:[#allocation6 + $0xf30] sm:$0xff]
    %v1044 = vld [vmem:[#allocation6 + $0xf38] sm:$0xff]
    %v1045 = vld [vmem:[#allocation6 + $0xf40] sm:$0xff]
    %v1046 = vld [vmem:[#allocation6 + $0xf48] sm:$0xff]
    %v1047 = vld [vmem:[#allocation6 + $0xf50] sm:$0xff]
    %v1048 = vld [vmem:[#allocation6 + $0xf58] sm:$0xff]
    %v1049 = vld [vmem:[#allocation6 + $0xf60] sm:$0xff]
    %v1050 = vld [vmem:[#allocation6 + $0xf68] sm:$0xff]
    %v1051 = vld [vmem:[#allocation6 + $0xf70] sm:$0xff]
    %v1052 = vld [vmem:[#allocation6 + $0xf78] sm:$0xff]
    %v1053 = vld [vmem:[#allocation6 + $0xf80] sm:$0xff]
    %v1054 = vld [vmem:[#allocation6 + $0xf88] sm:$0xff]
    %v1055 = vld [vmem:[#allocation6 + $0xf90] sm:$0xff]
    %v1056 = vld [vmem:[#allocation6 + $0xf98] sm:$0xff]
    %v1057 = vld [vmem:[#allocation6 + $0xfa0] sm:$0xff]
    %v1058 = vld [vmem:[#allocation6 + $0xfa8] sm:$0xff]
    %v1059 = vld [vmem:[#allocation6 + $0xfb0] sm:$0xff]
    %v1060 = vld [vmem:[#allocation6 + $0xfb8] sm:$0xff]
    %v1061 = vld [vmem:[#allocation6 + $0xfc0] sm:$0xff]
    %v1062 = vld [vmem:[#allocation6 + $0xfc8] sm:$0xff]
    %v1063 = vld [vmem:[#allocation6 + $0xfd0] sm:$0xff]
    %v1064 = vld [vmem:[#allocation6 + $0xfd8] sm:$0xff]
    %v1065 = vld [vmem:[#allocation6 + $0xfe0] sm:$0xff]
    %v1066 = vld [vmem:[#allocation6 + $0xfe8] sm:$0xff]
    %v1067 = vld [vmem:[#allocation6 + $0xff0] sm:$0xff]
    %v1068 = vld [vmem:[#allocation6 + $0xff8] sm:$0xff]
    %v1069 = vstv %s44
    %v1070 = vmul.f32 %v557, %v1069
    %v1071 = vmul.f32 %v558, %v1069
    %v1072 = vmul.f32 %v559, %v1069
    %v1073 = vmul.f32 %v560, %v1069
    %v1074 = vmul.f32 %v561, %v1069
    %v1075 = vmul.f32 %v562, %v1069
    %v1076 = vmul.f32 %v563, %v1069
    %v1077 = vmul.f32 %v564, %v1069
    %v1078 = vmul.f32 %v565, %v1069
    %v1079 = vmul.f32 %v566, %v1069
    %v1080 = vmul.f32 %v567, %v1069
    %v1081 = vmul.f32 %v568, %v1069
    %v1082 = vmul.f32 %v569, %v1069
    %v1083 = vmul.f32 %v570, %v1069
    %v1084 = vmul.f32 %v571, %v1069
    %v1085 = vmul.f32 %v572, %v1069
    %v1086 = vmul.f32 %v573, %v1069
    %v1087 = vmul.f32 %v574, %v1069
    %v1088 = vmul.f32 %v575, %v1069
    %v1089 = vmul.f32 %v576, %v1069
    %v1090 = vmul.f32 %v577, %v1069
    %v1091 = vmul.f32 %v578, %v1069
    %v1092 = vmul.f32 %v579, %v1069
    %v1093 = vmul.f32 %v580, %v1069
    %v1094 = vmul.f32 %v581, %v1069
    %v1095 = vmul.f32 %v582, %v1069
    %v1096 = vmul.f32 %v583, %v1069
    %v1097 = vmul.f32 %v584, %v1069
    %v1098 = vmul.f32 %v585, %v1069
    %v1099 = vmul.f32 %v586, %v1069
    %v1100 = vmul.f32 %v587, %v1069
    %v1101 = vmul.f32 %v588, %v1069
    %v1102 = vmul.f32 %v589, %v1069
    %v1103 = vmul.f32 %v590, %v1069
    %v1104 = vmul.f32 %v591, %v1069
    %v1105 = vmul.f32 %v592, %v1069
    %v1106 = vmul.f32 %v593, %v1069
    %v1107 = vmul.f32 %v594, %v1069
    %v1108 = vmul.f32 %v595, %v1069
    %v1109 = vmul.f32 %v596, %v1069
    %v1110 = vmul.f32 %v597, %v1069
    %v1111 = vmul.f32 %v598, %v1069
    %v1112 = vmul.f32 %v599, %v1069
    %v1113 = vmul.f32 %v600, %v1069
    %v1114 = vmul.f32 %v601, %v1069
    %v1115 = vmul.f32 %v602, %v1069
    %v1116 = vmul.f32 %v603, %v1069
    %v1117 = vmul.f32 %v604, %v1069
    %v1118 = vmul.f32 %v605, %v1069
    %v1119 = vmul.f32 %v606, %v1069
    %v1120 = vmul.f32 %v607, %v1069
    %v1121 = vmul.f32 %v608, %v1069
    %v1122 = vmul.f32 %v609, %v1069
    %v1123 = vmul.f32 %v610, %v1069
    %v1124 = vmul.f32 %v611, %v1069
    %v1125 = vmul.f32 %v612, %v1069
    %v1126 = vmul.f32 %v613, %v1069
    %v1127 = vmul.f32 %v614, %v1069
    %v1128 = vmul.f32 %v615, %v1069
    %v1129 = vmul.f32 %v616, %v1069
    %v1130 = vmul.f32 %v617, %v1069
    %v1131 = vmul.f32 %v618, %v1069
    %v1132 = vmul.f32 %v619, %v1069
    %v1133 = vmul.f32 %v620, %v1069
    %v1134 = vmul.f32 %v621, %v1069
    %v1135 = vmul.f32 %v622, %v1069
    %v1136 = vmul.f32 %v623, %v1069
    %v1137 = vmul.f32 %v624, %v1069
    %v1138 = vmul.f32 %v625, %v1069
    %v1139 = vmul.f32 %v626, %v1069
    %v1140 = vmul.f32 %v627, %v1069
    %v1141 = vmul.f32 %v628, %v1069
    %v1142 = vmul.f32 %v629, %v1069
    %v1143 = vmul.f32 %v630, %v1069
    %v1144 = vmul.f32 %v631, %v1069
    %v1145 = vmul.f32 %v632, %v1069
    %v1146 = vmul.f32 %v633, %v1069
    %v1147 = vmul.f32 %v634, %v1069
    %v1148 = vmul.f32 %v635, %v1069
    %v1149 = vmul.f32 %v636, %v1069
    %v1150 = vmul.f32 %v637, %v1069
    %v1151 = vmul.f32 %v638, %v1069
    %v1152 = vmul.f32 %v639, %v1069
    %v1153 = vmul.f32 %v640, %v1069
    %v1154 = vmul.f32 %v641, %v1069
    %v1155 = vmul.f32 %v642, %v1069
    %v1156 = vmul.f32 %v643, %v1069
    %v1157 = vmul.f32 %v644, %v1069
    %v1158 = vmul.f32 %v645, %v1069
    %v1159 = vmul.f32 %v646, %v1069
    %v1160 = vmul.f32 %v647, %v1069
    %v1161 = vmul.f32 %v648, %v1069
    %v1162 = vmul.f32 %v649, %v1069
    %v1163 = vmul.f32 %v650, %v1069
    %v1164 = vmul.f32 %v651, %v1069
    %v1165 = vmul.f32 %v652, %v1069
    %v1166 = vmul.f32 %v653, %v1069
    %v1167 = vmul.f32 %v654, %v1069
    %v1168 = vmul.f32 %v655, %v1069
    %v1169 = vmul.f32 %v656, %v1069
    %v1170 = vmul.f32 %v657, %v1069
    %v1171 = vmul.f32 %v658, %v1069
    %v1172 = vmul.f32 %v659, %v1069
    %v1173 = vmul.f32 %v660, %v1069
    %v1174 = vmul.f32 %v661, %v1069
    %v1175 = vmul.f32 %v662, %v1069
    %v1176 = vmul.f32 %v663, %v1069
    %v1177 = vmul.f32 %v664, %v1069
    %v1178 = vmul.f32 %v665, %v1069
    %v1179 = vmul.f32 %v666, %v1069
    %v1180 = vmul.f32 %v667, %v1069
    %v1181 = vmul.f32 %v668, %v1069
    %v1182 = vmul.f32 %v669, %v1069
    %v1183 = vmul.f32 %v670, %v1069
    %v1184 = vmul.f32 %v671, %v1069
    %v1185 = vmul.f32 %v672, %v1069
    %v1186 = vmul.f32 %v673, %v1069
    %v1187 = vmul.f32 %v674, %v1069
    %v1188 = vmul.f32 %v675, %v1069
    %v1189 = vmul.f32 %v676, %v1069
    %v1190 = vmul.f32 %v677, %v1069
    %v1191 = vmul.f32 %v678, %v1069
    %v1192 = vmul.f32 %v679, %v1069
    %v1193 = vmul.f32 %v680, %v1069
    %v1194 = vmul.f32 %v681, %v1069
    %v1195 = vmul.f32 %v682, %v1069
    %v1196 = vmul.f32 %v683, %v1069
    %v1197 = vmul.f32 %v684, %v1069
    %v1198 = vmul.f32 %v685, %v1069
    %v1199 = vmul.f32 %v686, %v1069
    %v1200 = vmul.f32 %v687, %v1069
    %v1201 = vmul.f32 %v688, %v1069
    %v1202 = vmul.f32 %v689, %v1069
    %v1203 = vmul.f32 %v690, %v1069
    %v1204 = vmul.f32 %v691, %v1069
    %v1205 = vmul.f32 %v692, %v1069
    %v1206 = vmul.f32 %v693, %v1069
    %v1207 = vmul.f32 %v694, %v1069
    %v1208 = vmul.f32 %v695, %v1069
    %v1209 = vmul.f32 %v696, %v1069
    %v1210 = vmul.f32 %v697, %v1069
    %v1211 = vmul.f32 %v698, %v1069
    %v1212 = vmul.f32 %v699, %v1069
    %v1213 = vmul.f32 %v700, %v1069
    %v1214 = vmul.f32 %v701, %v1069
    %v1215 = vmul.f32 %v702, %v1069
    %v1216 = vmul.f32 %v703, %v1069
    %v1217 = vmul.f32 %v704, %v1069
    %v1218 = vmul.f32 %v705, %v1069
    %v1219 = vmul.f32 %v706, %v1069
    %v1220 = vmul.f32 %v707, %v1069
    %v1221 = vmul.f32 %v708, %v1069
    %v1222 = vmul.f32 %v709, %v1069
    %v1223 = vmul.f32 %v710, %v1069
    %v1224 = vmul.f32 %v711, %v1069
    %v1225 = vmul.f32 %v712, %v1069
    %v1226 = vmul.f32 %v713, %v1069
    %v1227 = vmul.f32 %v714, %v1069
    %v1228 = vmul.f32 %v715, %v1069
    %v1229 = vmul.f32 %v716, %v1069
    %v1230 = vmul.f32 %v717, %v1069
    %v1231 = vmul.f32 %v718, %v1069
    %v1232 = vmul.f32 %v719, %v1069
    %v1233 = vmul.f32 %v720, %v1069
    %v1234 = vmul.f32 %v721, %v1069
    %v1235 = vmul.f32 %v722, %v1069
    %v1236 = vmul.f32 %v723, %v1069
    %v1237 = vmul.f32 %v724, %v1069
    %v1238 = vmul.f32 %v725, %v1069
    %v1239 = vmul.f32 %v726, %v1069
    %v1240 = vmul.f32 %v727, %v1069
    %v1241 = vmul.f32 %v728, %v1069
    %v1242 = vmul.f32 %v729, %v1069
    %v1243 = vmul.f32 %v730, %v1069
    %v1244 = vmul.f32 %v731, %v1069
    %v1245 = vmul.f32 %v732, %v1069
    %v1246 = vmul.f32 %v733, %v1069
    %v1247 = vmul.f32 %v734, %v1069
    %v1248 = vmul.f32 %v735, %v1069
    %v1249 = vmul.f32 %v736, %v1069
    %v1250 = vmul.f32 %v737, %v1069
    %v1251 = vmul.f32 %v738, %v1069
    %v1252 = vmul.f32 %v739, %v1069
    %v1253 = vmul.f32 %v740, %v1069
    %v1254 = vmul.f32 %v741, %v1069
    %v1255 = vmul.f32 %v742, %v1069
    %v1256 = vmul.f32 %v743, %v1069
    %v1257 = vmul.f32 %v744, %v1069
    %v1258 = vmul.f32 %v745, %v1069
    %v1259 = vmul.f32 %v746, %v1069
    %v1260 = vmul.f32 %v747, %v1069
    %v1261 = vmul.f32 %v748, %v1069
    %v1262 = vmul.f32 %v749, %v1069
    %v1263 = vmul.f32 %v750, %v1069
    %v1264 = vmul.f32 %v751, %v1069
    %v1265 = vmul.f32 %v752, %v1069
    %v1266 = vmul.f32 %v753, %v1069
    %v1267 = vmul.f32 %v754, %v1069
    %v1268 = vmul.f32 %v755, %v1069
    %v1269 = vmul.f32 %v756, %v1069
    %v1270 = vmul.f32 %v757, %v1069
    %v1271 = vmul.f32 %v758, %v1069
    %v1272 = vmul.f32 %v759, %v1069
    %v1273 = vmul.f32 %v760, %v1069
    %v1274 = vmul.f32 %v761, %v1069
    %v1275 = vmul.f32 %v762, %v1069
    %v1276 = vmul.f32 %v763, %v1069
    %v1277 = vmul.f32 %v764, %v1069
    %v1278 = vmul.f32 %v765, %v1069
    %v1279 = vmul.f32 %v766, %v1069
    %v1280 = vmul.f32 %v767, %v1069
    %v1281 = vmul.f32 %v768, %v1069
    %v1282 = vmul.f32 %v769, %v1069
    %v1283 = vmul.f32 %v770, %v1069
    %v1284 = vmul.f32 %v771, %v1069
    %v1285 = vmul.f32 %v772, %v1069
    %v1286 = vmul.f32 %v773, %v1069
    %v1287 = vmul.f32 %v774, %v1069
    %v1288 = vmul.f32 %v775, %v1069
    %v1289 = vmul.f32 %v776, %v1069
    %v1290 = vmul.f32 %v777, %v1069
    %v1291 = vmul.f32 %v778, %v1069
    %v1292 = vmul.f32 %v779, %v1069
    %v1293 = vmul.f32 %v780, %v1069
    %v1294 = vmul.f32 %v781, %v1069
    %v1295 = vmul.f32 %v782, %v1069
    %v1296 = vmul.f32 %v783, %v1069
    %v1297 = vmul.f32 %v784, %v1069
    %v1298 = vmul.f32 %v785, %v1069
    %v1299 = vmul.f32 %v786, %v1069
    %v1300 = vmul.f32 %v787, %v1069
    %v1301 = vmul.f32 %v788, %v1069
    %v1302 = vmul.f32 %v789, %v1069
    %v1303 = vmul.f32 %v790, %v1069
    %v1304 = vmul.f32 %v791, %v1069
    %v1305 = vmul.f32 %v792, %v1069
    %v1306 = vmul.f32 %v793, %v1069
    %v1307 = vmul.f32 %v794, %v1069
    %v1308 = vmul.f32 %v795, %v1069
    %v1309 = vmul.f32 %v796, %v1069
    %v1310 = vmul.f32 %v797, %v1069
    %v1311 = vmul.f32 %v798, %v1069
    %v1312 = vmul.f32 %v799, %v1069
    %v1313 = vmul.f32 %v800, %v1069
    %v1314 = vmul.f32 %v801, %v1069
    %v1315 = vmul.f32 %v802, %v1069
    %v1316 = vmul.f32 %v803, %v1069
    %v1317 = vmul.f32 %v804, %v1069
    %v1318 = vmul.f32 %v805, %v1069
    %v1319 = vmul.f32 %v806, %v1069
    %v1320 = vmul.f32 %v807, %v1069
    %v1321 = vmul.f32 %v808, %v1069
    %v1322 = vmul.f32 %v809, %v1069
    %v1323 = vmul.f32 %v810, %v1069
    %v1324 = vmul.f32 %v811, %v1069
    %v1325 = vmul.f32 %v812, %v1069
    %v1326 = vmul.f32 %v813, %v1069
    %v1327 = vmul.f32 %v814, %v1069
    %v1328 = vmul.f32 %v815, %v1069
    %v1329 = vmul.f32 %v816, %v1069
    %v1330 = vmul.f32 %v817, %v1069
    %v1331 = vmul.f32 %v818, %v1069
    %v1332 = vmul.f32 %v819, %v1069
    %v1333 = vmul.f32 %v820, %v1069
    %v1334 = vmul.f32 %v821, %v1069
    %v1335 = vmul.f32 %v822, %v1069
    %v1336 = vmul.f32 %v823, %v1069
    %v1337 = vmul.f32 %v824, %v1069
    %v1338 = vmul.f32 %v825, %v1069
    %v1339 = vmul.f32 %v826, %v1069
    %v1340 = vmul.f32 %v827, %v1069
    %v1341 = vmul.f32 %v828, %v1069
    %v1342 = vmul.f32 %v829, %v1069
    %v1343 = vmul.f32 %v830, %v1069
    %v1344 = vmul.f32 %v831, %v1069
    %v1345 = vmul.f32 %v832, %v1069
    %v1346 = vmul.f32 %v833, %v1069
    %v1347 = vmul.f32 %v834, %v1069
    %v1348 = vmul.f32 %v835, %v1069
    %v1349 = vmul.f32 %v836, %v1069
    %v1350 = vmul.f32 %v837, %v1069
    %v1351 = vmul.f32 %v838, %v1069
    %v1352 = vmul.f32 %v839, %v1069
    %v1353 = vmul.f32 %v840, %v1069
    %v1354 = vmul.f32 %v841, %v1069
    %v1355 = vmul.f32 %v842, %v1069
    %v1356 = vmul.f32 %v843, %v1069
    %v1357 = vmul.f32 %v844, %v1069
    %v1358 = vmul.f32 %v845, %v1069
    %v1359 = vmul.f32 %v846, %v1069
    %v1360 = vmul.f32 %v847, %v1069
    %v1361 = vmul.f32 %v848, %v1069
    %v1362 = vmul.f32 %v849, %v1069
    %v1363 = vmul.f32 %v850, %v1069
    %v1364 = vmul.f32 %v851, %v1069
    %v1365 = vmul.f32 %v852, %v1069
    %v1366 = vmul.f32 %v853, %v1069
    %v1367 = vmul.f32 %v854, %v1069
    %v1368 = vmul.f32 %v855, %v1069
    %v1369 = vmul.f32 %v856, %v1069
    %v1370 = vmul.f32 %v857, %v1069
    %v1371 = vmul.f32 %v858, %v1069
    %v1372 = vmul.f32 %v859, %v1069
    %v1373 = vmul.f32 %v860, %v1069
    %v1374 = vmul.f32 %v861, %v1069
    %v1375 = vmul.f32 %v862, %v1069
    %v1376 = vmul.f32 %v863, %v1069
    %v1377 = vmul.f32 %v864, %v1069
    %v1378 = vmul.f32 %v865, %v1069
    %v1379 = vmul.f32 %v866, %v1069
    %v1380 = vmul.f32 %v867, %v1069
    %v1381 = vmul.f32 %v868, %v1069
    %v1382 = vmul.f32 %v869, %v1069
    %v1383 = vmul.f32 %v870, %v1069
    %v1384 = vmul.f32 %v871, %v1069
    %v1385 = vmul.f32 %v872, %v1069
    %v1386 = vmul.f32 %v873, %v1069
    %v1387 = vmul.f32 %v874, %v1069
    %v1388 = vmul.f32 %v875, %v1069
    %v1389 = vmul.f32 %v876, %v1069
    %v1390 = vmul.f32 %v877, %v1069
    %v1391 = vmul.f32 %v878, %v1069
    %v1392 = vmul.f32 %v879, %v1069
    %v1393 = vmul.f32 %v880, %v1069
    %v1394 = vmul.f32 %v881, %v1069
    %v1395 = vmul.f32 %v882, %v1069
    %v1396 = vmul.f32 %v883, %v1069
    %v1397 = vmul.f32 %v884, %v1069
    %v1398 = vmul.f32 %v885, %v1069
    %v1399 = vmul.f32 %v886, %v1069
    %v1400 = vmul.f32 %v887, %v1069
    %v1401 = vmul.f32 %v888, %v1069
    %v1402 = vmul.f32 %v889, %v1069
    %v1403 = vmul.f32 %v890, %v1069
    %v1404 = vmul.f32 %v891, %v1069
    %v1405 = vmul.f32 %v892, %v1069
    %v1406 = vmul.f32 %v893, %v1069
    %v1407 = vmul.f32 %v894, %v1069
    %v1408 = vmul.f32 %v895, %v1069
    %v1409 = vmul.f32 %v896, %v1069
    %v1410 = vmul.f32 %v897, %v1069
    %v1411 = vmul.f32 %v898, %v1069
    %v1412 = vmul.f32 %v899, %v1069
    %v1413 = vmul.f32 %v900, %v1069
    %v1414 = vmul.f32 %v901, %v1069
    %v1415 = vmul.f32 %v902, %v1069
    %v1416 = vmul.f32 %v903, %v1069
    %v1417 = vmul.f32 %v904, %v1069
    %v1418 = vmul.f32 %v905, %v1069
    %v1419 = vmul.f32 %v906, %v1069
    %v1420 = vmul.f32 %v907, %v1069
    %v1421 = vmul.f32 %v908, %v1069
    %v1422 = vmul.f32 %v909, %v1069
    %v1423 = vmul.f32 %v910, %v1069
    %v1424 = vmul.f32 %v911, %v1069
    %v1425 = vmul.f32 %v912, %v1069
    %v1426 = vmul.f32 %v913, %v1069
    %v1427 = vmul.f32 %v914, %v1069
    %v1428 = vmul.f32 %v915, %v1069
    %v1429 = vmul.f32 %v916, %v1069
    %v1430 = vmul.f32 %v917, %v1069
    %v1431 = vmul.f32 %v918, %v1069
    %v1432 = vmul.f32 %v919, %v1069
    %v1433 = vmul.f32 %v920, %v1069
    %v1434 = vmul.f32 %v921, %v1069
    %v1435 = vmul.f32 %v922, %v1069
    %v1436 = vmul.f32 %v923, %v1069
    %v1437 = vmul.f32 %v924, %v1069
    %v1438 = vmul.f32 %v925, %v1069
    %v1439 = vmul.f32 %v926, %v1069
    %v1440 = vmul.f32 %v927, %v1069
    %v1441 = vmul.f32 %v928, %v1069
    %v1442 = vmul.f32 %v929, %v1069
    %v1443 = vmul.f32 %v930, %v1069
    %v1444 = vmul.f32 %v931, %v1069
    %v1445 = vmul.f32 %v932, %v1069
    %v1446 = vmul.f32 %v933, %v1069
    %v1447 = vmul.f32 %v934, %v1069
    %v1448 = vmul.f32 %v935, %v1069
    %v1449 = vmul.f32 %v936, %v1069
    %v1450 = vmul.f32 %v937, %v1069
    %v1451 = vmul.f32 %v938, %v1069
    %v1452 = vmul.f32 %v939, %v1069
    %v1453 = vmul.f32 %v940, %v1069
    %v1454 = vmul.f32 %v941, %v1069
    %v1455 = vmul.f32 %v942, %v1069
    %v1456 = vmul.f32 %v943, %v1069
    %v1457 = vmul.f32 %v944, %v1069
    %v1458 = vmul.f32 %v945, %v1069
    %v1459 = vmul.f32 %v946, %v1069
    %v1460 = vmul.f32 %v947, %v1069
    %v1461 = vmul.f32 %v948, %v1069
    %v1462 = vmul.f32 %v949, %v1069
    %v1463 = vmul.f32 %v950, %v1069
    %v1464 = vmul.f32 %v951, %v1069
    %v1465 = vmul.f32 %v952, %v1069
    %v1466 = vmul.f32 %v953, %v1069
    %v1467 = vmul.f32 %v954, %v1069
    %v1468 = vmul.f32 %v955, %v1069
    %v1469 = vmul.f32 %v956, %v1069
    %v1470 = vmul.f32 %v957, %v1069
    %v1471 = vmul.f32 %v958, %v1069
    %v1472 = vmul.f32 %v959, %v1069
    %v1473 = vmul.f32 %v960, %v1069
    %v1474 = vmul.f32 %v961, %v1069
    %v1475 = vmul.f32 %v962, %v1069
    %v1476 = vmul.f32 %v963, %v1069
    %v1477 = vmul.f32 %v964, %v1069
    %v1478 = vmul.f32 %v965, %v1069
    %v1479 = vmul.f32 %v966, %v1069
    %v1480 = vmul.f32 %v967, %v1069
    %v1481 = vmul.f32 %v968, %v1069
    %v1482 = vmul.f32 %v969, %v1069
    %v1483 = vmul.f32 %v970, %v1069
    %v1484 = vmul.f32 %v971, %v1069
    %v1485 = vmul.f32 %v972, %v1069
    %v1486 = vmul.f32 %v973, %v1069
    %v1487 = vmul.f32 %v974, %v1069
    %v1488 = vmul.f32 %v975, %v1069
    %v1489 = vmul.f32 %v976, %v1069
    %v1490 = vmul.f32 %v977, %v1069
    %v1491 = vmul.f32 %v978, %v1069
    %v1492 = vmul.f32 %v979, %v1069
    %v1493 = vmul.f32 %v980, %v1069
    %v1494 = vmul.f32 %v981, %v1069
    %v1495 = vmul.f32 %v982, %v1069
    %v1496 = vmul.f32 %v983, %v1069
    %v1497 = vmul.f32 %v984, %v1069
    %v1498 = vmul.f32 %v985, %v1069
    %v1499 = vmul.f32 %v986, %v1069
    %v1500 = vmul.f32 %v987, %v1069
    %v1501 = vmul.f32 %v988, %v1069
    %v1502 = vmul.f32 %v989, %v1069
    %v1503 = vmul.f32 %v990, %v1069
    %v1504 = vmul.f32 %v991, %v1069
    %v1505 = vmul.f32 %v992, %v1069
    %v1506 = vmul.f32 %v993, %v1069
    %v1507 = vmul.f32 %v994, %v1069
    %v1508 = vmul.f32 %v995, %v1069
    %v1509 = vmul.f32 %v996, %v1069
    %v1510 = vmul.f32 %v997, %v1069
    %v1511 = vmul.f32 %v998, %v1069
    %v1512 = vmul.f32 %v999, %v1069
    %v1513 = vmul.f32 %v1000, %v1069
    %v1514 = vmul.f32 %v1001, %v1069
    %v1515 = vmul.f32 %v1002, %v1069
    %v1516 = vmul.f32 %v1003, %v1069
    %v1517 = vmul.f32 %v1004, %v1069
    %v1518 = vmul.f32 %v1005, %v1069
    %v1519 = vmul.f32 %v1006, %v1069
    %v1520 = vmul.f32 %v1007, %v1069
    %v1521 = vmul.f32 %v1008, %v1069
    %v1522 = vmul.f32 %v1009, %v1069
    %v1523 = vmul.f32 %v1010, %v1069
    %v1524 = vmul.f32 %v1011, %v1069
    %v1525 = vmul.f32 %v1012, %v1069
    %v1526 = vmul.f32 %v1013, %v1069
    %v1527 = vmul.f32 %v1014, %v1069
    %v1528 = vmul.f32 %v1015, %v1069
    %v1529 = vmul.f32 %v1016, %v1069
    %v1530 = vmul.f32 %v1017, %v1069
    %v1531 = vmul.f32 %v1018, %v1069
    %v1532 = vmul.f32 %v1019, %v1069
    %v1533 = vmul.f32 %v1020, %v1069
    %v1534 = vmul.f32 %v1021, %v1069
    %v1535 = vmul.f32 %v1022, %v1069
    %v1536 = vmul.f32 %v1023, %v1069
    %v1537 = vmul.f32 %v1024, %v1069
    %v1538 = vmul.f32 %v1025, %v1069
    %v1539 = vmul.f32 %v1026, %v1069
    %v1540 = vmul.f32 %v1027, %v1069
    %v1541 = vmul.f32 %v1028, %v1069
    %v1542 = vmul.f32 %v1029, %v1069
    %v1543 = vmul.f32 %v1030, %v1069
    %v1544 = vmul.f32 %v1031, %v1069
    %v1545 = vmul.f32 %v1032, %v1069
    %v1546 = vmul.f32 %v1033, %v1069
    %v1547 = vmul.f32 %v1034, %v1069
    %v1548 = vmul.f32 %v1035, %v1069
    %v1549 = vmul.f32 %v1036, %v1069
    %v1550 = vmul.f32 %v1037, %v1069
    %v1551 = vmul.f32 %v1038, %v1069
    %v1552 = vmul.f32 %v1039, %v1069
    %v1553 = vmul.f32 %v1040, %v1069
    %v1554 = vmul.f32 %v1041, %v1069
    %v1555 = vmul.f32 %v1042, %v1069
    %v1556 = vmul.f32 %v1043, %v1069
    %v1557 = vmul.f32 %v1044, %v1069
    %v1558 = vmul.f32 %v1045, %v1069
    %v1559 = vmul.f32 %v1046, %v1069
    %v1560 = vmul.f32 %v1047, %v1069
    %v1561 = vmul.f32 %v1048, %v1069
    %v1562 = vmul.f32 %v1049, %v1069
    %v1563 = vmul.f32 %v1050, %v1069
    %v1564 = vmul.f32 %v1051, %v1069
    %v1565 = vmul.f32 %v1052, %v1069
    %v1566 = vmul.f32 %v1053, %v1069
    %v1567 = vmul.f32 %v1054, %v1069
    %v1568 = vmul.f32 %v1055, %v1069
    %v1569 = vmul.f32 %v1056, %v1069
    %v1570 = vmul.f32 %v1057, %v1069
    %v1571 = vmul.f32 %v1058, %v1069
    %v1572 = vmul.f32 %v1059, %v1069
    %v1573 = vmul.f32 %v1060, %v1069
    %v1574 = vmul.f32 %v1061, %v1069
    %v1575 = vmul.f32 %v1062, %v1069
    %v1576 = vmul.f32 %v1063, %v1069
    %v1577 = vmul.f32 %v1064, %v1069
    %v1578 = vmul.f32 %v1065, %v1069
    %v1579 = vmul.f32 %v1066, %v1069
    %v1580 = vmul.f32 %v1067, %v1069
    %v1581 = vmul.f32 %v1068, %v1069
    %v1582 = vadd.f32 %v45, %v1070
    %v1583 = vadd.f32 %v46, %v1071
    %v1584 = vadd.f32 %v47, %v1072
    %v1585 = vadd.f32 %v48, %v1073
    %v1586 = vadd.f32 %v49, %v1074
    %v1587 = vadd.f32 %v50, %v1075
    %v1588 = vadd.f32 %v51, %v1076
    %v1589 = vadd.f32 %v52, %v1077
    %v1590 = vadd.f32 %v53, %v1078
    %v1591 = vadd.f32 %v54, %v1079
    %v1592 = vadd.f32 %v55, %v1080
    %v1593 = vadd.f32 %v56, %v1081
    %v1594 = vadd.f32 %v57, %v1082
    %v1595 = vadd.f32 %v58, %v1083
    %v1596 = vadd.f32 %v59, %v1084
    %v1597 = vadd.f32 %v60, %v1085
    %v1598 = vadd.f32 %v61, %v1086
    %v1599 = vadd.f32 %v62, %v1087
    %v1600 = vadd.f32 %v63, %v1088
    %v1601 = vadd.f32 %v64, %v1089
    %v1602 = vadd.f32 %v65, %v1090
    %v1603 = vadd.f32 %v66, %v1091
    %v1604 = vadd.f32 %v67, %v1092
    %v1605 = vadd.f32 %v68, %v1093
    %v1606 = vadd.f32 %v69, %v1094
    %v1607 = vadd.f32 %v70, %v1095
    %v1608 = vadd.f32 %v71, %v1096
    %v1609 = vadd.f32 %v72, %v1097
    %v1610 = vadd.f32 %v73, %v1098
    %v1611 = vadd.f32 %v74, %v1099
    %v1612 = vadd.f32 %v75, %v1100
    %v1613 = vadd.f32 %v76, %v1101
    %v1614 = vadd.f32 %v77, %v1102
    %v1615 = vadd.f32 %v78, %v1103
    %v1616 = vadd.f32 %v79, %v1104
    %v1617 = vadd.f32 %v80, %v1105
    %v1618 = vadd.f32 %v81, %v1106
    %v1619 = vadd.f32 %v82, %v1107
    %v1620 = vadd.f32 %v83, %v1108
    %v1621 = vadd.f32 %v84, %v1109
    %v1622 = vadd.f32 %v85, %v1110
    %v1623 = vadd.f32 %v86, %v1111
    %v1624 = vadd.f32 %v87, %v1112
    %v1625 = vadd.f32 %v88, %v1113
    %v1626 = vadd.f32 %v89, %v1114
    %v1627 = vadd.f32 %v90, %v1115
    %v1628 = vadd.f32 %v91, %v1116
    %v1629 = vadd.f32 %v92, %v1117
    %v1630 = vadd.f32 %v93, %v1118
    %v1631 = vadd.f32 %v94, %v1119
    %v1632 = vadd.f32 %v95, %v1120
    %v1633 = vadd.f32 %v96, %v1121
    %v1634 = vadd.f32 %v97, %v1122
    %v1635 = vadd.f32 %v98, %v1123
    %v1636 = vadd.f32 %v99, %v1124
    %v1637 = vadd.f32 %v100, %v1125
    %v1638 = vadd.f32 %v101, %v1126
    %v1639 = vadd.f32 %v102, %v1127
    %v1640 = vadd.f32 %v103, %v1128
    %v1641 = vadd.f32 %v104, %v1129
    %v1642 = vadd.f32 %v105, %v1130
    %v1643 = vadd.f32 %v106, %v1131
    %v1644 = vadd.f32 %v107, %v1132
    %v1645 = vadd.f32 %v108, %v1133
    %v1646 = vadd.f32 %v109, %v1134
    %v1647 = vadd.f32 %v110, %v1135
    %v1648 = vadd.f32 %v111, %v1136
    %v1649 = vadd.f32 %v112, %v1137
    %v1650 = vadd.f32 %v113, %v1138
    %v1651 = vadd.f32 %v114, %v1139
    %v1652 = vadd.f32 %v115, %v1140
    %v1653 = vadd.f32 %v116, %v1141
    %v1654 = vadd.f32 %v117, %v1142
    %v1655 = vadd.f32 %v118, %v1143
    %v1656 = vadd.f32 %v119, %v1144
    %v1657 = vadd.f32 %v120, %v1145
    %v1658 = vadd.f32 %v121, %v1146
    %v1659 = vadd.f32 %v122, %v1147
    %v1660 = vadd.f32 %v123, %v1148
    %v1661 = vadd.f32 %v124, %v1149
    %v1662 = vadd.f32 %v125, %v1150
    %v1663 = vadd.f32 %v126, %v1151
    %v1664 = vadd.f32 %v127, %v1152
    %v1665 = vadd.f32 %v128, %v1153
    %v1666 = vadd.f32 %v129, %v1154
    %v1667 = vadd.f32 %v130, %v1155
    %v1668 = vadd.f32 %v131, %v1156
    %v1669 = vadd.f32 %v132, %v1157
    %v1670 = vadd.f32 %v133, %v1158
    %v1671 = vadd.f32 %v134, %v1159
    %v1672 = vadd.f32 %v135, %v1160
    %v1673 = vadd.f32 %v136, %v1161
    %v1674 = vadd.f32 %v137, %v1162
    %v1675 = vadd.f32 %v138, %v1163
    %v1676 = vadd.f32 %v139, %v1164
    %v1677 = vadd.f32 %v140, %v1165
    %v1678 = vadd.f32 %v141, %v1166
    %v1679 = vadd.f32 %v142, %v1167
    %v1680 = vadd.f32 %v143, %v1168
    %v1681 = vadd.f32 %v144, %v1169
    %v1682 = vadd.f32 %v145, %v1170
    %v1683 = vadd.f32 %v146, %v1171
    %v1684 = vadd.f32 %v147, %v1172
    %v1685 = vadd.f32 %v148, %v1173
    %v1686 = vadd.f32 %v149, %v1174
    %v1687 = vadd.f32 %v150, %v1175
    %v1688 = vadd.f32 %v151, %v1176
    %v1689 = vadd.f32 %v152, %v1177
    %v1690 = vadd.f32 %v153, %v1178
    %v1691 = vadd.f32 %v154, %v1179
    %v1692 = vadd.f32 %v155, %v1180
    %v1693 = vadd.f32 %v156, %v1181
    %v1694 = vadd.f32 %v157, %v1182
    %v1695 = vadd.f32 %v158, %v1183
    %v1696 = vadd.f32 %v159, %v1184
    %v1697 = vadd.f32 %v160, %v1185
    %v1698 = vadd.f32 %v161, %v1186
    %v1699 = vadd.f32 %v162, %v1187
    %v1700 = vadd.f32 %v163, %v1188
    %v1701 = vadd.f32 %v164, %v1189
    %v1702 = vadd.f32 %v165, %v1190
    %v1703 = vadd.f32 %v166, %v1191
    %v1704 = vadd.f32 %v167, %v1192
    %v1705 = vadd.f32 %v168, %v1193
    %v1706 = vadd.f32 %v169, %v1194
    %v1707 = vadd.f32 %v170, %v1195
    %v1708 = vadd.f32 %v171, %v1196
    %v1709 = vadd.f32 %v172, %v1197
    %v1710 = vadd.f32 %v173, %v1198
    %v1711 = vadd.f32 %v174, %v1199
    %v1712 = vadd.f32 %v175, %v1200
    %v1713 = vadd.f32 %v176, %v1201
    %v1714 = vadd.f32 %v177, %v1202
    %v1715 = vadd.f32 %v178, %v1203
    %v1716 = vadd.f32 %v179, %v1204
    %v1717 = vadd.f32 %v180, %v1205
    %v1718 = vadd.f32 %v181, %v1206
    %v1719 = vadd.f32 %v182, %v1207
    %v1720 = vadd.f32 %v183, %v1208
    %v1721 = vadd.f32 %v184, %v1209
    %v1722 = vadd.f32 %v185, %v1210
    %v1723 = vadd.f32 %v186, %v1211
    %v1724 = vadd.f32 %v187, %v1212
    %v1725 = vadd.f32 %v188, %v1213
    %v1726 = vadd.f32 %v189, %v1214
    %v1727 = vadd.f32 %v190, %v1215
    %v1728 = vadd.f32 %v191, %v1216
    %v1729 = vadd.f32 %v192, %v1217
    %v1730 = vadd.f32 %v193, %v1218
    %v1731 = vadd.f32 %v194, %v1219
    %v1732 = vadd.f32 %v195, %v1220
    %v1733 = vadd.f32 %v196, %v1221
    %v1734 = vadd.f32 %v197, %v1222
    %v1735 = vadd.f32 %v198, %v1223
    %v1736 = vadd.f32 %v199, %v1224
    %v1737 = vadd.f32 %v200, %v1225
    %v1738 = vadd.f32 %v201, %v1226
    %v1739 = vadd.f32 %v202, %v1227
    %v1740 = vadd.f32 %v203, %v1228
    %v1741 = vadd.f32 %v204, %v1229
    %v1742 = vadd.f32 %v205, %v1230
    %v1743 = vadd.f32 %v206, %v1231
    %v1744 = vadd.f32 %v207, %v1232
    %v1745 = vadd.f32 %v208, %v1233
    %v1746 = vadd.f32 %v209, %v1234
    %v1747 = vadd.f32 %v210, %v1235
    %v1748 = vadd.f32 %v211, %v1236
    %v1749 = vadd.f32 %v212, %v1237
    %v1750 = vadd.f32 %v213, %v1238
    %v1751 = vadd.f32 %v214, %v1239
    %v1752 = vadd.f32 %v215, %v1240
    %v1753 = vadd.f32 %v216, %v1241
    %v1754 = vadd.f32 %v217, %v1242
    %v1755 = vadd.f32 %v218, %v1243
    %v1756 = vadd.f32 %v219, %v1244
    %v1757 = vadd.f32 %v220, %v1245
    %v1758 = vadd.f32 %v221, %v1246
    %v1759 = vadd.f32 %v222, %v1247
    %v1760 = vadd.f32 %v223, %v1248
    %v1761 = vadd.f32 %v224, %v1249
    %v1762 = vadd.f32 %v225, %v1250
    %v1763 = vadd.f32 %v226, %v1251
    %v1764 = vadd.f32 %v227, %v1252
    %v1765 = vadd.f32 %v228, %v1253
    %v1766 = vadd.f32 %v229, %v1254
    %v1767 = vadd.f32 %v230, %v1255
    %v1768 = vadd.f32 %v231, %v1256
    %v1769 = vadd.f32 %v232, %v1257
    %v1770 = vadd.f32 %v233, %v1258
    %v1771 = vadd.f32 %v234, %v1259
    %v1772 = vadd.f32 %v235, %v1260
    %v1773 = vadd.f32 %v236, %v1261
    %v1774 = vadd.f32 %v237, %v1262
    %v1775 = vadd.f32 %v238, %v1263
    %v1776 = vadd.f32 %v239, %v1264
    %v1777 = vadd.f32 %v240, %v1265
    %v1778 = vadd.f32 %v241, %v1266
    %v1779 = vadd.f32 %v242, %v1267
    %v1780 = vadd.f32 %v243, %v1268
    %v1781 = vadd.f32 %v244, %v1269
    %v1782 = vadd.f32 %v245, %v1270
    %v1783 = vadd.f32 %v246, %v1271
    %v1784 = vadd.f32 %v247, %v1272
    %v1785 = vadd.f32 %v248, %v1273
    %v1786 = vadd.f32 %v249, %v1274
    %v1787 = vadd.f32 %v250, %v1275
    %v1788 = vadd.f32 %v251, %v1276
    %v1789 = vadd.f32 %v252, %v1277
    %v1790 = vadd.f32 %v253, %v1278
    %v1791 = vadd.f32 %v254, %v1279
    %v1792 = vadd.f32 %v255, %v1280
    %v1793 = vadd.f32 %v256, %v1281
    %v1794 = vadd.f32 %v257, %v1282
    %v1795 = vadd.f32 %v258, %v1283
    %v1796 = vadd.f32 %v259, %v1284
    %v1797 = vadd.f32 %v260, %v1285
    %v1798 = vadd.f32 %v261, %v1286
    %v1799 = vadd.f32 %v262, %v1287
    %v1800 = vadd.f32 %v263, %v1288
    %v1801 = vadd.f32 %v264, %v1289
    %v1802 = vadd.f32 %v265, %v1290
    %v1803 = vadd.f32 %v266, %v1291
    %v1804 = vadd.f32 %v267, %v1292
    %v1805 = vadd.f32 %v268, %v1293
    %v1806 = vadd.f32 %v269, %v1294
    %v1807 = vadd.f32 %v270, %v1295
    %v1808 = vadd.f32 %v271, %v1296
    %v1809 = vadd.f32 %v272, %v1297
    %v1810 = vadd.f32 %v273, %v1298
    %v1811 = vadd.f32 %v274, %v1299
    %v1812 = vadd.f32 %v275, %v1300
    %v1813 = vadd.f32 %v276, %v1301
    %v1814 = vadd.f32 %v277, %v1302
    %v1815 = vadd.f32 %v278, %v1303
    %v1816 = vadd.f32 %v279, %v1304
    %v1817 = vadd.f32 %v280, %v1305
    %v1818 = vadd.f32 %v281, %v1306
    %v1819 = vadd.f32 %v282, %v1307
    %v1820 = vadd.f32 %v283, %v1308
    %v1821 = vadd.f32 %v284, %v1309
    %v1822 = vadd.f32 %v285, %v1310
    %v1823 = vadd.f32 %v286, %v1311
    %v1824 = vadd.f32 %v287, %v1312
    %v1825 = vadd.f32 %v288, %v1313
    %v1826 = vadd.f32 %v289, %v1314
    %v1827 = vadd.f32 %v290, %v1315
    %v1828 = vadd.f32 %v291, %v1316
    %v1829 = vadd.f32 %v292, %v1317
    %v1830 = vadd.f32 %v293, %v1318
    %v1831 = vadd.f32 %v294, %v1319
    %v1832 = vadd.f32 %v295, %v1320
    %v1833 = vadd.f32 %v296, %v1321
    %v1834 = vadd.f32 %v297, %v1322
    %v1835 = vadd.f32 %v298, %v1323
    %v1836 = vadd.f32 %v299, %v1324
    %v1837 = vadd.f32 %v300, %v1325
    %v1838 = vadd.f32 %v301, %v1326
    %v1839 = vadd.f32 %v302, %v1327
    %v1840 = vadd.f32 %v303, %v1328
    %v1841 = vadd.f32 %v304, %v1329
    %v1842 = vadd.f32 %v305, %v1330
    %v1843 = vadd.f32 %v306, %v1331
    %v1844 = vadd.f32 %v307, %v1332
    %v1845 = vadd.f32 %v308, %v1333
    %v1846 = vadd.f32 %v309, %v1334
    %v1847 = vadd.f32 %v310, %v1335
    %v1848 = vadd.f32 %v311, %v1336
    %v1849 = vadd.f32 %v312, %v1337
    %v1850 = vadd.f32 %v313, %v1338
    %v1851 = vadd.f32 %v314, %v1339
    %v1852 = vadd.f32 %v315, %v1340
    %v1853 = vadd.f32 %v316, %v1341
    %v1854 = vadd.f32 %v317, %v1342
    %v1855 = vadd.f32 %v318, %v1343
    %v1856 = vadd.f32 %v319, %v1344
    %v1857 = vadd.f32 %v320, %v1345
    %v1858 = vadd.f32 %v321, %v1346
    %v1859 = vadd.f32 %v322, %v1347
    %v1860 = vadd.f32 %v323, %v1348
    %v1861 = vadd.f32 %v324, %v1349
    %v1862 = vadd.f32 %v325, %v1350
    %v1863 = vadd.f32 %v326, %v1351
    %v1864 = vadd.f32 %v327, %v1352
    %v1865 = vadd.f32 %v328, %v1353
    %v1866 = vadd.f32 %v329, %v1354
    %v1867 = vadd.f32 %v330, %v1355
    %v1868 = vadd.f32 %v331, %v1356
    %v1869 = vadd.f32 %v332, %v1357
    %v1870 = vadd.f32 %v333, %v1358
    %v1871 = vadd.f32 %v334, %v1359
    %v1872 = vadd.f32 %v335, %v1360
    %v1873 = vadd.f32 %v336, %v1361
    %v1874 = vadd.f32 %v337, %v1362
    %v1875 = vadd.f32 %v338, %v1363
    %v1876 = vadd.f32 %v339, %v1364
    %v1877 = vadd.f32 %v340, %v1365
    %v1878 = vadd.f32 %v341, %v1366
    %v1879 = vadd.f32 %v342, %v1367
    %v1880 = vadd.f32 %v343, %v1368
    %v1881 = vadd.f32 %v344, %v1369
    %v1882 = vadd.f32 %v345, %v1370
    %v1883 = vadd.f32 %v346, %v1371
    %v1884 = vadd.f32 %v347, %v1372
    %v1885 = vadd.f32 %v348, %v1373
    %v1886 = vadd.f32 %v349, %v1374
    %v1887 = vadd.f32 %v350, %v1375
    %v1888 = vadd.f32 %v351, %v1376
    %v1889 = vadd.f32 %v352, %v1377
    %v1890 = vadd.f32 %v353, %v1378
    %v1891 = vadd.f32 %v354, %v1379
    %v1892 = vadd.f32 %v355, %v1380
    %v1893 = vadd.f32 %v356, %v1381
    %v1894 = vadd.f32 %v357, %v1382
    %v1895 = vadd.f32 %v358, %v1383
    %v1896 = vadd.f32 %v359, %v1384
    %v1897 = vadd.f32 %v360, %v1385
    %v1898 = vadd.f32 %v361, %v1386
    %v1899 = vadd.f32 %v362, %v1387
    %v1900 = vadd.f32 %v363, %v1388
    %v1901 = vadd.f32 %v364, %v1389
    %v1902 = vadd.f32 %v365, %v1390
    %v1903 = vadd.f32 %v366, %v1391
    %v1904 = vadd.f32 %v367, %v1392
    %v1905 = vadd.f32 %v368, %v1393
    %v1906 = vadd.f32 %v369, %v1394
    %v1907 = vadd.f32 %v370, %v1395
    %v1908 = vadd.f32 %v371, %v1396
    %v1909 = vadd.f32 %v372, %v1397
    %v1910 = vadd.f32 %v373, %v1398
    %v1911 = vadd.f32 %v374, %v1399
    %v1912 = vadd.f32 %v375, %v1400
    %v1913 = vadd.f32 %v376, %v1401
    %v1914 = vadd.f32 %v377, %v1402
    %v1915 = vadd.f32 %v378, %v1403
    %v1916 = vadd.f32 %v379, %v1404
    %v1917 = vadd.f32 %v380, %v1405
    %v1918 = vadd.f32 %v381, %v1406
    %v1919 = vadd.f32 %v382, %v1407
    %v1920 = vadd.f32 %v383, %v1408
    %v1921 = vadd.f32 %v384, %v1409
    %v1922 = vadd.f32 %v385, %v1410
    %v1923 = vadd.f32 %v386, %v1411
    %v1924 = vadd.f32 %v387, %v1412
    %v1925 = vadd.f32 %v388, %v1413
    %v1926 = vadd.f32 %v389, %v1414
    %v1927 = vadd.f32 %v390, %v1415
    %v1928 = vadd.f32 %v391, %v1416
    %v1929 = vadd.f32 %v392, %v1417
    %v1930 = vadd.f32 %v393, %v1418
    %v1931 = vadd.f32 %v394, %v1419
    %v1932 = vadd.f32 %v395, %v1420
    %v1933 = vadd.f32 %v396, %v1421
    %v1934 = vadd.f32 %v397, %v1422
    %v1935 = vadd.f32 %v398, %v1423
    %v1936 = vadd.f32 %v399, %v1424
    %v1937 = vadd.f32 %v400, %v1425
    %v1938 = vadd.f32 %v401, %v1426
    %v1939 = vadd.f32 %v402, %v1427
    %v1940 = vadd.f32 %v403, %v1428
    %v1941 = vadd.f32 %v404, %v1429
    %v1942 = vadd.f32 %v405, %v1430
    %v1943 = vadd.f32 %v406, %v1431
    %v1944 = vadd.f32 %v407, %v1432
    %v1945 = vadd.f32 %v408, %v1433
    %v1946 = vadd.f32 %v409, %v1434
    %v1947 = vadd.f32 %v410, %v1435
    %v1948 = vadd.f32 %v411, %v1436
    %v1949 = vadd.f32 %v412, %v1437
    %v1950 = vadd.f32 %v413, %v1438
    %v1951 = vadd.f32 %v414, %v1439
    %v1952 = vadd.f32 %v415, %v1440
    %v1953 = vadd.f32 %v416, %v1441
    %v1954 = vadd.f32 %v417, %v1442
    %v1955 = vadd.f32 %v418, %v1443
    %v1956 = vadd.f32 %v419, %v1444
    %v1957 = vadd.f32 %v420, %v1445
    %v1958 = vadd.f32 %v421, %v1446
    %v1959 = vadd.f32 %v422, %v1447
    %v1960 = vadd.f32 %v423, %v1448
    %v1961 = vadd.f32 %v424, %v1449
    %v1962 = vadd.f32 %v425, %v1450
    %v1963 = vadd.f32 %v426, %v1451
    %v1964 = vadd.f32 %v427, %v1452
    %v1965 = vadd.f32 %v428, %v1453
    %v1966 = vadd.f32 %v429, %v1454
    %v1967 = vadd.f32 %v430, %v1455
    %v1968 = vadd.f32 %v431, %v1456
    %v1969 = vadd.f32 %v432, %v1457
    %v1970 = vadd.f32 %v433, %v1458
    %v1971 = vadd.f32 %v434, %v1459
    %v1972 = vadd.f32 %v435, %v1460
    %v1973 = vadd.f32 %v436, %v1461
    %v1974 = vadd.f32 %v437, %v1462
    %v1975 = vadd.f32 %v438, %v1463
    %v1976 = vadd.f32 %v439, %v1464
    %v1977 = vadd.f32 %v440, %v1465
    %v1978 = vadd.f32 %v441, %v1466
    %v1979 = vadd.f32 %v442, %v1467
    %v1980 = vadd.f32 %v443, %v1468
    %v1981 = vadd.f32 %v444, %v1469
    %v1982 = vadd.f32 %v445, %v1470
    %v1983 = vadd.f32 %v446, %v1471
    %v1984 = vadd.f32 %v447, %v1472
    %v1985 = vadd.f32 %v448, %v1473
    %v1986 = vadd.f32 %v449, %v1474
    %v1987 = vadd.f32 %v450, %v1475
    %v1988 = vadd.f32 %v451, %v1476
    %v1989 = vadd.f32 %v452, %v1477
    %v1990 = vadd.f32 %v453, %v1478
    %v1991 = vadd.f32 %v454, %v1479
    %v1992 = vadd.f32 %v455, %v1480
    %v1993 = vadd.f32 %v456, %v1481
    %v1994 = vadd.f32 %v457, %v1482
    %v1995 = vadd.f32 %v458, %v1483
    %v1996 = vadd.f32 %v459, %v1484
    %v1997 = vadd.f32 %v460, %v1485
    %v1998 = vadd.f32 %v461, %v1486
    %v1999 = vadd.f32 %v462, %v1487
    %v2000 = vadd.f32 %v463, %v1488
    %v2001 = vadd.f32 %v464, %v1489
    %v2002 = vadd.f32 %v465, %v1490
    %v2003 = vadd.f32 %v466, %v1491
    %v2004 = vadd.f32 %v467, %v1492
    %v2005 = vadd.f32 %v468, %v1493
    %v2006 = vadd.f32 %v469, %v1494
    %v2007 = vadd.f32 %v470, %v1495
    %v2008 = vadd.f32 %v471, %v1496
    %v2009 = vadd.f32 %v472, %v1497
    %v2010 = vadd.f32 %v473, %v1498
    %v2011 = vadd.f32 %v474, %v1499
    %v2012 = vadd.f32 %v475, %v1500
    %v2013 = vadd.f32 %v476, %v1501
    %v2014 = vadd.f32 %v477, %v1502
    %v2015 = vadd.f32 %v478, %v1503
    %v2016 = vadd.f32 %v479, %v1504
    %v2017 = vadd.f32 %v480, %v1505
    %v2018 = vadd.f32 %v481, %v1506
    %v2019 = vadd.f32 %v482, %v1507
    %v2020 = vadd.f32 %v483, %v1508
    %v2021 = vadd.f32 %v484, %v1509
    %v2022 = vadd.f32 %v485, %v1510
    %v2023 = vadd.f32 %v486, %v1511
    %v2024 = vadd.f32 %v487, %v1512
    %v2025 = vadd.f32 %v488, %v1513
    %v2026 = vadd.f32 %v489, %v1514
    %v2027 = vadd.f32 %v490, %v1515
    %v2028 = vadd.f32 %v491, %v1516
    %v2029 = vadd.f32 %v492, %v1517
    %v2030 = vadd.f32 %v493, %v1518
    %v2031 = vadd.f32 %v494, %v1519
    %v2032 = vadd.f32 %v495, %v1520
    %v2033 = vadd.f32 %v496, %v1521
    %v2034 = vadd.f32 %v497, %v1522
    %v2035 = vadd.f32 %v498, %v1523
    %v2036 = vadd.f32 %v499, %v1524
    %v2037 = vadd.f32 %v500, %v1525
    %v2038 = vadd.f32 %v501, %v1526
    %v2039 = vadd.f32 %v502, %v1527
    %v2040 = vadd.f32 %v503, %v1528
    %v2041 = vadd.f32 %v504, %v1529
    %v2042 = vadd.f32 %v505, %v1530
    %v2043 = vadd.f32 %v506, %v1531
    %v2044 = vadd.f32 %v507, %v1532
    %v2045 = vadd.f32 %v508, %v1533
    %v2046 = vadd.f32 %v509, %v1534
    %v2047 = vadd.f32 %v510, %v1535
    %v2048 = vadd.f32 %v511, %v1536
    %v2049 = vadd.f32 %v512, %v1537
    %v2050 = vadd.f32 %v513, %v1538
    %v2051 = vadd.f32 %v514, %v1539
    %v2052 = vadd.f32 %v515, %v1540
    %v2053 = vadd.f32 %v516, %v1541
    %v2054 = vadd.f32 %v517, %v1542
    %v2055 = vadd.f32 %v518, %v1543
    %v2056 = vadd.f32 %v519, %v1544
    %v2057 = vadd.f32 %v520, %v1545
    %v2058 = vadd.f32 %v521, %v1546
    %v2059 = vadd.f32 %v522, %v1547
    %v2060 = vadd.f32 %v523, %v1548
    %v2061 = vadd.f32 %v524, %v1549
    %v2062 = vadd.f32 %v525, %v1550
    %v2063 = vadd.f32 %v526, %v1551
    %v2064 = vadd.f32 %v527, %v1552
    %v2065 = vadd.f32 %v528, %v1553
    %v2066 = vadd.f32 %v529, %v1554
    %v2067 = vadd.f32 %v530, %v1555
    %v2068 = vadd.f32 %v531, %v1556
    %v2069 = vadd.f32 %v532, %v1557
    %v2070 = vadd.f32 %v533, %v1558
    %v2071 = vadd.f32 %v534, %v1559
    %v2072 = vadd.f32 %v535, %v1560
    %v2073 = vadd.f32 %v536, %v1561
    %v2074 = vadd.f32 %v537, %v1562
    %v2075 = vadd.f32 %v538, %v1563
    %v2076 = vadd.f32 %v539, %v1564
    %v2077 = vadd.f32 %v540, %v1565
    %v2078 = vadd.f32 %v541, %v1566
    %v2079 = vadd.f32 %v542, %v1567
    %v2080 = vadd.f32 %v543, %v1568
    %v2081 = vadd.f32 %v544, %v1569
    %v2082 = vadd.f32 %v545, %v1570
    %v2083 = vadd.f32 %v546, %v1571
    %v2084 = vadd.f32 %v547, %v1572
    %v2085 = vadd.f32 %v548, %v1573
    %v2086 = vadd.f32 %v549, %v1574
    %v2087 = vadd.f32 %v550, %v1575
    %v2088 = vadd.f32 %v551, %v1576
    %v2089 = vadd.f32 %v552, %v1577
    %v2090 = vadd.f32 %v553, %v1578
    %v2091 = vadd.f32 %v554, %v1579
    %v2092 = vadd.f32 %v555, %v1580
    %v2093 = vadd.f32 %v556, %v1581
    %v2094 = vmax.f32 %v1582, 0.0
    %v2095 = vmax.f32 %v1583, 0.0
    %v2096 = vmax.f32 %v1584, 0.0
    %v2097 = vmax.f32 %v1585, 0.0
    %v2098 = vmax.f32 %v1586, 0.0
    %v2099 = vmax.f32 %v1587, 0.0
    %v2100 = vmax.f32 %v1588, 0.0
    %v2101 = vmax.f32 %v1589, 0.0
    %v2102 = vmax.f32 %v1590, 0.0
    %v2103 = vmax.f32 %v1591, 0.0
    %v2104 = vmax.f32 %v1592, 0.0
    %v2105 = vmax.f32 %v1593, 0.0
    %v2106 = vmax.f32 %v1594, 0.0
    %v2107 = vmax.f32 %v1595, 0.0
    %v2108 = vmax.f32 %v1596, 0.0
    %v2109 = vmax.f32 %v1597, 0.0
    %v2110 = vmax.f32 %v1598, 0.0
    %v2111 = vmax.f32 %v1599, 0.0
    %v2112 = vmax.f32 %v1600, 0.0
    %v2113 = vmax.f32 %v1601, 0.0
    %v2114 = vmax.f32 %v1602, 0.0
    %v2115 = vmax.f32 %v1603, 0.0
    %v2116 = vmax.f32 %v1604, 0.0
    %v2117 = vmax.f32 %v1605, 0.0
    %v2118 = vmax.f32 %v1606, 0.0
    %v2119 = vmax.f32 %v1607, 0.0
    %v2120 = vmax.f32 %v1608, 0.0
    %v2121 = vmax.f32 %v1609, 0.0
    %v2122 = vmax.f32 %v1610, 0.0
    %v2123 = vmax.f32 %v1611, 0.0
    %v2124 = vmax.f32 %v1612, 0.0
    %v2125 = vmax.f32 %v1613, 0.0
    %v2126 = vmax.f32 %v1614, 0.0
    %v2127 = vmax.f32 %v1615, 0.0
    %v2128 = vmax.f32 %v1616, 0.0
    %v2129 = vmax.f32 %v1617, 0.0
    %v2130 = vmax.f32 %v1618, 0.0
    %v2131 = vmax.f32 %v1619, 0.0
    %v2132 = vmax.f32 %v1620, 0.0
    %v2133 = vmax.f32 %v1621, 0.0
    %v2134 = vmax.f32 %v1622, 0.0
    %v2135 = vmax.f32 %v1623, 0.0
    %v2136 = vmax.f32 %v1624, 0.0
    %v2137 = vmax.f32 %v1625, 0.0
    %v2138 = vmax.f32 %v1626, 0.0
    %v2139 = vmax.f32 %v1627, 0.0
    %v2140 = vmax.f32 %v1628, 0.0
    %v2141 = vmax.f32 %v1629, 0.0
    %v2142 = vmax.f32 %v1630, 0.0
    %v2143 = vmax.f32 %v1631, 0.0
    %v2144 = vmax.f32 %v1632, 0.0
    %v2145 = vmax.f32 %v1633, 0.0
    %v2146 = vmax.f32 %v1634, 0.0
    %v2147 = vmax.f32 %v1635, 0.0
    %v2148 = vmax.f32 %v1636, 0.0
    %v2149 = vmax.f32 %v1637, 0.0
    %v2150 = vmax.f32 %v1638, 0.0
    %v2151 = vmax.f32 %v1639, 0.0
    %v2152 = vmax.f32 %v1640, 0.0
    %v2153 = vmax.f32 %v1641, 0.0
    %v2154 = vmax.f32 %v1642, 0.0
    %v2155 = vmax.f32 %v1643, 0.0
    %v2156 = vmax.f32 %v1644, 0.0
    %v2157 = vmax.f32 %v1645, 0.0
    %v2158 = vmax.f32 %v1646, 0.0
    %v2159 = vmax.f32 %v1647, 0.0
    %v2160 = vmax.f32 %v1648, 0.0
    %v2161 = vmax.f32 %v1649, 0.0
    %v2162 = vmax.f32 %v1650, 0.0
    %v2163 = vmax.f32 %v1651, 0.0
    %v2164 = vmax.f32 %v1652, 0.0
    %v2165 = vmax.f32 %v1653, 0.0
    %v2166 = vmax.f32 %v1654, 0.0
    %v2167 = vmax.f32 %v1655, 0.0
    %v2168 = vmax.f32 %v1656, 0.0
    %v2169 = vmax.f32 %v1657, 0.0
    %v2170 = vmax.f32 %v1658, 0.0
    %v2171 = vmax.f32 %v1659, 0.0
    %v2172 = vmax.f32 %v1660, 0.0
    %v2173 = vmax.f32 %v1661, 0.0
    %v2174 = vmax.f32 %v1662, 0.0
    %v2175 = vmax.f32 %v1663, 0.0
    %v2176 = vmax.f32 %v1664, 0.0
    %v2177 = vmax.f32 %v1665, 0.0
    %v2178 = vmax.f32 %v1666, 0.0
    %v2179 = vmax.f32 %v1667, 0.0
    %v2180 = vmax.f32 %v1668, 0.0
    %v2181 = vmax.f32 %v1669, 0.0
    %v2182 = vmax.f32 %v1670, 0.0
    %v2183 = vmax.f32 %v1671, 0.0
    %v2184 = vmax.f32 %v1672, 0.0
    %v2185 = vmax.f32 %v1673, 0.0
    %v2186 = vmax.f32 %v1674, 0.0
    %v2187 = vmax.f32 %v1675, 0.0
    %v2188 = vmax.f32 %v1676, 0.0
    %v2189 = vmax.f32 %v1677, 0.0
    %v2190 = vmax.f32 %v1678, 0.0
    %v2191 = vmax.f32 %v1679, 0.0
    %v2192 = vmax.f32 %v1680, 0.0
    %v2193 = vmax.f32 %v1681, 0.0
    %v2194 = vmax.f32 %v1682, 0.0
    %v2195 = vmax.f32 %v1683, 0.0
    %v2196 = vmax.f32 %v1684, 0.0
    %v2197 = vmax.f32 %v1685, 0.0
    %v2198 = vmax.f32 %v1686, 0.0
    %v2199 = vmax.f32 %v1687, 0.0
    %v2200 = vmax.f32 %v1688, 0.0
    %v2201 = vmax.f32 %v1689, 0.0
    %v2202 = vmax.f32 %v1690, 0.0
    %v2203 = vmax.f32 %v1691, 0.0
    %v2204 = vmax.f32 %v1692, 0.0
    %v2205 = vmax.f32 %v1693, 0.0
    %v2206 = vmax.f32 %v1694, 0.0
    %v2207 = vmax.f32 %v1695, 0.0
    %v2208 = vmax.f32 %v1696, 0.0
    %v2209 = vmax.f32 %v1697, 0.0
    %v2210 = vmax.f32 %v1698, 0.0
    %v2211 = vmax.f32 %v1699, 0.0
    %v2212 = vmax.f32 %v1700, 0.0
    %v2213 = vmax.f32 %v1701, 0.0
    %v2214 = vmax.f32 %v1702, 0.0
    %v2215 = vmax.f32 %v1703, 0.0
    %v2216 = vmax.f32 %v1704, 0.0
    %v2217 = vmax.f32 %v1705, 0.0
    %v2218 = vmax.f32 %v1706, 0.0
    %v2219 = vmax.f32 %v1707, 0.0
    %v2220 = vmax.f32 %v1708, 0.0
    %v2221 = vmax.f32 %v1709, 0.0
    %v2222 = vmax.f32 %v1710, 0.0
    %v2223 = vmax.f32 %v1711, 0.0
    %v2224 = vmax.f32 %v1712, 0.0
    %v2225 = vmax.f32 %v1713, 0.0
    %v2226 = vmax.f32 %v1714, 0.0
    %v2227 = vmax.f32 %v1715, 0.0
    %v2228 = vmax.f32 %v1716, 0.0
    %v2229 = vmax.f32 %v1717, 0.0
    %v2230 = vmax.f32 %v1718, 0.0
    %v2231 = vmax.f32 %v1719, 0.0
    %v2232 = vmax.f32 %v1720, 0.0
    %v2233 = vmax.f32 %v1721, 0.0
    %v2234 = vmax.f32 %v1722, 0.0
    %v2235 = vmax.f32 %v1723, 0.0
    %v2236 = vmax.f32 %v1724, 0.0
    %v2237 = vmax.f32 %v1725, 0.0
    %v2238 = vmax.f32 %v1726, 0.0
    %v2239 = vmax.f32 %v1727, 0.0
    %v2240 = vmax.f32 %v1728, 0.0
    %v2241 = vmax.f32 %v1729, 0.0
    %v2242 = vmax.f32 %v1730, 0.0
    %v2243 = vmax.f32 %v1731, 0.0
    %v2244 = vmax.f32 %v1732, 0.0
    %v2245 = vmax.f32 %v1733, 0.0
    %v2246 = vmax.f32 %v1734, 0.0
    %v2247 = vmax.f32 %v1735, 0.0
    %v2248 = vmax.f32 %v1736, 0.0
    %v2249 = vmax.f32 %v1737, 0.0
    %v2250 = vmax.f32 %v1738, 0.0
    %v2251 = vmax.f32 %v1739, 0.0
    %v2252 = vmax.f32 %v1740, 0.0
    %v2253 = vmax.f32 %v1741, 0.0
    %v2254 = vmax.f32 %v1742, 0.0
    %v2255 = vmax.f32 %v1743, 0.0
    %v2256 = vmax.f32 %v1744, 0.0
    %v2257 = vmax.f32 %v1745, 0.0
    %v2258 = vmax.f32 %v1746, 0.0
    %v2259 = vmax.f32 %v1747, 0.0
    %v2260 = vmax.f32 %v1748, 0.0
    %v2261 = vmax.f32 %v1749, 0.0
    %v2262 = vmax.f32 %v1750, 0.0
    %v2263 = vmax.f32 %v1751, 0.0
    %v2264 = vmax.f32 %v1752, 0.0
    %v2265 = vmax.f32 %v1753, 0.0
    %v2266 = vmax.f32 %v1754, 0.0
    %v2267 = vmax.f32 %v1755, 0.0
    %v2268 = vmax.f32 %v1756, 0.0
    %v2269 = vmax.f32 %v1757, 0.0
    %v2270 = vmax.f32 %v1758, 0.0
    %v2271 = vmax.f32 %v1759, 0.0
    %v2272 = vmax.f32 %v1760, 0.0
    %v2273 = vmax.f32 %v1761, 0.0
    %v2274 = vmax.f32 %v1762, 0.0
    %v2275 = vmax.f32 %v1763, 0.0
    %v2276 = vmax.f32 %v1764, 0.0
    %v2277 = vmax.f32 %v1765, 0.0
    %v2278 = vmax.f32 %v1766, 0.0
    %v2279 = vmax.f32 %v1767, 0.0
    %v2280 = vmax.f32 %v1768, 0.0
    %v2281 = vmax.f32 %v1769, 0.0
    %v2282 = vmax.f32 %v1770, 0.0
    %v2283 = vmax.f32 %v1771, 0.0
    %v2284 = vmax.f32 %v1772, 0.0
    %v2285 = vmax.f32 %v1773, 0.0
    %v2286 = vmax.f32 %v1774, 0.0
    %v2287 = vmax.f32 %v1775, 0.0
    %v2288 = vmax.f32 %v1776, 0.0
    %v2289 = vmax.f32 %v1777, 0.0
    %v2290 = vmax.f32 %v1778, 0.0
    %v2291 = vmax.f32 %v1779, 0.0
    %v2292 = vmax.f32 %v1780, 0.0
    %v2293 = vmax.f32 %v1781, 0.0
    %v2294 = vmax.f32 %v1782, 0.0
    %v2295 = vmax.f32 %v1783, 0.0
    %v2296 = vmax.f32 %v1784, 0.0
    %v2297 = vmax.f32 %v1785, 0.0
    %v2298 = vmax.f32 %v1786, 0.0
    %v2299 = vmax.f32 %v1787, 0.0
    %v2300 = vmax.f32 %v1788, 0.0
    %v2301 = vmax.f32 %v1789, 0.0
    %v2302 = vmax.f32 %v1790, 0.0
    %v2303 = vmax.f32 %v1791, 0.0
    %v2304 = vmax.f32 %v1792, 0.0
    %v2305 = vmax.f32 %v1793, 0.0
    %v2306 = vmax.f32 %v1794, 0.0
    %v2307 = vmax.f32 %v1795, 0.0
    %v2308 = vmax.f32 %v1796, 0.0
    %v2309 = vmax.f32 %v1797, 0.0
    %v2310 = vmax.f32 %v1798, 0.0
    %v2311 = vmax.f32 %v1799, 0.0
    %v2312 = vmax.f32 %v1800, 0.0
    %v2313 = vmax.f32 %v1801, 0.0
    %v2314 = vmax.f32 %v1802, 0.0
    %v2315 = vmax.f32 %v1803, 0.0
    %v2316 = vmax.f32 %v1804, 0.0
    %v2317 = vmax.f32 %v1805, 0.0
    %v2318 = vmax.f32 %v1806, 0.0
    %v2319 = vmax.f32 %v1807, 0.0
    %v2320 = vmax.f32 %v1808, 0.0
    %v2321 = vmax.f32 %v1809, 0.0
    %v2322 = vmax.f32 %v1810, 0.0
    %v2323 = vmax.f32 %v1811, 0.0
    %v2324 = vmax.f32 %v1812, 0.0
    %v2325 = vmax.f32 %v1813, 0.0
    %v2326 = vmax.f32 %v1814, 0.0
    %v2327 = vmax.f32 %v1815, 0.0
    %v2328 = vmax.f32 %v1816, 0.0
    %v2329 = vmax.f32 %v1817, 0.0
    %v2330 = vmax.f32 %v1818, 0.0
    %v2331 = vmax.f32 %v1819, 0.0
    %v2332 = vmax.f32 %v1820, 0.0
    %v2333 = vmax.f32 %v1821, 0.0
    %v2334 = vmax.f32 %v1822, 0.0
    %v2335 = vmax.f32 %v1823, 0.0
    %v2336 = vmax.f32 %v1824, 0.0
    %v2337 = vmax.f32 %v1825, 0.0
    %v2338 = vmax.f32 %v1826, 0.0
    %v2339 = vmax.f32 %v1827, 0.0
    %v2340 = vmax.f32 %v1828, 0.0
    %v2341 = vmax.f32 %v1829, 0.0
    %v2342 = vmax.f32 %v1830, 0.0
    %v2343 = vmax.f32 %v1831, 0.0
    %v2344 = vmax.f32 %v1832, 0.0
    %v2345 = vmax.f32 %v1833, 0.0
    %v2346 = vmax.f32 %v1834, 0.0
    %v2347 = vmax.f32 %v1835, 0.0
    %v2348 = vmax.f32 %v1836, 0.0
    %v2349 = vmax.f32 %v1837, 0.0
    %v2350 = vmax.f32 %v1838, 0.0
    %v2351 = vmax.f32 %v1839, 0.0
    %v2352 = vmax.f32 %v1840, 0.0
    %v2353 = vmax.f32 %v1841, 0.0
    %v2354 = vmax.f32 %v1842, 0.0
    %v2355 = vmax.f32 %v1843, 0.0
    %v2356 = vmax.f32 %v1844, 0.0
    %v2357 = vmax.f32 %v1845, 0.0
    %v2358 = vmax.f32 %v1846, 0.0
    %v2359 = vmax.f32 %v1847, 0.0
    %v2360 = vmax.f32 %v1848, 0.0
    %v2361 = vmax.f32 %v1849, 0.0
    %v2362 = vmax.f32 %v1850, 0.0
    %v2363 = vmax.f32 %v1851, 0.0
    %v2364 = vmax.f32 %v1852, 0.0
    %v2365 = vmax.f32 %v1853, 0.0
    %v2366 = vmax.f32 %v1854, 0.0
    %v2367 = vmax.f32 %v1855, 0.0
    %v2368 = vmax.f32 %v1856, 0.0
    %v2369 = vmax.f32 %v1857, 0.0
    %v2370 = vmax.f32 %v1858, 0.0
    %v2371 = vmax.f32 %v1859, 0.0
    %v2372 = vmax.f32 %v1860, 0.0
    %v2373 = vmax.f32 %v1861, 0.0
    %v2374 = vmax.f32 %v1862, 0.0
    %v2375 = vmax.f32 %v1863, 0.0
    %v2376 = vmax.f32 %v1864, 0.0
    %v2377 = vmax.f32 %v1865, 0.0
    %v2378 = vmax.f32 %v1866, 0.0
    %v2379 = vmax.f32 %v1867, 0.0
    %v2380 = vmax.f32 %v1868, 0.0
    %v2381 = vmax.f32 %v1869, 0.0
    %v2382 = vmax.f32 %v1870, 0.0
    %v2383 = vmax.f32 %v1871, 0.0
    %v2384 = vmax.f32 %v1872, 0.0
    %v2385 = vmax.f32 %v1873, 0.0
    %v2386 = vmax.f32 %v1874, 0.0
    %v2387 = vmax.f32 %v1875, 0.0
    %v2388 = vmax.f32 %v1876, 0.0
    %v2389 = vmax.f32 %v1877, 0.0
    %v2390 = vmax.f32 %v1878, 0.0
    %v2391 = vmax.f32 %v1879, 0.0
    %v2392 = vmax.f32 %v1880, 0.0
    %v2393 = vmax.f32 %v1881, 0.0
    %v2394 = vmax.f32 %v1882, 0.0
    %v2395 = vmax.f32 %v1883, 0.0
    %v2396 = vmax.f32 %v1884, 0.0
    %v2397 = vmax.f32 %v1885, 0.0
    %v2398 = vmax.f32 %v1886, 0.0
    %v2399 = vmax.f32 %v1887, 0.0
    %v2400 = vmax.f32 %v1888, 0.0
    %v2401 = vmax.f32 %v1889, 0.0
    %v2402 = vmax.f32 %v1890, 0.0
    %v2403 = vmax.f32 %v1891, 0.0
    %v2404 = vmax.f32 %v1892, 0.0
    %v2405 = vmax.f32 %v1893, 0.0
    %v2406 = vmax.f32 %v1894, 0.0
    %v2407 = vmax.f32 %v1895, 0.0
    %v2408 = vmax.f32 %v1896, 0.0
    %v2409 = vmax.f32 %v1897, 0.0
    %v2410 = vmax.f32 %v1898, 0.0
    %v2411 = vmax.f32 %v1899, 0.0
    %v2412 = vmax.f32 %v1900, 0.0
    %v2413 = vmax.f32 %v1901, 0.0
    %v2414 = vmax.f32 %v1902, 0.0
    %v2415 = vmax.f32 %v1903, 0.0
    %v2416 = vmax.f32 %v1904, 0.0
    %v2417 = vmax.f32 %v1905, 0.0
    %v2418 = vmax.f32 %v1906, 0.0
    %v2419 = vmax.f32 %v1907, 0.0
    %v2420 = vmax.f32 %v1908, 0.0
    %v2421 = vmax.f32 %v1909, 0.0
    %v2422 = vmax.f32 %v1910, 0.0
    %v2423 = vmax.f32 %v1911, 0.0
    %v2424 = vmax.f32 %v1912, 0.0
    %v2425 = vmax.f32 %v1913, 0.0
    %v2426 = vmax.f32 %v1914, 0.0
    %v2427 = vmax.f32 %v1915, 0.0
    %v2428 = vmax.f32 %v1916, 0.0
    %v2429 = vmax.f32 %v1917, 0.0
    %v2430 = vmax.f32 %v1918, 0.0
    %v2431 = vmax.f32 %v1919, 0.0
    %v2432 = vmax.f32 %v1920, 0.0
    %v2433 = vmax.f32 %v1921, 0.0
    %v2434 = vmax.f32 %v1922, 0.0
    %v2435 = vmax.f32 %v1923, 0.0
    %v2436 = vmax.f32 %v1924, 0.0
    %v2437 = vmax.f32 %v1925, 0.0
    %v2438 = vmax.f32 %v1926, 0.0
    %v2439 = vmax.f32 %v1927, 0.0
    %v2440 = vmax.f32 %v1928, 0.0
    %v2441 = vmax.f32 %v1929, 0.0
    %v2442 = vmax.f32 %v1930, 0.0
    %v2443 = vmax.f32 %v1931, 0.0
    %v2444 = vmax.f32 %v1932, 0.0
    %v2445 = vmax.f32 %v1933, 0.0
    %v2446 = vmax.f32 %v1934, 0.0
    %v2447 = vmax.f32 %v1935, 0.0
    %v2448 = vmax.f32 %v1936, 0.0
    %v2449 = vmax.f32 %v1937, 0.0
    %v2450 = vmax.f32 %v1938, 0.0
    %v2451 = vmax.f32 %v1939, 0.0
    %v2452 = vmax.f32 %v1940, 0.0
    %v2453 = vmax.f32 %v1941, 0.0
    %v2454 = vmax.f32 %v1942, 0.0
    %v2455 = vmax.f32 %v1943, 0.0
    %v2456 = vmax.f32 %v1944, 0.0
    %v2457 = vmax.f32 %v1945, 0.0
    %v2458 = vmax.f32 %v1946, 0.0
    %v2459 = vmax.f32 %v1947, 0.0
    %v2460 = vmax.f32 %v1948, 0.0
    %v2461 = vmax.f32 %v1949, 0.0
    %v2462 = vmax.f32 %v1950, 0.0
    %v2463 = vmax.f32 %v1951, 0.0
    %v2464 = vmax.f32 %v1952, 0.0
    %v2465 = vmax.f32 %v1953, 0.0
    %v2466 = vmax.f32 %v1954, 0.0
    %v2467 = vmax.f32 %v1955, 0.0
    %v2468 = vmax.f32 %v1956, 0.0
    %v2469 = vmax.f32 %v1957, 0.0
    %v2470 = vmax.f32 %v1958, 0.0
    %v2471 = vmax.f32 %v1959, 0.0
    %v2472 = vmax.f32 %v1960, 0.0
    %v2473 = vmax.f32 %v1961, 0.0
    %v2474 = vmax.f32 %v1962, 0.0
    %v2475 = vmax.f32 %v1963, 0.0
    %v2476 = vmax.f32 %v1964, 0.0
    %v2477 = vmax.f32 %v1965, 0.0
    %v2478 = vmax.f32 %v1966, 0.0
    %v2479 = vmax.f32 %v1967, 0.0
    %v2480 = vmax.f32 %v1968, 0.0
    %v2481 = vmax.f32 %v1969, 0.0
    %v2482 = vmax.f32 %v1970, 0.0
    %v2483 = vmax.f32 %v1971, 0.0
    %v2484 = vmax.f32 %v1972, 0.0
    %v2485 = vmax.f32 %v1973, 0.0
    %v2486 = vmax.f32 %v1974, 0.0
    %v2487 = vmax.f32 %v1975, 0.0
    %v2488 = vmax.f32 %v1976, 0.0
    %v2489 = vmax.f32 %v1977, 0.0
    %v2490 = vmax.f32 %v1978, 0.0
    %v2491 = vmax.f32 %v1979, 0.0
    %v2492 = vmax.f32 %v1980, 0.0
    %v2493 = vmax.f32 %v1981, 0.0
    %v2494 = vmax.f32 %v1982, 0.0
    %v2495 = vmax.f32 %v1983, 0.0
    %v2496 = vmax.f32 %v1984, 0.0
    %v2497 = vmax.f32 %v1985, 0.0
    %v2498 = vmax.f32 %v1986, 0.0
    %v2499 = vmax.f32 %v1987, 0.0
    %v2500 = vmax.f32 %v1988, 0.0
    %v2501 = vmax.f32 %v1989, 0.0
    %v2502 = vmax.f32 %v1990, 0.0
    %v2503 = vmax.f32 %v1991, 0.0
    %v2504 = vmax.f32 %v1992, 0.0
    %v2505 = vmax.f32 %v1993, 0.0
    %v2506 = vmax.f32 %v1994, 0.0
    %v2507 = vmax.f32 %v1995, 0.0
    %v2508 = vmax.f32 %v1996, 0.0
    %v2509 = vmax.f32 %v1997, 0.0
    %v2510 = vmax.f32 %v1998, 0.0
    %v2511 = vmax.f32 %v1999, 0.0
    %v2512 = vmax.f32 %v2000, 0.0
    %v2513 = vmax.f32 %v2001, 0.0
    %v2514 = vmax.f32 %v2002, 0.0
    %v2515 = vmax.f32 %v2003, 0.0
    %v2516 = vmax.f32 %v2004, 0.0
    %v2517 = vmax.f32 %v2005, 0.0
    %v2518 = vmax.f32 %v2006, 0.0
    %v2519 = vmax.f32 %v2007, 0.0
    %v2520 = vmax.f32 %v2008, 0.0
    %v2521 = vmax.f32 %v2009, 0.0
    %v2522 = vmax.f32 %v2010, 0.0
    %v2523 = vmax.f32 %v2011, 0.0
    %v2524 = vmax.f32 %v2012, 0.0
    %v2525 = vmax.f32 %v2013, 0.0
    %v2526 = vmax.f32 %v2014, 0.0
    %v2527 = vmax.f32 %v2015, 0.0
    %v2528 = vmax.f32 %v2016, 0.0
    %v2529 = vmax.f32 %v2017, 0.0
    %v2530 = vmax.f32 %v2018, 0.0
    %v2531 = vmax.f32 %v2019, 0.0
    %v2532 = vmax.f32 %v2020, 0.0
    %v2533 = vmax.f32 %v2021, 0.0
    %v2534 = vmax.f32 %v2022, 0.0
    %v2535 = vmax.f32 %v2023, 0.0
    %v2536 = vmax.f32 %v2024, 0.0
    %v2537 = vmax.f32 %v2025, 0.0
    %v2538 = vmax.f32 %v2026, 0.0
    %v2539 = vmax.f32 %v2027, 0.0
    %v2540 = vmax.f32 %v2028, 0.0
    %v2541 = vmax.f32 %v2029, 0.0
    %v2542 = vmax.f32 %v2030, 0.0
    %v2543 = vmax.f32 %v2031, 0.0
    %v2544 = vmax.f32 %v2032, 0.0
    %v2545 = vmax.f32 %v2033, 0.0
    %v2546 = vmax.f32 %v2034, 0.0
    %v2547 = vmax.f32 %v2035, 0.0
    %v2548 = vmax.f32 %v2036, 0.0
    %v2549 = vmax.f32 %v2037, 0.0
    %v2550 = vmax.f32 %v2038, 0.0
    %v2551 = vmax.f32 %v2039, 0.0
    %v2552 = vmax.f32 %v2040, 0.0
    %v2553 = vmax.f32 %v2041, 0.0
    %v2554 = vmax.f32 %v2042, 0.0
    %v2555 = vmax.f32 %v2043, 0.0
    %v2556 = vmax.f32 %v2044, 0.0
    %v2557 = vmax.f32 %v2045, 0.0
    %v2558 = vmax.f32 %v2046, 0.0
    %v2559 = vmax.f32 %v2047, 0.0
    %v2560 = vmax.f32 %v2048, 0.0
    %v2561 = vmax.f32 %v2049, 0.0
    %v2562 = vmax.f32 %v2050, 0.0
    %v2563 = vmax.f32 %v2051, 0.0
    %v2564 = vmax.f32 %v2052, 0.0
    %v2565 = vmax.f32 %v2053, 0.0
    %v2566 = vmax.f32 %v2054, 0.0
    %v2567 = vmax.f32 %v2055, 0.0
    %v2568 = vmax.f32 %v2056, 0.0
    %v2569 = vmax.f32 %v2057, 0.0
    %v2570 = vmax.f32 %v2058, 0.0
    %v2571 = vmax.f32 %v2059, 0.0
    %v2572 = vmax.f32 %v2060, 0.0
    %v2573 = vmax.f32 %v2061, 0.0
    %v2574 = vmax.f32 %v2062, 0.0
    %v2575 = vmax.f32 %v2063, 0.0
    %v2576 = vmax.f32 %v2064, 0.0
    %v2577 = vmax.f32 %v2065, 0.0
    %v2578 = vmax.f32 %v2066, 0.0
    %v2579 = vmax.f32 %v2067, 0.0
    %v2580 = vmax.f32 %v2068, 0.0
    %v2581 = vmax.f32 %v2069, 0.0
    %v2582 = vmax.f32 %v2070, 0.0
    %v2583 = vmax.f32 %v2071, 0.0
    %v2584 = vmax.f32 %v2072, 0.0
    %v2585 = vmax.f32 %v2073, 0.0
    %v2586 = vmax.f32 %v2074, 0.0
    %v2587 = vmax.f32 %v2075, 0.0
    %v2588 = vmax.f32 %v2076, 0.0
    %v2589 = vmax.f32 %v2077, 0.0
    %v2590 = vmax.f32 %v2078, 0.0
    %v2591 = vmax.f32 %v2079, 0.0
    %v2592 = vmax.f32 %v2080, 0.0
    %v2593 = vmax.f32 %v2081, 0.0
    %v2594 = vmax.f32 %v2082, 0.0
    %v2595 = vmax.f32 %v2083, 0.0
    %v2596 = vmax.f32 %v2084, 0.0
    %v2597 = vmax.f32 %v2085, 0.0
    %v2598 = vmax.f32 %v2086, 0.0
    %v2599 = vmax.f32 %v2087, 0.0
    %v2600 = vmax.f32 %v2088, 0.0
    %v2601 = vmax.f32 %v2089, 0.0
    %v2602 = vmax.f32 %v2090, 0.0
    %v2603 = vmax.f32 %v2091, 0.0
    %v2604 = vmax.f32 %v2092, 0.0
    %v2605 = vmax.f32 %v2093, 0.0
    %2606 = vst [vmem:[#allocation8] sm:$0xff] %v2094
    %2607 = vst [vmem:[#allocation8 + $0x8] sm:$0xff] %v2095
    %2608 = vst [vmem:[#allocation8 + $0x10] sm:$0xff] %v2096
    %2609 = vst [vmem:[#allocation8 + $0x18] sm:$0xff] %v2097
    %2610 = vst [vmem:[#allocation8 + $0x20] sm:$0xff] %v2098
    %2611 = vst [vmem:[#allocation8 + $0x28] sm:$0xff] %v2099
    %2612 = vst [vmem:[#allocation8 + $0x30] sm:$0xff] %v2100
    %2613 = vst [vmem:[#allocation8 + $0x38] sm:$0xff] %v2101
    %2614 = vst [vmem:[#allocation8 + $0x40] sm:$0xff] %v2102
    %2615 = vst [vmem:[#allocation8 + $0x48] sm:$0xff] %v2103
    %2616 = vst [vmem:[#allocation8 + $0x50] sm:$0xff] %v2104
    %2617 = vst [vmem:[#allocation8 + $0x58] sm:$0xff] %v2105
    %2618 = vst [vmem:[#allocation8 + $0x60] sm:$0xff] %v2106
    %2619 = vst [vmem:[#allocation8 + $0x68] sm:$0xff] %v2107
    %2620 = vst [vmem:[#allocation8 + $0x70] sm:$0xff] %v2108
    %2621 = vst [vmem:[#allocation8 + $0x78] sm:$0xff] %v2109
    %2622 = vst [vmem:[#allocation8 + $0x80] sm:$0xff] %v2110
    %2623 = vst [vmem:[#allocation8 + $0x88] sm:$0xff] %v2111
    %2624 = vst [vmem:[#allocation8 + $0x90] sm:$0xff] %v2112
    %2625 = vst [vmem:[#allocation8 + $0x98] sm:$0xff] %v2113
    %2626 = vst [vmem:[#allocation8 + $0xa0] sm:$0xff] %v2114
    %2627 = vst [vmem:[#allocation8 + $0xa8] sm:$0xff] %v2115
    %2628 = vst [vmem:[#allocation8 + $0xb0] sm:$0xff] %v2116
    %2629 = vst [vmem:[#allocation8 + $0xb8] sm:$0xff] %v2117
    %2630 = vst [vmem:[#allocation8 + $0xc0] sm:$0xff] %v2118
    %2631 = vst [vmem:[#allocation8 + $0xc8] sm:$0xff] %v2119
    %2632 = vst [vmem:[#allocation8 + $0xd0] sm:$0xff] %v2120
    %2633 = vst [vmem:[#allocation8 + $0xd8] sm:$0xff] %v2121
    %2634 = vst [vmem:[#allocation8 + $0xe0] sm:$0xff] %v2122
    %2635 = vst [vmem:[#allocation8 + $0xe8] sm:$0xff] %v2123
    %2636 = vst [vmem:[#allocation8 + $0xf0] sm:$0xff] %v2124
    %2637 = vst [vmem:[#allocation8 + $0xf8] sm:$0xff] %v2125
    %2638 = vst [vmem:[#allocation8 + $0x100] sm:$0xff] %v2126
    %2639 = vst [vmem:[#allocation8 + $0x108] sm:$0xff] %v2127
    %2640 = vst [vmem:[#allocation8 + $0x110] sm:$0xff] %v2128
    %2641 = vst [vmem:[#allocation8 + $0x118] sm:$0xff] %v2129
    %2642 = vst [vmem:[#allocation8 + $0x120] sm:$0xff] %v2130
    %2643 = vst [vmem:[#allocation8 + $0x128] sm:$0xff] %v2131
    %2644 = vst [vmem:[#allocation8 + $0x130] sm:$0xff] %v2132
    %2645 = vst [vmem:[#allocation8 + $0x138] sm:$0xff] %v2133
    %2646 = vst [vmem:[#allocation8 + $0x140] sm:$0xff] %v2134
    %2647 = vst [vmem:[#allocation8 + $0x148] sm:$0xff] %v2135
    %2648 = vst [vmem:[#allocation8 + $0x150] sm:$0xff] %v2136
    %2649 = vst [vmem:[#allocation8 + $0x158] sm:$0xff] %v2137
    %2650 = vst [vmem:[#allocation8 + $0x160] sm:$0xff] %v2138
    %2651 = vst [vmem:[#allocation8 + $0x168] sm:$0xff] %v2139
    %2652 = vst [vmem:[#allocation8 + $0x170] sm:$0xff] %v2140
    %2653 = vst [vmem:[#allocation8 + $0x178] sm:$0xff] %v2141
    %2654 = vst [vmem:[#allocation8 + $0x180] sm:$0xff] %v2142
    %2655 = vst [vmem:[#allocation8 + $0x188] sm:$0xff] %v2143
    %2656 = vst [vmem:[#allocation8 + $0x190] sm:$0xff] %v2144
    %2657 = vst [vmem:[#allocation8 + $0x198] sm:$0xff] %v2145
    %2658 = vst [vmem:[#allocation8 + $0x1a0] sm:$0xff] %v2146
    %2659 = vst [vmem:[#allocation8 + $0x1a8] sm:$0xff] %v2147
    %2660 = vst [vmem:[#allocation8 + $0x1b0] sm:$0xff] %v2148
    %2661 = vst [vmem:[#allocation8 + $0x1b8] sm:$0xff] %v2149
    %2662 = vst [vmem:[#allocation8 + $0x1c0] sm:$0xff] %v2150
    %2663 = vst [vmem:[#allocation8 + $0x1c8] sm:$0xff] %v2151
    %2664 = vst [vmem:[#allocation8 + $0x1d0] sm:$0xff] %v2152
    %2665 = vst [vmem:[#allocation8 + $0x1d8] sm:$0xff] %v2153
    %2666 = vst [vmem:[#allocation8 + $0x1e0] sm:$0xff] %v2154
    %2667 = vst [vmem:[#allocation8 + $0x1e8] sm:$0xff] %v2155
    %2668 = vst [vmem:[#allocation8 + $0x1f0] sm:$0xff] %v2156
    %2669 = vst [vmem:[#allocation8 + $0x1f8] sm:$0xff] %v2157
    %2670 = vst [vmem:[#allocation8 + $0x200] sm:$0xff] %v2158
    %2671 = vst [vmem:[#allocation8 + $0x208] sm:$0xff] %v2159
    %2672 = vst [vmem:[#allocation8 + $0x210] sm:$0xff] %v2160
    %2673 = vst [vmem:[#allocation8 + $0x218] sm:$0xff] %v2161
    %2674 = vst [vmem:[#allocation8 + $0x220] sm:$0xff] %v2162
    %2675 = vst [vmem:[#allocation8 + $0x228] sm:$0xff] %v2163
    %2676 = vst [vmem:[#allocation8 + $0x230] sm:$0xff] %v2164
    %2677 = vst [vmem:[#allocation8 + $0x238] sm:$0xff] %v2165
    %2678 = vst [vmem:[#allocation8 + $0x240] sm:$0xff] %v2166
    %2679 = vst [vmem:[#allocation8 + $0x248] sm:$0xff] %v2167
    %2680 = vst [vmem:[#allocation8 + $0x250] sm:$0xff] %v2168
    %2681 = vst [vmem:[#allocation8 + $0x258] sm:$0xff] %v2169
    %2682 = vst [vmem:[#allocation8 + $0x260] sm:$0xff] %v2170
    %2683 = vst [vmem:[#allocation8 + $0x268] sm:$0xff] %v2171
    %2684 = vst [vmem:[#allocation8 + $0x270] sm:$0xff] %v2172
    %2685 = vst [vmem:[#allocation8 + $0x278] sm:$0xff] %v2173
    %2686 = vst [vmem:[#allocation8 + $0x280] sm:$0xff] %v2174
    %2687 = vst [vmem:[#allocation8 + $0x288] sm:$0xff] %v2175
    %2688 = vst [vmem:[#allocation8 + $0x290] sm:$0xff] %v2176
    %2689 = vst [vmem:[#allocation8 + $0x298] sm:$0xff] %v2177
    %2690 = vst [vmem:[#allocation8 + $0x2a0] sm:$0xff] %v2178
    %2691 = vst [vmem:[#allocation8 + $0x2a8] sm:$0xff] %v2179
    %2692 = vst [vmem:[#allocation8 + $0x2b0] sm:$0xff] %v2180
    %2693 = vst [vmem:[#allocation8 + $0x2b8] sm:$0xff] %v2181
    %2694 = vst [vmem:[#allocation8 + $0x2c0] sm:$0xff] %v2182
    %2695 = vst [vmem:[#allocation8 + $0x2c8] sm:$0xff] %v2183
    %2696 = vst [vmem:[#allocation8 + $0x2d0] sm:$0xff] %v2184
    %2697 = vst [vmem:[#allocation8 + $0x2d8] sm:$0xff] %v2185
    %2698 = vst [vmem:[#allocation8 + $0x2e0] sm:$0xff] %v2186
    %2699 = vst [vmem:[#allocation8 + $0x2e8] sm:$0xff] %v2187
    %2700 = vst [vmem:[#allocation8 + $0x2f0] sm:$0xff] %v2188
    %2701 = vst [vmem:[#allocation8 + $0x2f8] sm:$0xff] %v2189
    %2702 = vst [vmem:[#allocation8 + $0x300] sm:$0xff] %v2190
    %2703 = vst [vmem:[#allocation8 + $0x308] sm:$0xff] %v2191
    %2704 = vst [vmem:[#allocation8 + $0x310] sm:$0xff] %v2192
    %2705 = vst [vmem:[#allocation8 + $0x318] sm:$0xff] %v2193
    %2706 = vst [vmem:[#allocation8 + $0x320] sm:$0xff] %v2194
    %2707 = vst [vmem:[#allocation8 + $0x328] sm:$0xff] %v2195
    %2708 = vst [vmem:[#allocation8 + $0x330] sm:$0xff] %v2196
    %2709 = vst [vmem:[#allocation8 + $0x338] sm:$0xff] %v2197
    %2710 = vst [vmem:[#allocation8 + $0x340] sm:$0xff] %v2198
    %2711 = vst [vmem:[#allocation8 + $0x348] sm:$0xff] %v2199
    %2712 = vst [vmem:[#allocation8 + $0x350] sm:$0xff] %v2200
    %2713 = vst [vmem:[#allocation8 + $0x358] sm:$0xff] %v2201
    %2714 = vst [vmem:[#allocation8 + $0x360] sm:$0xff] %v2202
    %2715 = vst [vmem:[#allocation8 + $0x368] sm:$0xff] %v2203
    %2716 = vst [vmem:[#allocation8 + $0x370] sm:$0xff] %v2204
    %2717 = vst [vmem:[#allocation8 + $0x378] sm:$0xff] %v2205
    %2718 = vst [vmem:[#allocation8 + $0x380] sm:$0xff] %v2206
    %2719 = vst [vmem:[#allocation8 + $0x388] sm:$0xff] %v2207
    %2720 = vst [vmem:[#allocation8 + $0x390] sm:$0xff] %v2208
    %2721 = vst [vmem:[#allocation8 + $0x398] sm:$0xff] %v2209
    %2722 = vst [vmem:[#allocation8 + $0x3a0] sm:$0xff] %v2210
    %2723 = vst [vmem:[#allocation8 + $0x3a8] sm:$0xff] %v2211
    %2724 = vst [vmem:[#allocation8 + $0x3b0] sm:$0xff] %v2212
    %2725 = vst [vmem:[#allocation8 + $0x3b8] sm:$0xff] %v2213
    %2726 = vst [vmem:[#allocation8 + $0x3c0] sm:$0xff] %v2214
    %2727 = vst [vmem:[#allocation8 + $0x3c8] sm:$0xff] %v2215
    %2728 = vst [vmem:[#allocation8 + $0x3d0] sm:$0xff] %v2216
    %2729 = vst [vmem:[#allocation8 + $0x3d8] sm:$0xff] %v2217
    %2730 = vst [vmem:[#allocation8 + $0x3e0] sm:$0xff] %v2218
    %2731 = vst [vmem:[#allocation8 + $0x3e8] sm:$0xff] %v2219
    %2732 = vst [vmem:[#allocation8 + $0x3f0] sm:$0xff] %v2220
    %2733 = vst [vmem:[#allocation8 + $0x3f8] sm:$0xff] %v2221
    %2734 = vst [vmem:[#allocation8 + $0x400] sm:$0xff] %v2222
    %2735 = vst [vmem:[#allocation8 + $0x408] sm:$0xff] %v2223
    %2736 = vst [vmem:[#allocation8 + $0x410] sm:$0xff] %v2224
    %2737 = vst [vmem:[#allocation8 + $0x418] sm:$0xff] %v2225
    %2738 = vst [vmem:[#allocation8 + $0x420] sm:$0xff] %v2226
    %2739 = vst [vmem:[#allocation8 + $0x428] sm:$0xff] %v2227
    %2740 = vst [vmem:[#allocation8 + $0x430] sm:$0xff] %v2228
    %2741 = vst [vmem:[#allocation8 + $0x438] sm:$0xff] %v2229
    %2742 = vst [vmem:[#allocation8 + $0x440] sm:$0xff] %v2230
    %2743 = vst [vmem:[#allocation8 + $0x448] sm:$0xff] %v2231
    %2744 = vst [vmem:[#allocation8 + $0x450] sm:$0xff] %v2232
    %2745 = vst [vmem:[#allocation8 + $0x458] sm:$0xff] %v2233
    %2746 = vst [vmem:[#allocation8 + $0x460] sm:$0xff] %v2234
    %2747 = vst [vmem:[#allocation8 + $0x468] sm:$0xff] %v2235
    %2748 = vst [vmem:[#allocation8 + $0x470] sm:$0xff] %v2236
    %2749 = vst [vmem:[#allocation8 + $0x478] sm:$0xff] %v2237
    %2750 = vst [vmem:[#allocation8 + $0x480] sm:$0xff] %v2238
    %2751 = vst [vmem:[#allocation8 + $0x488] sm:$0xff] %v2239
    %2752 = vst [vmem:[#allocation8 + $0x490] sm:$0xff] %v2240
    %2753 = vst [vmem:[#allocation8 + $0x498] sm:$0xff] %v2241
    %2754 = vst [vmem:[#allocation8 + $0x4a0] sm:$0xff] %v2242
    %2755 = vst [vmem:[#allocation8 + $0x4a8] sm:$0xff] %v2243
    %2756 = vst [vmem:[#allocation8 + $0x4b0] sm:$0xff] %v2244
    %2757 = vst [vmem:[#allocation8 + $0x4b8] sm:$0xff] %v2245
    %2758 = vst [vmem:[#allocation8 + $0x4c0] sm:$0xff] %v2246
    %2759 = vst [vmem:[#allocation8 + $0x4c8] sm:$0xff] %v2247
    %2760 = vst [vmem:[#allocation8 + $0x4d0] sm:$0xff] %v2248
    %2761 = vst [vmem:[#allocation8 + $0x4d8] sm:$0xff] %v2249
    %2762 = vst [vmem:[#allocation8 + $0x4e0] sm:$0xff] %v2250
    %2763 = vst [vmem:[#allocation8 + $0x4e8] sm:$0xff] %v2251
    %2764 = vst [vmem:[#allocation8 + $0x4f0] sm:$0xff] %v2252
    %2765 = vst [vmem:[#allocation8 + $0x4f8] sm:$0xff] %v2253
    %2766 = vst [vmem:[#allocation8 + $0x500] sm:$0xff] %v2254
    %2767 = vst [vmem:[#allocation8 + $0x508] sm:$0xff] %v2255
    %2768 = vst [vmem:[#allocation8 + $0x510] sm:$0xff] %v2256
    %2769 = vst [vmem:[#allocation8 + $0x518] sm:$0xff] %v2257
    %2770 = vst [vmem:[#allocation8 + $0x520] sm:$0xff] %v2258
    %2771 = vst [vmem:[#allocation8 + $0x528] sm:$0xff] %v2259
    %2772 = vst [vmem:[#allocation8 + $0x530] sm:$0xff] %v2260
    %2773 = vst [vmem:[#allocation8 + $0x538] sm:$0xff] %v2261
    %2774 = vst [vmem:[#allocation8 + $0x540] sm:$0xff] %v2262
    %2775 = vst [vmem:[#allocation8 + $0x548] sm:$0xff] %v2263
    %2776 = vst [vmem:[#allocation8 + $0x550] sm:$0xff] %v2264
    %2777 = vst [vmem:[#allocation8 + $0x558] sm:$0xff] %v2265
    %2778 = vst [vmem:[#allocation8 + $0x560] sm:$0xff] %v2266
    %2779 = vst [vmem:[#allocation8 + $0x568] sm:$0xff] %v2267
    %2780 = vst [vmem:[#allocation8 + $0x570] sm:$0xff] %v2268
    %2781 = vst [vmem:[#allocation8 + $0x578] sm:$0xff] %v2269
    %2782 = vst [vmem:[#allocation8 + $0x580] sm:$0xff] %v2270
    %2783 = vst [vmem:[#allocation8 + $0x588] sm:$0xff] %v2271
    %2784 = vst [vmem:[#allocation8 + $0x590] sm:$0xff] %v2272
    %2785 = vst [vmem:[#allocation8 + $0x598] sm:$0xff] %v2273
    %2786 = vst [vmem:[#allocation8 + $0x5a0] sm:$0xff] %v2274
    %2787 = vst [vmem:[#allocation8 + $0x5a8] sm:$0xff] %v2275
    %2788 = vst [vmem:[#allocation8 + $0x5b0] sm:$0xff] %v2276
    %2789 = vst [vmem:[#allocation8 + $0x5b8] sm:$0xff] %v2277
    %2790 = vst [vmem:[#allocation8 + $0x5c0] sm:$0xff] %v2278
    %2791 = vst [vmem:[#allocation8 + $0x5c8] sm:$0xff] %v2279
    %2792 = vst [vmem:[#allocation8 + $0x5d0] sm:$0xff] %v2280
    %2793 = vst [vmem:[#allocation8 + $0x5d8] sm:$0xff] %v2281
    %2794 = vst [vmem:[#allocation8 + $0x5e0] sm:$0xff] %v2282
    %2795 = vst [vmem:[#allocation8 + $0x5e8] sm:$0xff] %v2283
    %2796 = vst [vmem:[#allocation8 + $0x5f0] sm:$0xff] %v2284
    %2797 = vst [vmem:[#allocation8 + $0x5f8] sm:$0xff] %v2285
    %2798 = vst [vmem:[#allocation8 + $0x600] sm:$0xff] %v2286
    %2799 = vst [vmem:[#allocation8 + $0x608] sm:$0xff] %v2287
    %2800 = vst [vmem:[#allocation8 + $0x610] sm:$0xff] %v2288
    %2801 = vst [vmem:[#allocation8 + $0x618] sm:$0xff] %v2289
    %2802 = vst [vmem:[#allocation8 + $0x620] sm:$0xff] %v2290
    %2803 = vst [vmem:[#allocation8 + $0x628] sm:$0xff] %v2291
    %2804 = vst [vmem:[#allocation8 + $0x630] sm:$0xff] %v2292
    %2805 = vst [vmem:[#allocation8 + $0x638] sm:$0xff] %v2293
    %2806 = vst [vmem:[#allocation8 + $0x640] sm:$0xff] %v2294
    %2807 = vst [vmem:[#allocation8 + $0x648] sm:$0xff] %v2295
    %2808 = vst [vmem:[#allocation8 + $0x650] sm:$0xff] %v2296
    %2809 = vst [vmem:[#allocation8 + $0x658] sm:$0xff] %v2297
    %2810 = vst [vmem:[#allocation8 + $0x660] sm:$0xff] %v2298
    %2811 = vst [vmem:[#allocation8 + $0x668] sm:$0xff] %v2299
    %2812 = vst [vmem:[#allocation8 + $0x670] sm:$0xff] %v2300
    %2813 = vst [vmem:[#allocation8 + $0x678] sm:$0xff] %v2301
    %2814 = vst [vmem:[#allocation8 + $0x680] sm:$0xff] %v2302
    %2815 = vst [vmem:[#allocation8 + $0x688] sm:$0xff] %v2303
    %2816 = vst [vmem:[#allocation8 + $0x690] sm:$0xff] %v2304
    %2817 = vst [vmem:[#allocation8 + $0x698] sm:$0xff] %v2305
    %2818 = vst [vmem:[#allocation8 + $0x6a0] sm:$0xff] %v2306
    %2819 = vst [vmem:[#allocation8 + $0x6a8] sm:$0xff] %v2307
    %2820 = vst [vmem:[#allocation8 + $0x6b0] sm:$0xff] %v2308
    %2821 = vst [vmem:[#allocation8 + $0x6b8] sm:$0xff] %v2309
    %2822 = vst [vmem:[#allocation8 + $0x6c0] sm:$0xff] %v2310
    %2823 = vst [vmem:[#allocation8 + $0x6c8] sm:$0xff] %v2311
    %2824 = vst [vmem:[#allocation8 + $0x6d0] sm:$0xff] %v2312
    %2825 = vst [vmem:[#allocation8 + $0x6d8] sm:$0xff] %v2313
    %2826 = vst [vmem:[#allocation8 + $0x6e0] sm:$0xff] %v2314
    %2827 = vst [vmem:[#allocation8 + $0x6e8] sm:$0xff] %v2315
    %2828 = vst [vmem:[#allocation8 + $0x6f0] sm:$0xff] %v2316
    %2829 = vst [vmem:[#allocation8 + $0x6f8] sm:$0xff] %v2317
    %2830 = vst [vmem:[#allocation8 + $0x700] sm:$0xff] %v2318
    %2831 = vst [vmem:[#allocation8 + $0x708] sm:$0xff] %v2319
    %2832 = vst [vmem:[#allocation8 + $0x710] sm:$0xff] %v2320
    %2833 = vst [vmem:[#allocation8 + $0x718] sm:$0xff] %v2321
    %2834 = vst [vmem:[#allocation8 + $0x720] sm:$0xff] %v2322
    %2835 = vst [vmem:[#allocation8 + $0x728] sm:$0xff] %v2323
    %2836 = vst [vmem:[#allocation8 + $0x730] sm:$0xff] %v2324
    %2837 = vst [vmem:[#allocation8 + $0x738] sm:$0xff] %v2325
    %2838 = vst [vmem:[#allocation8 + $0x740] sm:$0xff] %v2326
    %2839 = vst [vmem:[#allocation8 + $0x748] sm:$0xff] %v2327
    %2840 = vst [vmem:[#allocation8 + $0x750] sm:$0xff] %v2328
    %2841 = vst [vmem:[#allocation8 + $0x758] sm:$0xff] %v2329
    %2842 = vst [vmem:[#allocation8 + $0x760] sm:$0xff] %v2330
    %2843 = vst [vmem:[#allocation8 + $0x768] sm:$0xff] %v2331
    %2844 = vst [vmem:[#allocation8 + $0x770] sm:$0xff] %v2332
    %2845 = vst [vmem:[#allocation8 + $0x778] sm:$0xff] %v2333
    %2846 = vst [vmem:[#allocation8 + $0x780] sm:$0xff] %v2334
    %2847 = vst [vmem:[#allocation8 + $0x788] sm:$0xff] %v2335
    %2848 = vst [vmem:[#allocation8 + $0x790] sm:$0xff] %v2336
    %2849 = vst [vmem:[#allocation8 + $0x798] sm:$0xff] %v2337
    %2850 = vst [vmem:[#allocation8 + $0x7a0] sm:$0xff] %v2338
    %2851 = vst [vmem:[#allocation8 + $0x7a8] sm:$0xff] %v2339
    %2852 = vst [vmem:[#allocation8 + $0x7b0] sm:$0xff] %v2340
    %2853 = vst [vmem:[#allocation8 + $0x7b8] sm:$0xff] %v2341
    %2854 = vst [vmem:[#allocation8 + $0x7c0] sm:$0xff] %v2342
    %2855 = vst [vmem:[#allocation8 + $0x7c8] sm:$0xff] %v2343
    %2856 = vst [vmem:[#allocation8 + $0x7d0] sm:$0xff] %v2344
    %2857 = vst [vmem:[#allocation8 + $0x7d8] sm:$0xff] %v2345
    %2858 = vst [vmem:[#allocation8 + $0x7e0] sm:$0xff] %v2346
    %2859 = vst [vmem:[#allocation8 + $0x7e8] sm:$0xff] %v2347
    %2860 = vst [vmem:[#allocation8 + $0x7f0] sm:$0xff] %v2348
    %2861 = vst [vmem:[#allocation8 + $0x7f8] sm:$0xff] %v2349
    %2862 = vst [vmem:[#allocation8 + $0x800] sm:$0xff] %v2350
    %2863 = vst [vmem:[#allocation8 + $0x808] sm:$0xff] %v2351
    %2864 = vst [vmem:[#allocation8 + $0x810] sm:$0xff] %v2352
    %2865 = vst [vmem:[#allocation8 + $0x818] sm:$0xff] %v2353
    %2866 = vst [vmem:[#allocation8 + $0x820] sm:$0xff] %v2354
    %2867 = vst [vmem:[#allocation8 + $0x828] sm:$0xff] %v2355
    %2868 = vst [vmem:[#allocation8 + $0x830] sm:$0xff] %v2356
    %2869 = vst [vmem:[#allocation8 + $0x838] sm:$0xff] %v2357
    %2870 = vst [vmem:[#allocation8 + $0x840] sm:$0xff] %v2358
    %2871 = vst [vmem:[#allocation8 + $0x848] sm:$0xff] %v2359
    %2872 = vst [vmem:[#allocation8 + $0x850] sm:$0xff] %v2360
    %2873 = vst [vmem:[#allocation8 + $0x858] sm:$0xff] %v2361
    %2874 = vst [vmem:[#allocation8 + $0x860] sm:$0xff] %v2362
    %2875 = vst [vmem:[#allocation8 + $0x868] sm:$0xff] %v2363
    %2876 = vst [vmem:[#allocation8 + $0x870] sm:$0xff] %v2364
    %2877 = vst [vmem:[#allocation8 + $0x878] sm:$0xff] %v2365
    %2878 = vst [vmem:[#allocation8 + $0x880] sm:$0xff] %v2366
    %2879 = vst [vmem:[#allocation8 + $0x888] sm:$0xff] %v2367
    %2880 = vst [vmem:[#allocation8 + $0x890] sm:$0xff] %v2368
    %2881 = vst [vmem:[#allocation8 + $0x898] sm:$0xff] %v2369
    %2882 = vst [vmem:[#allocation8 + $0x8a0] sm:$0xff] %v2370
    %2883 = vst [vmem:[#allocation8 + $0x8a8] sm:$0xff] %v2371
    %2884 = vst [vmem:[#allocation8 + $0x8b0] sm:$0xff] %v2372
    %2885 = vst [vmem:[#allocation8 + $0x8b8] sm:$0xff] %v2373
    %2886 = vst [vmem:[#allocation8 + $0x8c0] sm:$0xff] %v2374
    %2887 = vst [vmem:[#allocation8 + $0x8c8] sm:$0xff] %v2375
    %2888 = vst [vmem:[#allocation8 + $0x8d0] sm:$0xff] %v2376
    %2889 = vst [vmem:[#allocation8 + $0x8d8] sm:$0xff] %v2377
    %2890 = vst [vmem:[#allocation8 + $0x8e0] sm:$0xff] %v2378
    %2891 = vst [vmem:[#allocation8 + $0x8e8] sm:$0xff] %v2379
    %2892 = vst [vmem:[#allocation8 + $0x8f0] sm:$0xff] %v2380
    %2893 = vst [vmem:[#allocation8 + $0x8f8] sm:$0xff] %v2381
    %2894 = vst [vmem:[#allocation8 + $0x900] sm:$0xff] %v2382
    %2895 = vst [vmem:[#allocation8 + $0x908] sm:$0xff] %v2383
    %2896 = vst [vmem:[#allocation8 + $0x910] sm:$0xff] %v2384
    %2897 = vst [vmem:[#allocation8 + $0x918] sm:$0xff] %v2385
    %2898 = vst [vmem:[#allocation8 + $0x920] sm:$0xff] %v2386
    %2899 = vst [vmem:[#allocation8 + $0x928] sm:$0xff] %v2387
    %2900 = vst [vmem:[#allocation8 + $0x930] sm:$0xff] %v2388
    %2901 = vst [vmem:[#allocation8 + $0x938] sm:$0xff] %v2389
    %2902 = vst [vmem:[#allocation8 + $0x940] sm:$0xff] %v2390
    %2903 = vst [vmem:[#allocation8 + $0x948] sm:$0xff] %v2391
    %2904 = vst [vmem:[#allocation8 + $0x950] sm:$0xff] %v2392
    %2905 = vst [vmem:[#allocation8 + $0x958] sm:$0xff] %v2393
    %2906 = vst [vmem:[#allocation8 + $0x960] sm:$0xff] %v2394
    %2907 = vst [vmem:[#allocation8 + $0x968] sm:$0xff] %v2395
    %2908 = vst [vmem:[#allocation8 + $0x970] sm:$0xff] %v2396
    %2909 = vst [vmem:[#allocation8 + $0x978] sm:$0xff] %v2397
    %2910 = vst [vmem:[#allocation8 + $0x980] sm:$0xff] %v2398
    %2911 = vst [vmem:[#allocation8 + $0x988] sm:$0xff] %v2399
    %2912 = vst [vmem:[#allocation8 + $0x990] sm:$0xff] %v2400
    %2913 = vst [vmem:[#allocation8 + $0x998] sm:$0xff] %v2401
    %2914 = vst [vmem:[#allocation8 + $0x9a0] sm:$0xff] %v2402
    %2915 = vst [vmem:[#allocation8 + $0x9a8] sm:$0xff] %v2403
    %2916 = vst [vmem:[#allocation8 + $0x9b0] sm:$0xff] %v2404
    %2917 = vst [vmem:[#allocation8 + $0x9b8] sm:$0xff] %v2405
    %2918 = vst [vmem:[#allocation8 + $0x9c0] sm:$0xff] %v2406
    %2919 = vst [vmem:[#allocation8 + $0x9c8] sm:$0xff] %v2407
    %2920 = vst [vmem:[#allocation8 + $0x9d0] sm:$0xff] %v2408
    %2921 = vst [vmem:[#allocation8 + $0x9d8] sm:$0xff] %v2409
    %2922 = vst [vmem:[#allocation8 + $0x9e0] sm:$0xff] %v2410
    %2923 = vst [vmem:[#allocation8 + $0x9e8] sm:$0xff] %v2411
    %2924 = vst [vmem:[#allocation8 + $0x9f0] sm:$0xff] %v2412
    %2925 = vst [vmem:[#allocation8 + $0x9f8] sm:$0xff] %v2413
    %2926 = vst [vmem:[#allocation8 + $0xa00] sm:$0xff] %v2414
    %2927 = vst [vmem:[#allocation8 + $0xa08] sm:$0xff] %v2415
    %2928 = vst [vmem:[#allocation8 + $0xa10] sm:$0xff] %v2416
    %2929 = vst [vmem:[#allocation8 + $0xa18] sm:$0xff] %v2417
    %2930 = vst [vmem:[#allocation8 + $0xa20] sm:$0xff] %v2418
    %2931 = vst [vmem:[#allocation8 + $0xa28] sm:$0xff] %v2419
    %2932 = vst [vmem:[#allocation8 + $0xa30] sm:$0xff] %v2420
    %2933 = vst [vmem:[#allocation8 + $0xa38] sm:$0xff] %v2421
    %2934 = vst [vmem:[#allocation8 + $0xa40] sm:$0xff] %v2422
    %2935 = vst [vmem:[#allocation8 + $0xa48] sm:$0xff] %v2423
    %2936 = vst [vmem:[#allocation8 + $0xa50] sm:$0xff] %v2424
    %2937 = vst [vmem:[#allocation8 + $0xa58] sm:$0xff] %v2425
    %2938 = vst [vmem:[#allocation8 + $0xa60] sm:$0xff] %v2426
    %2939 = vst [vmem:[#allocation8 + $0xa68] sm:$0xff] %v2427
    %2940 = vst [vmem:[#allocation8 + $0xa70] sm:$0xff] %v2428
    %2941 = vst [vmem:[#allocation8 + $0xa78] sm:$0xff] %v2429
    %2942 = vst [vmem:[#allocation8 + $0xa80] sm:$0xff] %v2430
    %2943 = vst [vmem:[#allocation8 + $0xa88] sm:$0xff] %v2431
    %2944 = vst [vmem:[#allocation8 + $0xa90] sm:$0xff] %v2432
    %2945 = vst [vmem:[#allocation8 + $0xa98] sm:$0xff] %v2433
    %2946 = vst [vmem:[#allocation8 + $0xaa0] sm:$0xff] %v2434
    %2947 = vst [vmem:[#allocation8 + $0xaa8] sm:$0xff] %v2435
    %2948 = vst [vmem:[#allocation8 + $0xab0] sm:$0xff] %v2436
    %2949 = vst [vmem:[#allocation8 + $0xab8] sm:$0xff] %v2437
    %2950 = vst [vmem:[#allocation8 + $0xac0] sm:$0xff] %v2438
    %2951 = vst [vmem:[#allocation8 + $0xac8] sm:$0xff] %v2439
    %2952 = vst [vmem:[#allocation8 + $0xad0] sm:$0xff] %v2440
    %2953 = vst [vmem:[#allocation8 + $0xad8] sm:$0xff] %v2441
    %2954 = vst [vmem:[#allocation8 + $0xae0] sm:$0xff] %v2442
    %2955 = vst [vmem:[#allocation8 + $0xae8] sm:$0xff] %v2443
    %2956 = vst [vmem:[#allocation8 + $0xaf0] sm:$0xff] %v2444
    %2957 = vst [vmem:[#allocation8 + $0xaf8] sm:$0xff] %v2445
    %2958 = vst [vmem:[#allocation8 + $0xb00] sm:$0xff] %v2446
    %2959 = vst [vmem:[#allocation8 + $0xb08] sm:$0xff] %v2447
    %2960 = vst [vmem:[#allocation8 + $0xb10] sm:$0xff] %v2448
    %2961 = vst [vmem:[#allocation8 + $0xb18] sm:$0xff] %v2449
    %2962 = vst [vmem:[#allocation8 + $0xb20] sm:$0xff] %v2450
    %2963 = vst [vmem:[#allocation8 + $0xb28] sm:$0xff] %v2451
    %2964 = vst [vmem:[#allocation8 + $0xb30] sm:$0xff] %v2452
    %2965 = vst [vmem:[#allocation8 + $0xb38] sm:$0xff] %v2453
    %2966 = vst [vmem:[#allocation8 + $0xb40] sm:$0xff] %v2454
    %2967 = vst [vmem:[#allocation8 + $0xb48] sm:$0xff] %v2455
    %2968 = vst [vmem:[#allocation8 + $0xb50] sm:$0xff] %v2456
    %2969 = vst [vmem:[#allocation8 + $0xb58] sm:$0xff] %v2457
    %2970 = vst [vmem:[#allocation8 + $0xb60] sm:$0xff] %v2458
    %2971 = vst [vmem:[#allocation8 + $0xb68] sm:$0xff] %v2459
    %2972 = vst [vmem:[#allocation8 + $0xb70] sm:$0xff] %v2460
    %2973 = vst [vmem:[#allocation8 + $0xb78] sm:$0xff] %v2461
    %2974 = vst [vmem:[#allocation8 + $0xb80] sm:$0xff] %v2462
    %2975 = vst [vmem:[#allocation8 + $0xb88] sm:$0xff] %v2463
    %2976 = vst [vmem:[#allocation8 + $0xb90] sm:$0xff] %v2464
    %2977 = vst [vmem:[#allocation8 + $0xb98] sm:$0xff] %v2465
    %2978 = vst [vmem:[#allocation8 + $0xba0] sm:$0xff] %v2466
    %2979 = vst [vmem:[#allocation8 + $0xba8] sm:$0xff] %v2467
    %2980 = vst [vmem:[#allocation8 + $0xbb0] sm:$0xff] %v2468
    %2981 = vst [vmem:[#allocation8 + $0xbb8] sm:$0xff] %v2469
    %2982 = vst [vmem:[#allocation8 + $0xbc0] sm:$0xff] %v2470
    %2983 = vst [vmem:[#allocation8 + $0xbc8] sm:$0xff] %v2471
    %2984 = vst [vmem:[#allocation8 + $0xbd0] sm:$0xff] %v2472
    %2985 = vst [vmem:[#allocation8 + $0xbd8] sm:$0xff] %v2473
    %2986 = vst [vmem:[#allocation8 + $0xbe0] sm:$0xff] %v2474
    %2987 = vst [vmem:[#allocation8 + $0xbe8] sm:$0xff] %v2475
    %2988 = vst [vmem:[#allocation8 + $0xbf0] sm:$0xff] %v2476
    %2989 = vst [vmem:[#allocation8 + $0xbf8] sm:$0xff] %v2477
    %2990 = vst [vmem:[#allocation8 + $0xc00] sm:$0xff] %v2478
    %2991 = vst [vmem:[#allocation8 + $0xc08] sm:$0xff] %v2479
    %2992 = vst [vmem:[#allocation8 + $0xc10] sm:$0xff] %v2480
    %2993 = vst [vmem:[#allocation8 + $0xc18] sm:$0xff] %v2481
    %2994 = vst [vmem:[#allocation8 + $0xc20] sm:$0xff] %v2482
    %2995 = vst [vmem:[#allocation8 + $0xc28] sm:$0xff] %v2483
    %2996 = vst [vmem:[#allocation8 + $0xc30] sm:$0xff] %v2484
    %2997 = vst [vmem:[#allocation8 + $0xc38] sm:$0xff] %v2485
    %2998 = vst [vmem:[#allocation8 + $0xc40] sm:$0xff] %v2486
    %2999 = vst [vmem:[#allocation8 + $0xc48] sm:$0xff] %v2487
    %3000 = vst [vmem:[#allocation8 + $0xc50] sm:$0xff] %v2488
    %3001 = vst [vmem:[#allocation8 + $0xc58] sm:$0xff] %v2489
    %3002 = vst [vmem:[#allocation8 + $0xc60] sm:$0xff] %v2490
    %3003 = vst [vmem:[#allocation8 + $0xc68] sm:$0xff] %v2491
    %3004 = vst [vmem:[#allocation8 + $0xc70] sm:$0xff] %v2492
    %3005 = vst [vmem:[#allocation8 + $0xc78] sm:$0xff] %v2493
    %3006 = vst [vmem:[#allocation8 + $0xc80] sm:$0xff] %v2494
    %3007 = vst [vmem:[#allocation8 + $0xc88] sm:$0xff] %v2495
    %3008 = vst [vmem:[#allocation8 + $0xc90] sm:$0xff] %v2496
    %3009 = vst [vmem:[#allocation8 + $0xc98] sm:$0xff] %v2497
    %3010 = vst [vmem:[#allocation8 + $0xca0] sm:$0xff] %v2498
    %3011 = vst [vmem:[#allocation8 + $0xca8] sm:$0xff] %v2499
    %3012 = vst [vmem:[#allocation8 + $0xcb0] sm:$0xff] %v2500
    %3013 = vst [vmem:[#allocation8 + $0xcb8] sm:$0xff] %v2501
    %3014 = vst [vmem:[#allocation8 + $0xcc0] sm:$0xff] %v2502
    %3015 = vst [vmem:[#allocation8 + $0xcc8] sm:$0xff] %v2503
    %3016 = vst [vmem:[#allocation8 + $0xcd0] sm:$0xff] %v2504
    %3017 = vst [vmem:[#allocation8 + $0xcd8] sm:$0xff] %v2505
    %3018 = vst [vmem:[#allocation8 + $0xce0] sm:$0xff] %v2506
    %3019 = vst [vmem:[#allocation8 + $0xce8] sm:$0xff] %v2507
    %3020 = vst [vmem:[#allocation8 + $0xcf0] sm:$0xff] %v2508
    %3021 = vst [vmem:[#allocation8 + $0xcf8] sm:$0xff] %v2509
    %3022 = vst [vmem:[#allocation8 + $0xd00] sm:$0xff] %v2510
    %3023 = vst [vmem:[#allocation8 + $0xd08] sm:$0xff] %v2511
    %3024 = vst [vmem:[#allocation8 + $0xd10] sm:$0xff] %v2512
    %3025 = vst [vmem:[#allocation8 + $0xd18] sm:$0xff] %v2513
    %3026 = vst [vmem:[#allocation8 + $0xd20] sm:$0xff] %v2514
    %3027 = vst [vmem:[#allocation8 + $0xd28] sm:$0xff] %v2515
    %3028 = vst [vmem:[#allocation8 + $0xd30] sm:$0xff] %v2516
    %3029 = vst [vmem:[#allocation8 + $0xd38] sm:$0xff] %v2517
    %3030 = vst [vmem:[#allocation8 + $0xd40] sm:$0xff] %v2518
    %3031 = vst [vmem:[#allocation8 + $0xd48] sm:$0xff] %v2519
    %3032 = vst [vmem:[#allocation8 + $0xd50] sm:$0xff] %v2520
    %3033 = vst [vmem:[#allocation8 + $0xd58] sm:$0xff] %v2521
    %3034 = vst [vmem:[#allocation8 + $0xd60] sm:$0xff] %v2522
    %3035 = vst [vmem:[#allocation8 + $0xd68] sm:$0xff] %v2523
    %3036 = vst [vmem:[#allocation8 + $0xd70] sm:$0xff] %v2524
    %3037 = vst [vmem:[#allocation8 + $0xd78] sm:$0xff] %v2525
    %3038 = vst [vmem:[#allocation8 + $0xd80] sm:$0xff] %v2526
    %3039 = vst [vmem:[#allocation8 + $0xd88] sm:$0xff] %v2527
    %3040 = vst [vmem:[#allocation8 + $0xd90] sm:$0xff] %v2528
    %3041 = vst [vmem:[#allocation8 + $0xd98] sm:$0xff] %v2529
    %3042 = vst [vmem:[#allocation8 + $0xda0] sm:$0xff] %v2530
    %3043 = vst [vmem:[#allocation8 + $0xda8] sm:$0xff] %v2531
    %3044 = vst [vmem:[#allocation8 + $0xdb0] sm:$0xff] %v2532
    %3045 = vst [vmem:[#allocation8 + $0xdb8] sm:$0xff] %v2533
    %3046 = vst [vmem:[#allocation8 + $0xdc0] sm:$0xff] %v2534
    %3047 = vst [vmem:[#allocation8 + $0xdc8] sm:$0xff] %v2535
    %3048 = vst [vmem:[#allocation8 + $0xdd0] sm:$0xff] %v2536
    %3049 = vst [vmem:[#allocation8 + $0xdd8] sm:$0xff] %v2537
    %3050 = vst [vmem:[#allocation8 + $0xde0] sm:$0xff] %v2538
    %3051 = vst [vmem:[#allocation8 + $0xde8] sm:$0xff] %v2539
    %3052 = vst [vmem:[#allocation8 + $0xdf0] sm:$0xff] %v2540
    %3053 = vst [vmem:[#allocation8 + $0xdf8] sm:$0xff] %v2541
    %3054 = vst [vmem:[#allocation8 + $0xe00] sm:$0xff] %v2542
    %3055 = vst [vmem:[#allocation8 + $0xe08] sm:$0xff] %v2543
    %3056 = vst [vmem:[#allocation8 + $0xe10] sm:$0xff] %v2544
    %3057 = vst [vmem:[#allocation8 + $0xe18] sm:$0xff] %v2545
    %3058 = vst [vmem:[#allocation8 + $0xe20] sm:$0xff] %v2546
    %3059 = vst [vmem:[#allocation8 + $0xe28] sm:$0xff] %v2547
    %3060 = vst [vmem:[#allocation8 + $0xe30] sm:$0xff] %v2548
    %3061 = vst [vmem:[#allocation8 + $0xe38] sm:$0xff] %v2549
    %3062 = vst [vmem:[#allocation8 + $0xe40] sm:$0xff] %v2550
    %3063 = vst [vmem:[#allocation8 + $0xe48] sm:$0xff] %v2551
    %3064 = vst [vmem:[#allocation8 + $0xe50] sm:$0xff] %v2552
    %3065 = vst [vmem:[#allocation8 + $0xe58] sm:$0xff] %v2553
    %3066 = vst [vmem:[#allocation8 + $0xe60] sm:$0xff] %v2554
    %3067 = vst [vmem:[#allocation8 + $0xe68] sm:$0xff] %v2555
    %3068 = vst [vmem:[#allocation8 + $0xe70] sm:$0xff] %v2556
    %3069 = vst [vmem:[#allocation8 + $0xe78] sm:$0xff] %v2557
    %3070 = vst [vmem:[#allocation8 + $0xe80] sm:$0xff] %v2558
    %3071 = vst [vmem:[#allocation8 + $0xe88] sm:$0xff] %v2559
    %3072 = vst [vmem:[#allocation8 + $0xe90] sm:$0xff] %v2560
    %3073 = vst [vmem:[#allocation8 + $0xe98] sm:$0xff] %v2561
    %3074 = vst [vmem:[#allocation8 + $0xea0] sm:$0xff] %v2562
    %3075 = vst [vmem:[#allocation8 + $0xea8] sm:$0xff] %v2563
    %3076 = vst [vmem:[#allocation8 + $0xeb0] sm:$0xff] %v2564
    %3077 = vst [vmem:[#allocation8 + $0xeb8] sm:$0xff] %v2565
    %3078 = vst [vmem:[#allocation8 + $0xec0] sm:$0xff] %v2566
    %3079 = vst [vmem:[#allocation8 + $0xec8] sm:$0xff] %v2567
    %3080 = vst [vmem:[#allocation8 + $0xed0] sm:$0xff] %v2568
    %3081 = vst [vmem:[#allocation8 + $0xed8] sm:$0xff] %v2569
    %3082 = vst [vmem:[#allocation8 + $0xee0] sm:$0xff] %v2570
    %3083 = vst [vmem:[#allocation8 + $0xee8] sm:$0xff] %v2571
    %3084 = vst [vmem:[#allocation8 + $0xef0] sm:$0xff] %v2572
    %3085 = vst [vmem:[#allocation8 + $0xef8] sm:$0xff] %v2573
    %3086 = vst [vmem:[#allocation8 + $0xf00] sm:$0xff] %v2574
    %3087 = vst [vmem:[#allocation8 + $0xf08] sm:$0xff] %v2575
    %3088 = vst [vmem:[#allocation8 + $0xf10] sm:$0xff] %v2576
    %3089 = vst [vmem:[#allocation8 + $0xf18] sm:$0xff] %v2577
    %3090 = vst [vmem:[#allocation8 + $0xf20] sm:$0xff] %v2578
    %3091 = vst [vmem:[#allocation8 + $0xf28] sm:$0xff] %v2579
    %3092 = vst [vmem:[#allocation8 + $0xf30] sm:$0xff] %v2580
    %3093 = vst [vmem:[#allocation8 + $0xf38] sm:$0xff] %v2581
    %3094 = vst [vmem:[#allocation8 + $0xf40] sm:$0xff] %v2582
    %3095 = vst [vmem:[#allocation8 + $0xf48] sm:$0xff] %v2583
    %3096 = vst [vmem:[#allocation8 + $0xf50] sm:$0xff] %v2584
    %3097 = vst [vmem:[#allocation8 + $0xf58] sm:$0xff] %v2585
    %3098 = vst [vmem:[#allocation8 + $0xf60] sm:$0xff] %v2586
    %3099 = vst [vmem:[#allocation8 + $0xf68] sm:$0xff] %v2587
    %3100 = vst [vmem:[#allocation8 + $0xf70] sm:$0xff] %v2588
    %3101 = vst [vmem:[#allocation8 + $0xf78] sm:$0xff] %v2589
    %3102 = vst [vmem:[#allocation8 + $0xf80] sm:$0xff] %v2590
    %3103 = vst [vmem:[#allocation8 + $0xf88] sm:$0xff] %v2591
    %3104 = vst [vmem:[#allocation8 + $0xf90] sm:$0xff] %v2592
    %3105 = vst [vmem:[#allocation8 + $0xf98] sm:$0xff] %v2593
    %3106 = vst [vmem:[#allocation8 + $0xfa0] sm:$0xff] %v2594
    %3107 = vst [vmem:[#allocation8 + $0xfa8] sm:$0xff] %v2595
    %3108 = vst [vmem:[#allocation8 + $0xfb0] sm:$0xff] %v2596
    %3109 = vst [vmem:[#allocation8 + $0xfb8] sm:$0xff] %v2597
    %3110 = vst [vmem:[#allocation8 + $0xfc0] sm:$0xff] %v2598
    %3111 = vst [vmem:[#allocation8 + $0xfc8] sm:$0xff] %v2599
    %3112 = vst [vmem:[#allocation8 + $0xfd0] sm:$0xff] %v2600
    %3113 = vst [vmem:[#allocation8 + $0xfd8] sm:$0xff] %v2601
    %3114 = vst [vmem:[#allocation8 + $0xfe0] sm:$0xff] %v2602
    %3115 = vst [vmem:[#allocation8 + $0xfe8] sm:$0xff] %v2603
    %3116 = vst [vmem:[#allocation8 + $0xff0] sm:$0xff] %v2604
    %3117 = vst [vmem:[#allocation8 + $0xff8] sm:$0xff] %v2605
    // Predicated region
    $region22: #{tpu_custom_call.1} parent=1 // pred_check
      _
    $region23: #{tpu_custom_call.1} parent=1 // pred_check_branch
      %3119 = sbr.rel (0) target = $region25
    $region24: #{tpu_custom_call.1} parent=1 // pred_region
      %s3121 = ssub.s32 65536, 65536
      %3122 = vsyncadd [#allocation5], %s3121
      %s3123 = sshll.u32 [#allocation8], 4
      %s3124 = int_to_ptr.vmem [resolvable:$true] %s3123
      %3129 = dma.vmem_to_hbm [thread:$0]  %s3124, 65536, %s3, [#allocation5], 512, 512, 32
    $region25: #{tpu_custom_call.1} parent=1 // pred_fallthru
      _
    // Predicated region
    $region26: #{tpu_custom_call.1} parent=1 // pred_check
      _
    $region27: #{tpu_custom_call.1} parent=1 // pred_check_branch
      %3131 = sbr.rel (0) target = $region29
    $region28: #{tpu_custom_call.1} parent=1 // pred_region
      %3132 = dma.done [#allocation5], 65536
    $region29: #{tpu_custom_call.1} parent=1 // pred_fallthru
      _
    %3133 = vsyncpa [#allocation4], 1
    %3134 = vsyncpa [#allocation7], 1
    %3135 = vsyncpa [#allocation5], 1

</llo_original>
